<compile_context>
chip_gen: v6e
topology: v6e:2x2x1
jax: 0.10.0
libtpu: 0.0.40
codegen_flags: <defaults>
</compile_context>

<pallas_src>
import functools

import jax
import jax.numpy as jnp
import numpy as np
from jax.experimental import pallas as pl
from jax.experimental.pallas import tpu as pltpu


LEAKY_SLOPE = 0.2


def _leaky_relu(x):
    return jnp.where(x >= 0.0, x, LEAKY_SLOPE * x)


# ---------------------------------------------------------------------------
# Fused 3-conv kernel.  All shapes are static and tiny; intermediates stay in
# VMEM as kernel values.  Layout: activations are (channels, N*OH*OW) with the
# batch*spatial index on the lane axis (lane-dense).
# ---------------------------------------------------------------------------
def _fused_kernel(p1_ref, w1_ref, b1_ref,
                  w2_ref, s2_ref, b2_ref,
                  w3_ref, s3_ref, b3_ref,
                  feat_ref, out_ref):
    # ---- conv1: (OC1, K1) @ (K1, M1) -> (8, 128), fully lane-dense ----
    h1 = jnp.dot(w1_ref[...], p1_ref[...], preferred_element_type=jnp.float32)
    h1 = _leaky_relu(h1 + b1_ref[...])                       # bias (8,1) lane-bcast

    # ---- conv2: per-tap selection-matrix im2col (feature stays in VMEM) ----
    taps2, oc2, _ = w2_ref.shape
    m2 = s2_ref.shape[2]
    acc2 = jnp.zeros((oc2, m2), jnp.float32)
    for t in range(taps2):                                   # static, unrolled
        g = jnp.dot(h1, s2_ref[t], preferred_element_type=jnp.float32)   # (IC2, M2)
        acc2 = acc2 + jnp.dot(w2_ref[t], g, preferred_element_type=jnp.float32)
    h2 = _leaky_relu(acc2 + b2_ref[...])
    feat_ref[...] = h2                                       # last-conv activations

    # ---- conv3 (classifier, OC=1): multiply + sublane reduce + sigmoid ----
    taps3, ic3, _ = w3_ref.shape
    m3 = s3_ref.shape[2]
    acc3 = jnp.zeros((ic3, m3), jnp.float32)
    for t in range(taps3):
        g = jnp.dot(h2, s3_ref[t], preferred_element_type=jnp.float32)   # (IC3, M3)
        acc3 = acc3 + w3_ref[t] * g                          # (IC3,1) * (IC3,M3)
    logits = jnp.sum(acc3, axis=0, keepdims=True) + b3_ref[...]          # (1, M3)
    out_ref[...] = jax.nn.sigmoid(logits)


def _fused_forward_call(p1, w1, b1, w2, s2, b2, w3, s3, b3):
    k1, m1 = p1.shape
    oc1 = w1.shape[0]
    taps2, oc2, ic2 = w2.shape
    m2 = s2.shape[2]
    taps3, ic3, _ = w3.shape
    m3 = s3.shape[2]

    flops = 2 * oc1 * k1 * m1
    flops += taps2 * (2 * ic2 * m1 * m2 + 2 * oc2 * ic2 * m2)
    flops += taps3 * (2 * ic3 * m2 * m3 + 2 * ic3 * m3)
    ins = (p1, w1, b1, w2, s2, b2, w3, s3, b3)
    bytes_accessed = int(sum(int(np.prod(a.shape)) * 4 for a in ins)
                         + 4 * (oc2 * m2 + m3))

    in_specs = [pl.BlockSpec(a.shape, lambda i, nd=a.ndim: (0,) * nd) for a in ins]
    out_shapes = (jax.ShapeDtypeStruct((oc2, m2), jnp.float32),
                  jax.ShapeDtypeStruct((1, m3), jnp.float32))
    out_specs = (pl.BlockSpec((oc2, m2), lambda i: (0, 0)),
                 pl.BlockSpec((1, m3), lambda i: (0, 0)))

    feat, out = pl.pallas_call(
        _fused_kernel,
        out_shape=out_shapes,
        grid=(1,),
        in_specs=in_specs,
        out_specs=out_specs,
        compiler_params=pltpu.CompilerParams(dimension_semantics=("arbitrary",)),
        cost_estimate=pl.CostEstimate(flops=int(flops), transcendentals=int(m3),
                                      bytes_accessed=bytes_accessed),
    )(*ins)
    return feat, out


# ---------------------------------------------------------------------------
# Host-side glue (plain JAX / numpy, fused by XLA around the single call).
# ---------------------------------------------------------------------------
def _im2col_km(x, kh, kw, stride, pad):
    # x: (N, C, H, W) -> (C*KH*KW, N*OH*OW)  [K on sublanes, M on lanes]
    n, c, h, w = x.shape
    xp = jnp.pad(x, ((0, 0), (0, 0), (pad, pad), (pad, pad)))
    oh = (h + 2 * pad - kh) // stride + 1
    ow = (w + 2 * pad - kw) // stride + 1
    cols = []
    for i in range(kh):
        for j in range(kw):
            cols.append(xp[:, :, i:i + stride * oh:stride, j:j + stride * ow:stride])
    p = jnp.stack(cols, axis=2)              # (N, C, KH*KW, OH, OW)
    p = p.transpose(1, 2, 0, 3, 4)           # (C, KH*KW, N, OH, OW)
    return p.reshape(c * kh * kw, n * oh * ow), oh, ow


@functools.lru_cache(maxsize=None)
def _selection_taps(n, h, w, kh, kw, stride, pad):
    # Per-tap 0/1 gather matrices: (KH*KW, N*H*W, N*OH*OW); zero rows encode padding.
    oh = (h + 2 * pad - kh) // stride + 1
    ow = (w + 2 * pad - kw) // stride + 1
    sel = np.zeros((kh * kw, n * h * w, n * oh * ow), np.float32)
    for t_h in range(kh):
        for t_w in range(kw):
            t = t_h * kw + t_w
            for b in range(n):
                for i in range(oh):
                    for j in range(ow):
                        ih = i * stride - pad + t_h
                        iw = j * stride - pad + t_w
                        if 0 <= ih < h and 0 <= iw < w:
                            sel[t, b * h * w + ih * w + iw,
                                b * oh * ow + i * ow + j] = 1.0
    return sel, oh, ow


# ---------------------------------------------------------------------------
# gradCam equivalent: main(x) -> feature, classifier(feature) -> out, fused.
# ---------------------------------------------------------------------------
class GradCamPallas:
    def __init__(self, key):
        k1, k2, k3 = jax.random.split(key, 3)
        std = 0.02  # DCGAN-style init, deterministic from PRNGKey
        self.w1 = (std * jax.random.normal(k1, (8, 3, 4, 4))).astype(jnp.float32)
        self.b1 = jnp.zeros((8,), jnp.float32)
        self.w2 = (std * jax.random.normal(k2, (16, 8, 4, 4))).astype(jnp.float32)
        self.b2 = jnp.zeros((16,), jnp.float32)
        self.w3 = (std * jax.random.normal(k3, (1, 16, 4, 4))).astype(jnp.float32)
        self.b3 = jnp.zeros((1,), jnp.float32)

        # Kernel-friendly layouts, built once.
        self.w1_flat = self.w1.reshape(8, 48)                          # (OC1, C*KH*KW)
        self.b1_col = self.b1.reshape(8, 1)
        self.w2_taps = self.w2.reshape(16, 8, 16).transpose(2, 0, 1)   # (taps, OC2, IC2)
        self.b2_col = self.b2.reshape(16, 1)
        self.w3_taps = self.w3.reshape(1, 16, 16).transpose(2, 1, 0)   # (taps, IC3, 1)
        self.b3_col = self.b3.reshape(1, 1)

    def _run_fused(self, x):
        n = x.shape[0]
        p1, oh1, ow1 = _im2col_km(x, 4, 4, 2, 1)
        s2_np, oh2, ow2 = _selection_taps(n, oh1, ow1, 4, 4, 2, 1)
        s3_np, oh3, ow3 = _selection_taps(n, oh2, ow2, 4, 4, 1, 0)
        feat_flat, out_flat = _fused_forward_call(
            p1, self.w1_flat, self.b1_col,
            self.w2_taps, jnp.asarray(s2_np), self.b2_col,
            self.w3_taps, jnp.asarray(s3_np), self.b3_col)
        feature = feat_flat.reshape(16, n, oh2, ow2).transpose(1, 0, 2, 3)
        out = out_flat.reshape(1, n, oh3, ow3).transpose(1, 0, 2, 3)
        return feature, out

    def main(self, x):
        feature, _ = self._run_fused(x)
        return feature

    def get_activations(self, x):
        return self.main(x)

    def forward(self, x):
        # TODO(synk): register_hook / get_activations_gradient are autograd-time
        # bookkeeping with no forward-pass Pallas equivalent.
        _, out = self._run_fused(x)
        return out


# ---------------------------------------------------------------------------
# Plain-JAX reference (correctness sanity check).
# ---------------------------------------------------------------------------
def _ref_conv(x, w, b, stride, pad, activation):
    out = jax.lax.conv_general_dilated(
        x, w, window_strides=(stride, stride),
        padding=((pad, pad), (pad, pad)),
        dimension_numbers=("NCHW", "OIHW", "NCHW"))
    out = out + b.reshape(1, -1, 1, 1)
    if activation == "leaky_relu":
        out = jnp.where(out >= 0.0, out, LEAKY_SLOPE * out)
    elif activation == "sigmoid":
        out = jax.nn.sigmoid(out)
    return out


def _ref_forward(model, x):
    h = _ref_conv(x, model.w1, model.b1, 2, 1, "leaky_relu")
    h = _ref_conv(h, model.w2, model.b2, 2, 1, "leaky_relu")
    return h, _ref_conv(h, model.w3, model.b3, 1, 0, "sigmoid")


if __name__ == "__main__":
    key = jax.random.PRNGKey(0)
    key_params, key_x = jax.random.split(key)

    model = GradCamPallas(key_params)
    x = jax.random.normal(key_x, (2, 3, 16, 16), dtype=jnp.float32)

    feature = model.get_activations(x)
    out = model.forward(x)
    out = jax.block_until_ready(out)
    feature = jax.block_until_ready(feature)

    ref_feat, ref_out = _ref_forward(model, x)
    ref_out = jax.block_until_ready(ref_out)
    np.testing.assert_allclose(np.asarray(feature), np.asarray(ref_feat),
                               rtol=1e-4, atol=1e-5)
    np.testing.assert_allclose(np.asarray(out), np.asarray(ref_out),
                               rtol=1e-4, atol=1e-5)

    assert out.shape == (2, 1, 1, 1)
    assert feature.shape == (2, 16, 4, 4)
    print("KERNEL_OK")
</pallas_src>

<mosaic_0001>
module attributes {stable_mosaic.version = 11 : i64} {
  func.func @_fused_kernel(%arg0: i32, %arg1: memref<48x128xf32, #tpu.memory_space<vmem>>, %arg2: memref<8x48xf32, #tpu.memory_space<vmem>>, %arg3: memref<8x1xf32, #tpu.memory_space<vmem>>, %arg4: memref<16x16x8xf32, #tpu.memory_space<vmem>>, %arg5: memref<16x128x32xf32, #tpu.memory_space<vmem>>, %arg6: memref<16x1xf32, #tpu.memory_space<vmem>>, %arg7: memref<16x16x1xf32, #tpu.memory_space<vmem>>, %arg8: memref<16x32x2xf32, #tpu.memory_space<vmem>>, %arg9: memref<1x1xf32, #tpu.memory_space<vmem>>, %arg10: memref<16x32xf32, #tpu.memory_space<vmem>>, %arg11: memref<1x2xf32, #tpu.memory_space<vmem>>) attributes {dimension_semantics = [#tpu.dimension_semantics<arbitrary>], iteration_bounds = array<i64: 1>, scalar_prefetch = 0 : i64, scratch_operands = 0 : i64, tpu.core_type = #tpu.core_type<tc>, window_params = [{pipeline_mode = #tpu.pipeline_mode<synchronous>, transform_indices = @transform_0, window_bounds = array<i64: 48, 128>}, {pipeline_mode = #tpu.pipeline_mode<synchronous>, transform_indices = @transform_1, window_bounds = array<i64: 8, 48>}, {pipeline_mode = #tpu.pipeline_mode<synchronous>, transform_indices = @transform_2, window_bounds = array<i64: 8, 1>}, {pipeline_mode = #tpu.pipeline_mode<synchronous>, transform_indices = @transform_3, window_bounds = array<i64: 16, 16, 8>}, {pipeline_mode = #tpu.pipeline_mode<synchronous>, transform_indices = @transform_4, window_bounds = array<i64: 16, 128, 32>}, {pipeline_mode = #tpu.pipeline_mode<synchronous>, transform_indices = @transform_5, window_bounds = array<i64: 16, 1>}, {pipeline_mode = #tpu.pipeline_mode<synchronous>, transform_indices = @transform_6, window_bounds = array<i64: 16, 16, 1>}, {pipeline_mode = #tpu.pipeline_mode<synchronous>, transform_indices = @transform_7, window_bounds = array<i64: 16, 32, 2>}, {pipeline_mode = #tpu.pipeline_mode<synchronous>, transform_indices = @transform_8, window_bounds = array<i64: 1, 1>}, {pipeline_mode = #tpu.pipeline_mode<synchronous>, transform_indices = @transform_9, window_bounds = array<i64: 16, 32>}, {pipeline_mode = #tpu.pipeline_mode<synchronous>, transform_indices = @transform_10, window_bounds = array<i64: 1, 2>}]} {
    %c0 = arith.constant 0 : index
    %c0_0 = arith.constant 0 : index
    %0 = vector.load %arg2[%c0, %c0_0] : memref<8x48xf32, #tpu.memory_space<vmem>>, vector<8x48xf32>
    %c0_1 = arith.constant 0 : index
    %c0_2 = arith.constant 0 : index
    %1 = vector.load %arg1[%c0_1, %c0_2] : memref<48x128xf32, #tpu.memory_space<vmem>>, vector<48x128xf32>
    %cst = arith.constant dense<0.000000e+00> : vector<8x128xf32>
    %2 = tpu.matmul %0, %1, %cst {dimension_numbers = #tpu.dot_dimension_numbers<[1], [0], [0], [1], [0, 0, 1, 1], [], []>} : vector<8x48xf32>, vector<48x128xf32>, vector<8x128xf32> -> vector<8x128xf32>
    %c0_3 = arith.constant 0 : index
    %c0_4 = arith.constant 0 : index
    %3 = vector.load %arg3[%c0_3, %c0_4] : memref<8x1xf32, #tpu.memory_space<vmem>>, vector<8x1xf32>
    %4 = vector.broadcast %3 : vector<8x1xf32> to vector<8x128xf32>
    %5 = arith.addf %2, %4 : vector<8x128xf32>
    %cst_5 = arith.constant 0.000000e+00 : f32
    %6 = vector.broadcast %cst_5 : f32 to vector<8x128xf32>
    %7 = arith.cmpf oge, %5, %6 : vector<8x128xf32>
    %cst_6 = arith.constant 2.000000e-01 : f32
    %8 = vector.broadcast %cst_6 : f32 to vector<8x128xf32>
    %9 = arith.mulf %8, %5 : vector<8x128xf32>
    %10 = arith.select %7, %5, %9 : vector<8x128xi1>, vector<8x128xf32>
    %cst_7 = arith.constant 0.000000e+00 : f32
    %11 = vector.broadcast %cst_7 : f32 to vector<16x32xf32>
    %c0_8 = arith.constant 0 : index
    %c0_9 = arith.constant 0 : index
    %c0_10 = arith.constant 0 : index
    %12 = vector.load %arg5[%c0_8, %c0_9, %c0_10] : memref<16x128x32xf32, #tpu.memory_space<vmem>>, vector<1x128x32xf32>
    %13 = vector.shape_cast %12 : vector<1x128x32xf32> to vector<128x32xf32>
    %cst_11 = arith.constant dense<0.000000e+00> : vector<8x32xf32>
    %14 = tpu.matmul %10, %13, %cst_11 {dimension_numbers = #tpu.dot_dimension_numbers<[1], [0], [0], [1], [0, 0, 1, 1], [], []>} : vector<8x128xf32>, vector<128x32xf32>, vector<8x32xf32> -> vector<8x32xf32>
    %c0_12 = arith.constant 0 : index
    %c0_13 = arith.constant 0 : index
    %c0_14 = arith.constant 0 : index
    %15 = vector.load %arg4[%c0_12, %c0_13, %c0_14] : memref<16x16x8xf32, #tpu.memory_space<vmem>>, vector<1x16x8xf32>
    %16 = vector.shape_cast %15 : vector<1x16x8xf32> to vector<16x8xf32>
    %cst_15 = arith.constant dense<0.000000e+00> : vector<16x32xf32>
    %17 = tpu.matmul %16, %14, %cst_15 {dimension_numbers = #tpu.dot_dimension_numbers<[1], [0], [0], [1], [0, 0, 1, 1], [], []>} : vector<16x8xf32>, vector<8x32xf32>, vector<16x32xf32> -> vector<16x32xf32>
    %18 = arith.addf %11, %17 : vector<16x32xf32>
    %c1 = arith.constant 1 : index
    %c0_16 = arith.constant 0 : index
    %c0_17 = arith.constant 0 : index
    %19 = vector.load %arg5[%c1, %c0_16, %c0_17] : memref<16x128x32xf32, #tpu.memory_space<vmem>>, vector<1x128x32xf32>
    %20 = vector.shape_cast %19 : vector<1x128x32xf32> to vector<128x32xf32>
    %cst_18 = arith.constant dense<0.000000e+00> : vector<8x32xf32>
    %21 = tpu.matmul %10, %20, %cst_18 {dimension_numbers = #tpu.dot_dimension_numbers<[1], [0], [0], [1], [0, 0, 1, 1], [], []>} : vector<8x128xf32>, vector<128x32xf32>, vector<8x32xf32> -> vector<8x32xf32>
    %c1_19 = arith.constant 1 : index
    %c0_20 = arith.constant 0 : index
    %c0_21 = arith.constant 0 : index
    %22 = vector.load %arg4[%c1_19, %c0_20, %c0_21] : memref<16x16x8xf32, #tpu.memory_space<vmem>>, vector<1x16x8xf32>
    %23 = vector.shape_cast %22 : vector<1x16x8xf32> to vector<16x8xf32>
    %cst_22 = arith.constant dense<0.000000e+00> : vector<16x32xf32>
    %24 = tpu.matmul %23, %21, %cst_22 {dimension_numbers = #tpu.dot_dimension_numbers<[1], [0], [0], [1], [0, 0, 1, 1], [], []>} : vector<16x8xf32>, vector<8x32xf32>, vector<16x32xf32> -> vector<16x32xf32>
    %25 = arith.addf %18, %24 : vector<16x32xf32>
    %c2 = arith.constant 2 : index
    %c0_23 = arith.constant 0 : index
    %c0_24 = arith.constant 0 : index
    %26 = vector.load %arg5[%c2, %c0_23, %c0_24] : memref<16x128x32xf32, #tpu.memory_space<vmem>>, vector<1x128x32xf32>
    %27 = vector.shape_cast %26 : vector<1x128x32xf32> to vector<128x32xf32>
    %cst_25 = arith.constant dense<0.000000e+00> : vector<8x32xf32>
    %28 = tpu.matmul %10, %27, %cst_25 {dimension_numbers = #tpu.dot_dimension_numbers<[1], [0], [0], [1], [0, 0, 1, 1], [], []>} : vector<8x128xf32>, vector<128x32xf32>, vector<8x32xf32> -> vector<8x32xf32>
    %c2_26 = arith.constant 2 : index
    %c0_27 = arith.constant 0 : index
    %c0_28 = arith.constant 0 : index
    %29 = vector.load %arg4[%c2_26, %c0_27, %c0_28] : memref<16x16x8xf32, #tpu.memory_space<vmem>>, vector<1x16x8xf32>
    %30 = vector.shape_cast %29 : vector<1x16x8xf32> to vector<16x8xf32>
    %cst_29 = arith.constant dense<0.000000e+00> : vector<16x32xf32>
    %31 = tpu.matmul %30, %28, %cst_29 {dimension_numbers = #tpu.dot_dimension_numbers<[1], [0], [0], [1], [0, 0, 1, 1], [], []>} : vector<16x8xf32>, vector<8x32xf32>, vector<16x32xf32> -> vector<16x32xf32>
    %32 = arith.addf %25, %31 : vector<16x32xf32>
    %c3 = arith.constant 3 : index
    %c0_30 = arith.constant 0 : index
    %c0_31 = arith.constant 0 : index
    %33 = vector.load %arg5[%c3, %c0_30, %c0_31] : memref<16x128x32xf32, #tpu.memory_space<vmem>>, vector<1x128x32xf32>
    %34 = vector.shape_cast %33 : vector<1x128x32xf32> to vector<128x32xf32>
    %cst_32 = arith.constant dense<0.000000e+00> : vector<8x32xf32>
    %35 = tpu.matmul %10, %34, %cst_32 {dimension_numbers = #tpu.dot_dimension_numbers<[1], [0], [0], [1], [0, 0, 1, 1], [], []>} : vector<8x128xf32>, vector<128x32xf32>, vector<8x32xf32> -> vector<8x32xf32>
    %c3_33 = arith.constant 3 : index
    %c0_34 = arith.constant 0 : index
    %c0_35 = arith.constant 0 : index
    %36 = vector.load %arg4[%c3_33, %c0_34, %c0_35] : memref<16x16x8xf32, #tpu.memory_space<vmem>>, vector<1x16x8xf32>
    %37 = vector.shape_cast %36 : vector<1x16x8xf32> to vector<16x8xf32>
    %cst_36 = arith.constant dense<0.000000e+00> : vector<16x32xf32>
    %38 = tpu.matmul %37, %35, %cst_36 {dimension_numbers = #tpu.dot_dimension_numbers<[1], [0], [0], [1], [0, 0, 1, 1], [], []>} : vector<16x8xf32>, vector<8x32xf32>, vector<16x32xf32> -> vector<16x32xf32>
    %39 = arith.addf %32, %38 : vector<16x32xf32>
    %c4 = arith.constant 4 : index
    %c0_37 = arith.constant 0 : index
    %c0_38 = arith.constant 0 : index
    %40 = vector.load %arg5[%c4, %c0_37, %c0_38] : memref<16x128x32xf32, #tpu.memory_space<vmem>>, vector<1x128x32xf32>
    %41 = vector.shape_cast %40 : vector<1x128x32xf32> to vector<128x32xf32>
    %cst_39 = arith.constant dense<0.000000e+00> : vector<8x32xf32>
    %42 = tpu.matmul %10, %41, %cst_39 {dimension_numbers = #tpu.dot_dimension_numbers<[1], [0], [0], [1], [0, 0, 1, 1], [], []>} : vector<8x128xf32>, vector<128x32xf32>, vector<8x32xf32> -> vector<8x32xf32>
    %c4_40 = arith.constant 4 : index
    %c0_41 = arith.constant 0 : index
    %c0_42 = arith.constant 0 : index
    %43 = vector.load %arg4[%c4_40, %c0_41, %c0_42] : memref<16x16x8xf32, #tpu.memory_space<vmem>>, vector<1x16x8xf32>
    %44 = vector.shape_cast %43 : vector<1x16x8xf32> to vector<16x8xf32>
    %cst_43 = arith.constant dense<0.000000e+00> : vector<16x32xf32>
    %45 = tpu.matmul %44, %42, %cst_43 {dimension_numbers = #tpu.dot_dimension_numbers<[1], [0], [0], [1], [0, 0, 1, 1], [], []>} : vector<16x8xf32>, vector<8x32xf32>, vector<16x32xf32> -> vector<16x32xf32>
    %46 = arith.addf %39, %45 : vector<16x32xf32>
    %c5 = arith.constant 5 : index
    %c0_44 = arith.constant 0 : index
    %c0_45 = arith.constant 0 : index
    %47 = vector.load %arg5[%c5, %c0_44, %c0_45] : memref<16x128x32xf32, #tpu.memory_space<vmem>>, vector<1x128x32xf32>
    %48 = vector.shape_cast %47 : vector<1x128x32xf32> to vector<128x32xf32>
    %cst_46 = arith.constant dense<0.000000e+00> : vector<8x32xf32>
    %49 = tpu.matmul %10, %48, %cst_46 {dimension_numbers = #tpu.dot_dimension_numbers<[1], [0], [0], [1], [0, 0, 1, 1], [], []>} : vector<8x128xf32>, vector<128x32xf32>, vector<8x32xf32> -> vector<8x32xf32>
    %c5_47 = arith.constant 5 : index
    %c0_48 = arith.constant 0 : index
    %c0_49 = arith.constant 0 : index
    %50 = vector.load %arg4[%c5_47, %c0_48, %c0_49] : memref<16x16x8xf32, #tpu.memory_space<vmem>>, vector<1x16x8xf32>
    %51 = vector.shape_cast %50 : vector<1x16x8xf32> to vector<16x8xf32>
    %cst_50 = arith.constant dense<0.000000e+00> : vector<16x32xf32>
    %52 = tpu.matmul %51, %49, %cst_50 {dimension_numbers = #tpu.dot_dimension_numbers<[1], [0], [0], [1], [0, 0, 1, 1], [], []>} : vector<16x8xf32>, vector<8x32xf32>, vector<16x32xf32> -> vector<16x32xf32>
    %53 = arith.addf %46, %52 : vector<16x32xf32>
    %c6 = arith.constant 6 : index
    %c0_51 = arith.constant 0 : index
    %c0_52 = arith.constant 0 : index
    %54 = vector.load %arg5[%c6, %c0_51, %c0_52] : memref<16x128x32xf32, #tpu.memory_space<vmem>>, vector<1x128x32xf32>
    %55 = vector.shape_cast %54 : vector<1x128x32xf32> to vector<128x32xf32>
    %cst_53 = arith.constant dense<0.000000e+00> : vector<8x32xf32>
    %56 = tpu.matmul %10, %55, %cst_53 {dimension_numbers = #tpu.dot_dimension_numbers<[1], [0], [0], [1], [0, 0, 1, 1], [], []>} : vector<8x128xf32>, vector<128x32xf32>, vector<8x32xf32> -> vector<8x32xf32>
    %c6_54 = arith.constant 6 : index
    %c0_55 = arith.constant 0 : index
    %c0_56 = arith.constant 0 : index
    %57 = vector.load %arg4[%c6_54, %c0_55, %c0_56] : memref<16x16x8xf32, #tpu.memory_space<vmem>>, vector<1x16x8xf32>
    %58 = vector.shape_cast %57 : vector<1x16x8xf32> to vector<16x8xf32>
    %cst_57 = arith.constant dense<0.000000e+00> : vector<16x32xf32>
    %59 = tpu.matmul %58, %56, %cst_57 {dimension_numbers = #tpu.dot_dimension_numbers<[1], [0], [0], [1], [0, 0, 1, 1], [], []>} : vector<16x8xf32>, vector<8x32xf32>, vector<16x32xf32> -> vector<16x32xf32>
    %60 = arith.addf %53, %59 : vector<16x32xf32>
    %c7 = arith.constant 7 : index
    %c0_58 = arith.constant 0 : index
    %c0_59 = arith.constant 0 : index
    %61 = vector.load %arg5[%c7, %c0_58, %c0_59] : memref<16x128x32xf32, #tpu.memory_space<vmem>>, vector<1x128x32xf32>
    %62 = vector.shape_cast %61 : vector<1x128x32xf32> to vector<128x32xf32>
    %cst_60 = arith.constant dense<0.000000e+00> : vector<8x32xf32>
    %63 = tpu.matmul %10, %62, %cst_60 {dimension_numbers = #tpu.dot_dimension_numbers<[1], [0], [0], [1], [0, 0, 1, 1], [], []>} : vector<8x128xf32>, vector<128x32xf32>, vector<8x32xf32> -> vector<8x32xf32>
    %c7_61 = arith.constant 7 : index
    %c0_62 = arith.constant 0 : index
    %c0_63 = arith.constant 0 : index
    %64 = vector.load %arg4[%c7_61, %c0_62, %c0_63] : memref<16x16x8xf32, #tpu.memory_space<vmem>>, vector<1x16x8xf32>
    %65 = vector.shape_cast %64 : vector<1x16x8xf32> to vector<16x8xf32>
    %cst_64 = arith.constant dense<0.000000e+00> : vector<16x32xf32>
    %66 = tpu.matmul %65, %63, %cst_64 {dimension_numbers = #tpu.dot_dimension_numbers<[1], [0], [0], [1], [0, 0, 1, 1], [], []>} : vector<16x8xf32>, vector<8x32xf32>, vector<16x32xf32> -> vector<16x32xf32>
    %67 = arith.addf %60, %66 : vector<16x32xf32>
    %c8 = arith.constant 8 : index
    %c0_65 = arith.constant 0 : index
    %c0_66 = arith.constant 0 : index
    %68 = vector.load %arg5[%c8, %c0_65, %c0_66] : memref<16x128x32xf32, #tpu.memory_space<vmem>>, vector<1x128x32xf32>
    %69 = vector.shape_cast %68 : vector<1x128x32xf32> to vector<128x32xf32>
    %cst_67 = arith.constant dense<0.000000e+00> : vector<8x32xf32>
    %70 = tpu.matmul %10, %69, %cst_67 {dimension_numbers = #tpu.dot_dimension_numbers<[1], [0], [0], [1], [0, 0, 1, 1], [], []>} : vector<8x128xf32>, vector<128x32xf32>, vector<8x32xf32> -> vector<8x32xf32>
    %c8_68 = arith.constant 8 : index
    %c0_69 = arith.constant 0 : index
    %c0_70 = arith.constant 0 : index
    %71 = vector.load %arg4[%c8_68, %c0_69, %c0_70] : memref<16x16x8xf32, #tpu.memory_space<vmem>>, vector<1x16x8xf32>
    %72 = vector.shape_cast %71 : vector<1x16x8xf32> to vector<16x8xf32>
    %cst_71 = arith.constant dense<0.000000e+00> : vector<16x32xf32>
    %73 = tpu.matmul %72, %70, %cst_71 {dimension_numbers = #tpu.dot_dimension_numbers<[1], [0], [0], [1], [0, 0, 1, 1], [], []>} : vector<16x8xf32>, vector<8x32xf32>, vector<16x32xf32> -> vector<16x32xf32>
    %74 = arith.addf %67, %73 : vector<16x32xf32>
    %c9 = arith.constant 9 : index
    %c0_72 = arith.constant 0 : index
    %c0_73 = arith.constant 0 : index
    %75 = vector.load %arg5[%c9, %c0_72, %c0_73] : memref<16x128x32xf32, #tpu.memory_space<vmem>>, vector<1x128x32xf32>
    %76 = vector.shape_cast %75 : vector<1x128x32xf32> to vector<128x32xf32>
    %cst_74 = arith.constant dense<0.000000e+00> : vector<8x32xf32>
    %77 = tpu.matmul %10, %76, %cst_74 {dimension_numbers = #tpu.dot_dimension_numbers<[1], [0], [0], [1], [0, 0, 1, 1], [], []>} : vector<8x128xf32>, vector<128x32xf32>, vector<8x32xf32> -> vector<8x32xf32>
    %c9_75 = arith.constant 9 : index
    %c0_76 = arith.constant 0 : index
    %c0_77 = arith.constant 0 : index
    %78 = vector.load %arg4[%c9_75, %c0_76, %c0_77] : memref<16x16x8xf32, #tpu.memory_space<vmem>>, vector<1x16x8xf32>
    %79 = vector.shape_cast %78 : vector<1x16x8xf32> to vector<16x8xf32>
    %cst_78 = arith.constant dense<0.000000e+00> : vector<16x32xf32>
    %80 = tpu.matmul %79, %77, %cst_78 {dimension_numbers = #tpu.dot_dimension_numbers<[1], [0], [0], [1], [0, 0, 1, 1], [], []>} : vector<16x8xf32>, vector<8x32xf32>, vector<16x32xf32> -> vector<16x32xf32>
    %81 = arith.addf %74, %80 : vector<16x32xf32>
    %c10 = arith.constant 10 : index
    %c0_79 = arith.constant 0 : index
    %c0_80 = arith.constant 0 : index
    %82 = vector.load %arg5[%c10, %c0_79, %c0_80] : memref<16x128x32xf32, #tpu.memory_space<vmem>>, vector<1x128x32xf32>
    %83 = vector.shape_cast %82 : vector<1x128x32xf32> to vector<128x32xf32>
    %cst_81 = arith.constant dense<0.000000e+00> : vector<8x32xf32>
    %84 = tpu.matmul %10, %83, %cst_81 {dimension_numbers = #tpu.dot_dimension_numbers<[1], [0], [0], [1], [0, 0, 1, 1], [], []>} : vector<8x128xf32>, vector<128x32xf32>, vector<8x32xf32> -> vector<8x32xf32>
    %c10_82 = arith.constant 10 : index
    %c0_83 = arith.constant 0 : index
    %c0_84 = arith.constant 0 : index
    %85 = vector.load %arg4[%c10_82, %c0_83, %c0_84] : memref<16x16x8xf32, #tpu.memory_space<vmem>>, vector<1x16x8xf32>
    %86 = vector.shape_cast %85 : vector<1x16x8xf32> to vector<16x8xf32>
    %cst_85 = arith.constant dense<0.000000e+00> : vector<16x32xf32>
    %87 = tpu.matmul %86, %84, %cst_85 {dimension_numbers = #tpu.dot_dimension_numbers<[1], [0], [0], [1], [0, 0, 1, 1], [], []>} : vector<16x8xf32>, vector<8x32xf32>, vector<16x32xf32> -> vector<16x32xf32>
    %88 = arith.addf %81, %87 : vector<16x32xf32>
    %c11 = arith.constant 11 : index
    %c0_86 = arith.constant 0 : index
    %c0_87 = arith.constant 0 : index
    %89 = vector.load %arg5[%c11, %c0_86, %c0_87] : memref<16x128x32xf32, #tpu.memory_space<vmem>>, vector<1x128x32xf32>
    %90 = vector.shape_cast %89 : vector<1x128x32xf32> to vector<128x32xf32>
    %cst_88 = arith.constant dense<0.000000e+00> : vector<8x32xf32>
    %91 = tpu.matmul %10, %90, %cst_88 {dimension_numbers = #tpu.dot_dimension_numbers<[1], [0], [0], [1], [0, 0, 1, 1], [], []>} : vector<8x128xf32>, vector<128x32xf32>, vector<8x32xf32> -> vector<8x32xf32>
    %c11_89 = arith.constant 11 : index
    %c0_90 = arith.constant 0 : index
    %c0_91 = arith.constant 0 : index
    %92 = vector.load %arg4[%c11_89, %c0_90, %c0_91] : memref<16x16x8xf32, #tpu.memory_space<vmem>>, vector<1x16x8xf32>
    %93 = vector.shape_cast %92 : vector<1x16x8xf32> to vector<16x8xf32>
    %cst_92 = arith.constant dense<0.000000e+00> : vector<16x32xf32>
    %94 = tpu.matmul %93, %91, %cst_92 {dimension_numbers = #tpu.dot_dimension_numbers<[1], [0], [0], [1], [0, 0, 1, 1], [], []>} : vector<16x8xf32>, vector<8x32xf32>, vector<16x32xf32> -> vector<16x32xf32>
    %95 = arith.addf %88, %94 : vector<16x32xf32>
    %c12 = arith.constant 12 : index
    %c0_93 = arith.constant 0 : index
    %c0_94 = arith.constant 0 : index
    %96 = vector.load %arg5[%c12, %c0_93, %c0_94] : memref<16x128x32xf32, #tpu.memory_space<vmem>>, vector<1x128x32xf32>
    %97 = vector.shape_cast %96 : vector<1x128x32xf32> to vector<128x32xf32>
    %cst_95 = arith.constant dense<0.000000e+00> : vector<8x32xf32>
    %98 = tpu.matmul %10, %97, %cst_95 {dimension_numbers = #tpu.dot_dimension_numbers<[1], [0], [0], [1], [0, 0, 1, 1], [], []>} : vector<8x128xf32>, vector<128x32xf32>, vector<8x32xf32> -> vector<8x32xf32>
    %c12_96 = arith.constant 12 : index
    %c0_97 = arith.constant 0 : index
    %c0_98 = arith.constant 0 : index
    %99 = vector.load %arg4[%c12_96, %c0_97, %c0_98] : memref<16x16x8xf32, #tpu.memory_space<vmem>>, vector<1x16x8xf32>
    %100 = vector.shape_cast %99 : vector<1x16x8xf32> to vector<16x8xf32>
    %cst_99 = arith.constant dense<0.000000e+00> : vector<16x32xf32>
    %101 = tpu.matmul %100, %98, %cst_99 {dimension_numbers = #tpu.dot_dimension_numbers<[1], [0], [0], [1], [0, 0, 1, 1], [], []>} : vector<16x8xf32>, vector<8x32xf32>, vector<16x32xf32> -> vector<16x32xf32>
    %102 = arith.addf %95, %101 : vector<16x32xf32>
    %c13 = arith.constant 13 : index
    %c0_100 = arith.constant 0 : index
    %c0_101 = arith.constant 0 : index
    %103 = vector.load %arg5[%c13, %c0_100, %c0_101] : memref<16x128x32xf32, #tpu.memory_space<vmem>>, vector<1x128x32xf32>
    %104 = vector.shape_cast %103 : vector<1x128x32xf32> to vector<128x32xf32>
    %cst_102 = arith.constant dense<0.000000e+00> : vector<8x32xf32>
    %105 = tpu.matmul %10, %104, %cst_102 {dimension_numbers = #tpu.dot_dimension_numbers<[1], [0], [0], [1], [0, 0, 1, 1], [], []>} : vector<8x128xf32>, vector<128x32xf32>, vector<8x32xf32> -> vector<8x32xf32>
    %c13_103 = arith.constant 13 : index
    %c0_104 = arith.constant 0 : index
    %c0_105 = arith.constant 0 : index
    %106 = vector.load %arg4[%c13_103, %c0_104, %c0_105] : memref<16x16x8xf32, #tpu.memory_space<vmem>>, vector<1x16x8xf32>
    %107 = vector.shape_cast %106 : vector<1x16x8xf32> to vector<16x8xf32>
    %cst_106 = arith.constant dense<0.000000e+00> : vector<16x32xf32>
    %108 = tpu.matmul %107, %105, %cst_106 {dimension_numbers = #tpu.dot_dimension_numbers<[1], [0], [0], [1], [0, 0, 1, 1], [], []>} : vector<16x8xf32>, vector<8x32xf32>, vector<16x32xf32> -> vector<16x32xf32>
    %109 = arith.addf %102, %108 : vector<16x32xf32>
    %c14 = arith.constant 14 : index
    %c0_107 = arith.constant 0 : index
    %c0_108 = arith.constant 0 : index
    %110 = vector.load %arg5[%c14, %c0_107, %c0_108] : memref<16x128x32xf32, #tpu.memory_space<vmem>>, vector<1x128x32xf32>
    %111 = vector.shape_cast %110 : vector<1x128x32xf32> to vector<128x32xf32>
    %cst_109 = arith.constant dense<0.000000e+00> : vector<8x32xf32>
    %112 = tpu.matmul %10, %111, %cst_109 {dimension_numbers = #tpu.dot_dimension_numbers<[1], [0], [0], [1], [0, 0, 1, 1], [], []>} : vector<8x128xf32>, vector<128x32xf32>, vector<8x32xf32> -> vector<8x32xf32>
    %c14_110 = arith.constant 14 : index
    %c0_111 = arith.constant 0 : index
    %c0_112 = arith.constant 0 : index
    %113 = vector.load %arg4[%c14_110, %c0_111, %c0_112] : memref<16x16x8xf32, #tpu.memory_space<vmem>>, vector<1x16x8xf32>
    %114 = vector.shape_cast %113 : vector<1x16x8xf32> to vector<16x8xf32>
    %cst_113 = arith.constant dense<0.000000e+00> : vector<16x32xf32>
    %115 = tpu.matmul %114, %112, %cst_113 {dimension_numbers = #tpu.dot_dimension_numbers<[1], [0], [0], [1], [0, 0, 1, 1], [], []>} : vector<16x8xf32>, vector<8x32xf32>, vector<16x32xf32> -> vector<16x32xf32>
    %116 = arith.addf %109, %115 : vector<16x32xf32>
    %c15 = arith.constant 15 : index
    %c0_114 = arith.constant 0 : index
    %c0_115 = arith.constant 0 : index
    %117 = vector.load %arg5[%c15, %c0_114, %c0_115] : memref<16x128x32xf32, #tpu.memory_space<vmem>>, vector<1x128x32xf32>
    %118 = vector.shape_cast %117 : vector<1x128x32xf32> to vector<128x32xf32>
    %cst_116 = arith.constant dense<0.000000e+00> : vector<8x32xf32>
    %119 = tpu.matmul %10, %118, %cst_116 {dimension_numbers = #tpu.dot_dimension_numbers<[1], [0], [0], [1], [0, 0, 1, 1], [], []>} : vector<8x128xf32>, vector<128x32xf32>, vector<8x32xf32> -> vector<8x32xf32>
    %c15_117 = arith.constant 15 : index
    %c0_118 = arith.constant 0 : index
    %c0_119 = arith.constant 0 : index
    %120 = vector.load %arg4[%c15_117, %c0_118, %c0_119] : memref<16x16x8xf32, #tpu.memory_space<vmem>>, vector<1x16x8xf32>
    %121 = vector.shape_cast %120 : vector<1x16x8xf32> to vector<16x8xf32>
    %cst_120 = arith.constant dense<0.000000e+00> : vector<16x32xf32>
    %122 = tpu.matmul %121, %119, %cst_120 {dimension_numbers = #tpu.dot_dimension_numbers<[1], [0], [0], [1], [0, 0, 1, 1], [], []>} : vector<16x8xf32>, vector<8x32xf32>, vector<16x32xf32> -> vector<16x32xf32>
    %123 = arith.addf %116, %122 : vector<16x32xf32>
    %c0_121 = arith.constant 0 : index
    %c0_122 = arith.constant 0 : index
    %124 = vector.load %arg6[%c0_121, %c0_122] : memref<16x1xf32, #tpu.memory_space<vmem>>, vector<16x1xf32>
    %125 = vector.broadcast %124 : vector<16x1xf32> to vector<16x32xf32>
    %126 = arith.addf %123, %125 : vector<16x32xf32>
    %cst_123 = arith.constant 0.000000e+00 : f32
    %127 = vector.broadcast %cst_123 : f32 to vector<16x32xf32>
    %128 = arith.cmpf oge, %126, %127 : vector<16x32xf32>
    %cst_124 = arith.constant 2.000000e-01 : f32
    %129 = vector.broadcast %cst_124 : f32 to vector<16x32xf32>
    %130 = arith.mulf %129, %126 : vector<16x32xf32>
    %131 = arith.select %128, %126, %130 : vector<16x32xi1>, vector<16x32xf32>
    %c0_125 = arith.constant 0 : index
    %c0_126 = arith.constant 0 : index
    %132 = vector.load %arg10[%c0_125, %c0_126] : memref<16x32xf32, #tpu.memory_space<vmem>>, vector<16x32xf32>
    tpu.vector_store %arg10[%c0_125, %c0_126], %131 {strides = array<i32>} : memref<16x32xf32, #tpu.memory_space<vmem>>, vector<16x32xf32>,
    %cst_127 = arith.constant 0.000000e+00 : f32
    %133 = vector.broadcast %cst_127 : f32 to vector<16x2xf32>
    %c0_128 = arith.constant 0 : index
    %c0_129 = arith.constant 0 : index
    %c0_130 = arith.constant 0 : index
    %134 = vector.load %arg8[%c0_128, %c0_129, %c0_130] : memref<16x32x2xf32, #tpu.memory_space<vmem>>, vector<1x32x2xf32>
    %135 = vector.shape_cast %134 : vector<1x32x2xf32> to vector<32x2xf32>
    %cst_131 = arith.constant dense<0.000000e+00> : vector<16x2xf32>
    %136 = tpu.matmul %131, %135, %cst_131 {dimension_numbers = #tpu.dot_dimension_numbers<[1], [0], [0], [1], [0, 0, 1, 1], [], []>} : vector<16x32xf32>, vector<32x2xf32>, vector<16x2xf32> -> vector<16x2xf32>
    %c0_132 = arith.constant 0 : index
    %c0_133 = arith.constant 0 : index
    %c0_134 = arith.constant 0 : index
    %137 = vector.load %arg7[%c0_132, %c0_133, %c0_134] : memref<16x16x1xf32, #tpu.memory_space<vmem>>, vector<1x16x1xf32>
    %138 = vector.shape_cast %137 : vector<1x16x1xf32> to vector<16x1xf32>
    %139 = vector.broadcast %138 : vector<16x1xf32> to vector<16x2xf32>
    %140 = arith.mulf %139, %136 : vector<16x2xf32>
    %141 = arith.addf %133, %140 : vector<16x2xf32>
    %c1_135 = arith.constant 1 : index
    %c0_136 = arith.constant 0 : index
    %c0_137 = arith.constant 0 : index
    %142 = vector.load %arg8[%c1_135, %c0_136, %c0_137] : memref<16x32x2xf32, #tpu.memory_space<vmem>>, vector<1x32x2xf32>
    %143 = vector.shape_cast %142 : vector<1x32x2xf32> to vector<32x2xf32>
    %cst_138 = arith.constant dense<0.000000e+00> : vector<16x2xf32>
    %144 = tpu.matmul %131, %143, %cst_138 {dimension_numbers = #tpu.dot_dimension_numbers<[1], [0], [0], [1], [0, 0, 1, 1], [], []>} : vector<16x32xf32>, vector<32x2xf32>, vector<16x2xf32> -> vector<16x2xf32>
    %c1_139 = arith.constant 1 : index
    %c0_140 = arith.constant 0 : index
    %c0_141 = arith.constant 0 : index
    %145 = vector.load %arg7[%c1_139, %c0_140, %c0_141] : memref<16x16x1xf32, #tpu.memory_space<vmem>>, vector<1x16x1xf32>
    %146 = vector.shape_cast %145 : vector<1x16x1xf32> to vector<16x1xf32>
    %147 = vector.broadcast %146 : vector<16x1xf32> to vector<16x2xf32>
    %148 = arith.mulf %147, %144 : vector<16x2xf32>
    %149 = arith.addf %141, %148 : vector<16x2xf32>
    %c2_142 = arith.constant 2 : index
    %c0_143 = arith.constant 0 : index
    %c0_144 = arith.constant 0 : index
    %150 = vector.load %arg8[%c2_142, %c0_143, %c0_144] : memref<16x32x2xf32, #tpu.memory_space<vmem>>, vector<1x32x2xf32>
    %151 = vector.shape_cast %150 : vector<1x32x2xf32> to vector<32x2xf32>
    %cst_145 = arith.constant dense<0.000000e+00> : vector<16x2xf32>
    %152 = tpu.matmul %131, %151, %cst_145 {dimension_numbers = #tpu.dot_dimension_numbers<[1], [0], [0], [1], [0, 0, 1, 1], [], []>} : vector<16x32xf32>, vector<32x2xf32>, vector<16x2xf32> -> vector<16x2xf32>
    %c2_146 = arith.constant 2 : index
    %c0_147 = arith.constant 0 : index
    %c0_148 = arith.constant 0 : index
    %153 = vector.load %arg7[%c2_146, %c0_147, %c0_148] : memref<16x16x1xf32, #tpu.memory_space<vmem>>, vector<1x16x1xf32>
    %154 = vector.shape_cast %153 : vector<1x16x1xf32> to vector<16x1xf32>
    %155 = vector.broadcast %154 : vector<16x1xf32> to vector<16x2xf32>
    %156 = arith.mulf %155, %152 : vector<16x2xf32>
    %157 = arith.addf %149, %156 : vector<16x2xf32>
    %c3_149 = arith.constant 3 : index
    %c0_150 = arith.constant 0 : index
    %c0_151 = arith.constant 0 : index
    %158 = vector.load %arg8[%c3_149, %c0_150, %c0_151] : memref<16x32x2xf32, #tpu.memory_space<vmem>>, vector<1x32x2xf32>
    %159 = vector.shape_cast %158 : vector<1x32x2xf32> to vector<32x2xf32>
    %cst_152 = arith.constant dense<0.000000e+00> : vector<16x2xf32>
    %160 = tpu.matmul %131, %159, %cst_152 {dimension_numbers = #tpu.dot_dimension_numbers<[1], [0], [0], [1], [0, 0, 1, 1], [], []>} : vector<16x32xf32>, vector<32x2xf32>, vector<16x2xf32> -> vector<16x2xf32>
    %c3_153 = arith.constant 3 : index
    %c0_154 = arith.constant 0 : index
    %c0_155 = arith.constant 0 : index
    %161 = vector.load %arg7[%c3_153, %c0_154, %c0_155] : memref<16x16x1xf32, #tpu.memory_space<vmem>>, vector<1x16x1xf32>
    %162 = vector.shape_cast %161 : vector<1x16x1xf32> to vector<16x1xf32>
    %163 = vector.broadcast %162 : vector<16x1xf32> to vector<16x2xf32>
    %164 = arith.mulf %163, %160 : vector<16x2xf32>
    %165 = arith.addf %157, %164 : vector<16x2xf32>
    %c4_156 = arith.constant 4 : index
    %c0_157 = arith.constant 0 : index
    %c0_158 = arith.constant 0 : index
    %166 = vector.load %arg8[%c4_156, %c0_157, %c0_158] : memref<16x32x2xf32, #tpu.memory_space<vmem>>, vector<1x32x2xf32>
    %167 = vector.shape_cast %166 : vector<1x32x2xf32> to vector<32x2xf32>
    %cst_159 = arith.constant dense<0.000000e+00> : vector<16x2xf32>
    %168 = tpu.matmul %131, %167, %cst_159 {dimension_numbers = #tpu.dot_dimension_numbers<[1], [0], [0], [1], [0, 0, 1, 1], [], []>} : vector<16x32xf32>, vector<32x2xf32>, vector<16x2xf32> -> vector<16x2xf32>
    %c4_160 = arith.constant 4 : index
    %c0_161 = arith.constant 0 : index
    %c0_162 = arith.constant 0 : index
    %169 = vector.load %arg7[%c4_160, %c0_161, %c0_162] : memref<16x16x1xf32, #tpu.memory_space<vmem>>, vector<1x16x1xf32>
    %170 = vector.shape_cast %169 : vector<1x16x1xf32> to vector<16x1xf32>
    %171 = vector.broadcast %170 : vector<16x1xf32> to vector<16x2xf32>
    %172 = arith.mulf %171, %168 : vector<16x2xf32>
    %173 = arith.addf %165, %172 : vector<16x2xf32>
    %c5_163 = arith.constant 5 : index
    %c0_164 = arith.constant 0 : index
    %c0_165 = arith.constant 0 : index
    %174 = vector.load %arg8[%c5_163, %c0_164, %c0_165] : memref<16x32x2xf32, #tpu.memory_space<vmem>>, vector<1x32x2xf32>
    %175 = vector.shape_cast %174 : vector<1x32x2xf32> to vector<32x2xf32>
    %cst_166 = arith.constant dense<0.000000e+00> : vector<16x2xf32>
    %176 = tpu.matmul %131, %175, %cst_166 {dimension_numbers = #tpu.dot_dimension_numbers<[1], [0], [0], [1], [0, 0, 1, 1], [], []>} : vector<16x32xf32>, vector<32x2xf32>, vector<16x2xf32> -> vector<16x2xf32>
    %c5_167 = arith.constant 5 : index
    %c0_168 = arith.constant 0 : index
    %c0_169 = arith.constant 0 : index
    %177 = vector.load %arg7[%c5_167, %c0_168, %c0_169] : memref<16x16x1xf32, #tpu.memory_space<vmem>>, vector<1x16x1xf32>
    %178 = vector.shape_cast %177 : vector<1x16x1xf32> to vector<16x1xf32>
    %179 = vector.broadcast %178 : vector<16x1xf32> to vector<16x2xf32>
    %180 = arith.mulf %179, %176 : vector<16x2xf32>
    %181 = arith.addf %173, %180 : vector<16x2xf32>
    %c6_170 = arith.constant 6 : index
    %c0_171 = arith.constant 0 : index
    %c0_172 = arith.constant 0 : index
    %182 = vector.load %arg8[%c6_170, %c0_171, %c0_172] : memref<16x32x2xf32, #tpu.memory_space<vmem>>, vector<1x32x2xf32>
    %183 = vector.shape_cast %182 : vector<1x32x2xf32> to vector<32x2xf32>
    %cst_173 = arith.constant dense<0.000000e+00> : vector<16x2xf32>
    %184 = tpu.matmul %131, %183, %cst_173 {dimension_numbers = #tpu.dot_dimension_numbers<[1], [0], [0], [1], [0, 0, 1, 1], [], []>} : vector<16x32xf32>, vector<32x2xf32>, vector<16x2xf32> -> vector<16x2xf32>
    %c6_174 = arith.constant 6 : index
    %c0_175 = arith.constant 0 : index
    %c0_176 = arith.constant 0 : index
    %185 = vector.load %arg7[%c6_174, %c0_175, %c0_176] : memref<16x16x1xf32, #tpu.memory_space<vmem>>, vector<1x16x1xf32>
    %186 = vector.shape_cast %185 : vector<1x16x1xf32> to vector<16x1xf32>
    %187 = vector.broadcast %186 : vector<16x1xf32> to vector<16x2xf32>
    %188 = arith.mulf %187, %184 : vector<16x2xf32>
    %189 = arith.addf %181, %188 : vector<16x2xf32>
    %c7_177 = arith.constant 7 : index
    %c0_178 = arith.constant 0 : index
    %c0_179 = arith.constant 0 : index
    %190 = vector.load %arg8[%c7_177, %c0_178, %c0_179] : memref<16x32x2xf32, #tpu.memory_space<vmem>>, vector<1x32x2xf32>
    %191 = vector.shape_cast %190 : vector<1x32x2xf32> to vector<32x2xf32>
    %cst_180 = arith.constant dense<0.000000e+00> : vector<16x2xf32>
    %192 = tpu.matmul %131, %191, %cst_180 {dimension_numbers = #tpu.dot_dimension_numbers<[1], [0], [0], [1], [0, 0, 1, 1], [], []>} : vector<16x32xf32>, vector<32x2xf32>, vector<16x2xf32> -> vector<16x2xf32>
    %c7_181 = arith.constant 7 : index
    %c0_182 = arith.constant 0 : index
    %c0_183 = arith.constant 0 : index
    %193 = vector.load %arg7[%c7_181, %c0_182, %c0_183] : memref<16x16x1xf32, #tpu.memory_space<vmem>>, vector<1x16x1xf32>
    %194 = vector.shape_cast %193 : vector<1x16x1xf32> to vector<16x1xf32>
    %195 = vector.broadcast %194 : vector<16x1xf32> to vector<16x2xf32>
    %196 = arith.mulf %195, %192 : vector<16x2xf32>
    %197 = arith.addf %189, %196 : vector<16x2xf32>
    %c8_184 = arith.constant 8 : index
    %c0_185 = arith.constant 0 : index
    %c0_186 = arith.constant 0 : index
    %198 = vector.load %arg8[%c8_184, %c0_185, %c0_186] : memref<16x32x2xf32, #tpu.memory_space<vmem>>, vector<1x32x2xf32>
    %199 = vector.shape_cast %198 : vector<1x32x2xf32> to vector<32x2xf32>
    %cst_187 = arith.constant dense<0.000000e+00> : vector<16x2xf32>
    %200 = tpu.matmul %131, %199, %cst_187 {dimension_numbers = #tpu.dot_dimension_numbers<[1], [0], [0], [1], [0, 0, 1, 1], [], []>} : vector<16x32xf32>, vector<32x2xf32>, vector<16x2xf32> -> vector<16x2xf32>
    %c8_188 = arith.constant 8 : index
    %c0_189 = arith.constant 0 : index
    %c0_190 = arith.constant 0 : index
    %201 = vector.load %arg7[%c8_188, %c0_189, %c0_190] : memref<16x16x1xf32, #tpu.memory_space<vmem>>, vector<1x16x1xf32>
    %202 = vector.shape_cast %201 : vector<1x16x1xf32> to vector<16x1xf32>
    %203 = vector.broadcast %202 : vector<16x1xf32> to vector<16x2xf32>
    %204 = arith.mulf %203, %200 : vector<16x2xf32>
    %205 = arith.addf %197, %204 : vector<16x2xf32>
    %c9_191 = arith.constant 9 : index
    %c0_192 = arith.constant 0 : index
    %c0_193 = arith.constant 0 : index
    %206 = vector.load %arg8[%c9_191, %c0_192, %c0_193] : memref<16x32x2xf32, #tpu.memory_space<vmem>>, vector<1x32x2xf32>
    %207 = vector.shape_cast %206 : vector<1x32x2xf32> to vector<32x2xf32>
    %cst_194 = arith.constant dense<0.000000e+00> : vector<16x2xf32>
    %208 = tpu.matmul %131, %207, %cst_194 {dimension_numbers = #tpu.dot_dimension_numbers<[1], [0], [0], [1], [0, 0, 1, 1], [], []>} : vector<16x32xf32>, vector<32x2xf32>, vector<16x2xf32> -> vector<16x2xf32>
    %c9_195 = arith.constant 9 : index
    %c0_196 = arith.constant 0 : index
    %c0_197 = arith.constant 0 : index
    %209 = vector.load %arg7[%c9_195, %c0_196, %c0_197] : memref<16x16x1xf32, #tpu.memory_space<vmem>>, vector<1x16x1xf32>
    %210 = vector.shape_cast %209 : vector<1x16x1xf32> to vector<16x1xf32>
    %211 = vector.broadcast %210 : vector<16x1xf32> to vector<16x2xf32>
    %212 = arith.mulf %211, %208 : vector<16x2xf32>
    %213 = arith.addf %205, %212 : vector<16x2xf32>
    %c10_198 = arith.constant 10 : index
    %c0_199 = arith.constant 0 : index
    %c0_200 = arith.constant 0 : index
    %214 = vector.load %arg8[%c10_198, %c0_199, %c0_200] : memref<16x32x2xf32, #tpu.memory_space<vmem>>, vector<1x32x2xf32>
    %215 = vector.shape_cast %214 : vector<1x32x2xf32> to vector<32x2xf32>
    %cst_201 = arith.constant dense<0.000000e+00> : vector<16x2xf32>
    %216 = tpu.matmul %131, %215, %cst_201 {dimension_numbers = #tpu.dot_dimension_numbers<[1], [0], [0], [1], [0, 0, 1, 1], [], []>} : vector<16x32xf32>, vector<32x2xf32>, vector<16x2xf32> -> vector<16x2xf32>
    %c10_202 = arith.constant 10 : index
    %c0_203 = arith.constant 0 : index
    %c0_204 = arith.constant 0 : index
    %217 = vector.load %arg7[%c10_202, %c0_203, %c0_204] : memref<16x16x1xf32, #tpu.memory_space<vmem>>, vector<1x16x1xf32>
    %218 = vector.shape_cast %217 : vector<1x16x1xf32> to vector<16x1xf32>
    %219 = vector.broadcast %218 : vector<16x1xf32> to vector<16x2xf32>
    %220 = arith.mulf %219, %216 : vector<16x2xf32>
    %221 = arith.addf %213, %220 : vector<16x2xf32>
    %c11_205 = arith.constant 11 : index
    %c0_206 = arith.constant 0 : index
    %c0_207 = arith.constant 0 : index
    %222 = vector.load %arg8[%c11_205, %c0_206, %c0_207] : memref<16x32x2xf32, #tpu.memory_space<vmem>>, vector<1x32x2xf32>
    %223 = vector.shape_cast %222 : vector<1x32x2xf32> to vector<32x2xf32>
    %cst_208 = arith.constant dense<0.000000e+00> : vector<16x2xf32>
    %224 = tpu.matmul %131, %223, %cst_208 {dimension_numbers = #tpu.dot_dimension_numbers<[1], [0], [0], [1], [0, 0, 1, 1], [], []>} : vector<16x32xf32>, vector<32x2xf32>, vector<16x2xf32> -> vector<16x2xf32>
    %c11_209 = arith.constant 11 : index
    %c0_210 = arith.constant 0 : index
    %c0_211 = arith.constant 0 : index
    %225 = vector.load %arg7[%c11_209, %c0_210, %c0_211] : memref<16x16x1xf32, #tpu.memory_space<vmem>>, vector<1x16x1xf32>
    %226 = vector.shape_cast %225 : vector<1x16x1xf32> to vector<16x1xf32>
    %227 = vector.broadcast %226 : vector<16x1xf32> to vector<16x2xf32>
    %228 = arith.mulf %227, %224 : vector<16x2xf32>
    %229 = arith.addf %221, %228 : vector<16x2xf32>
    %c12_212 = arith.constant 12 : index
    %c0_213 = arith.constant 0 : index
    %c0_214 = arith.constant 0 : index
    %230 = vector.load %arg8[%c12_212, %c0_213, %c0_214] : memref<16x32x2xf32, #tpu.memory_space<vmem>>, vector<1x32x2xf32>
    %231 = vector.shape_cast %230 : vector<1x32x2xf32> to vector<32x2xf32>
    %cst_215 = arith.constant dense<0.000000e+00> : vector<16x2xf32>
    %232 = tpu.matmul %131, %231, %cst_215 {dimension_numbers = #tpu.dot_dimension_numbers<[1], [0], [0], [1], [0, 0, 1, 1], [], []>} : vector<16x32xf32>, vector<32x2xf32>, vector<16x2xf32> -> vector<16x2xf32>
    %c12_216 = arith.constant 12 : index
    %c0_217 = arith.constant 0 : index
    %c0_218 = arith.constant 0 : index
    %233 = vector.load %arg7[%c12_216, %c0_217, %c0_218] : memref<16x16x1xf32, #tpu.memory_space<vmem>>, vector<1x16x1xf32>
    %234 = vector.shape_cast %233 : vector<1x16x1xf32> to vector<16x1xf32>
    %235 = vector.broadcast %234 : vector<16x1xf32> to vector<16x2xf32>
    %236 = arith.mulf %235, %232 : vector<16x2xf32>
    %237 = arith.addf %229, %236 : vector<16x2xf32>
    %c13_219 = arith.constant 13 : index
    %c0_220 = arith.constant 0 : index
    %c0_221 = arith.constant 0 : index
    %238 = vector.load %arg8[%c13_219, %c0_220, %c0_221] : memref<16x32x2xf32, #tpu.memory_space<vmem>>, vector<1x32x2xf32>
    %239 = vector.shape_cast %238 : vector<1x32x2xf32> to vector<32x2xf32>
    %cst_222 = arith.constant dense<0.000000e+00> : vector<16x2xf32>
    %240 = tpu.matmul %131, %239, %cst_222 {dimension_numbers = #tpu.dot_dimension_numbers<[1], [0], [0], [1], [0, 0, 1, 1], [], []>} : vector<16x32xf32>, vector<32x2xf32>, vector<16x2xf32> -> vector<16x2xf32>
    %c13_223 = arith.constant 13 : index
    %c0_224 = arith.constant 0 : index
    %c0_225 = arith.constant 0 : index
    %241 = vector.load %arg7[%c13_223, %c0_224, %c0_225] : memref<16x16x1xf32, #tpu.memory_space<vmem>>, vector<1x16x1xf32>
    %242 = vector.shape_cast %241 : vector<1x16x1xf32> to vector<16x1xf32>
    %243 = vector.broadcast %242 : vector<16x1xf32> to vector<16x2xf32>
    %244 = arith.mulf %243, %240 : vector<16x2xf32>
    %245 = arith.addf %237, %244 : vector<16x2xf32>
    %c14_226 = arith.constant 14 : index
    %c0_227 = arith.constant 0 : index
    %c0_228 = arith.constant 0 : index
    %246 = vector.load %arg8[%c14_226, %c0_227, %c0_228] : memref<16x32x2xf32, #tpu.memory_space<vmem>>, vector<1x32x2xf32>
    %247 = vector.shape_cast %246 : vector<1x32x2xf32> to vector<32x2xf32>
    %cst_229 = arith.constant dense<0.000000e+00> : vector<16x2xf32>
    %248 = tpu.matmul %131, %247, %cst_229 {dimension_numbers = #tpu.dot_dimension_numbers<[1], [0], [0], [1], [0, 0, 1, 1], [], []>} : vector<16x32xf32>, vector<32x2xf32>, vector<16x2xf32> -> vector<16x2xf32>
    %c14_230 = arith.constant 14 : index
    %c0_231 = arith.constant 0 : index
    %c0_232 = arith.constant 0 : index
    %249 = vector.load %arg7[%c14_230, %c0_231, %c0_232] : memref<16x16x1xf32, #tpu.memory_space<vmem>>, vector<1x16x1xf32>
    %250 = vector.shape_cast %249 : vector<1x16x1xf32> to vector<16x1xf32>
    %251 = vector.broadcast %250 : vector<16x1xf32> to vector<16x2xf32>
    %252 = arith.mulf %251, %248 : vector<16x2xf32>
    %253 = arith.addf %245, %252 : vector<16x2xf32>
    %c15_233 = arith.constant 15 : index
    %c0_234 = arith.constant 0 : index
    %c0_235 = arith.constant 0 : index
    %254 = vector.load %arg8[%c15_233, %c0_234, %c0_235] : memref<16x32x2xf32, #tpu.memory_space<vmem>>, vector<1x32x2xf32>
    %255 = vector.shape_cast %254 : vector<1x32x2xf32> to vector<32x2xf32>
    %cst_236 = arith.constant dense<0.000000e+00> : vector<16x2xf32>
    %256 = tpu.matmul %131, %255, %cst_236 {dimension_numbers = #tpu.dot_dimension_numbers<[1], [0], [0], [1], [0, 0, 1, 1], [], []>} : vector<16x32xf32>, vector<32x2xf32>, vector<16x2xf32> -> vector<16x2xf32>
    %c15_237 = arith.constant 15 : index
    %c0_238 = arith.constant 0 : index
    %c0_239 = arith.constant 0 : index
    %257 = vector.load %arg7[%c15_237, %c0_238, %c0_239] : memref<16x16x1xf32, #tpu.memory_space<vmem>>, vector<1x16x1xf32>
    %258 = vector.shape_cast %257 : vector<1x16x1xf32> to vector<16x1xf32>
    %259 = vector.broadcast %258 : vector<16x1xf32> to vector<16x2xf32>
    %260 = arith.mulf %259, %256 : vector<16x2xf32>
    %261 = arith.addf %253, %260 : vector<16x2xf32>
    %cst_240 = arith.constant dense<0.000000e+00> : vector<2xf32>
    %262 = vector.multi_reduction <add>, %261, %cst_240 [0] : vector<16x2xf32> to vector<2xf32>
    %263 = vector.shape_cast %262 : vector<2xf32> to vector<1x2xf32>
    %c0_241 = arith.constant 0 : index
    %c0_242 = arith.constant 0 : index
    %264 = vector.load %arg9[%c0_241, %c0_242] : memref<1x1xf32, #tpu.memory_space<vmem>>, vector<1x1xf32>
    %265 = vector.broadcast %264 : vector<1x1xf32> to vector<1x2xf32>
    %266 = arith.addf %263, %265 : vector<1x2xf32>
    %267 = arith.negf %266 : vector<1x2xf32>
    %268 = math.exp %267 : vector<1x2xf32>
    %cst_243 = arith.constant 1.000000e+00 : f32
    %269 = vector.broadcast %cst_243 : f32 to vector<1x2xf32>
    %270 = arith.addf %269, %268 : vector<1x2xf32>
    %271 = arith.divf %269, %270 : vector<1x2xf32>
    %c0_244 = arith.constant 0 : index
    %c0_245 = arith.constant 0 : index
    %272 = vector.load %arg11[%c0_244, %c0_245] : memref<1x2xf32, #tpu.memory_space<vmem>>, vector<1x2xf32>
    tpu.vector_store %arg11[%c0_244, %c0_245], %271 {strides = array<i32>} : memref<1x2xf32, #tpu.memory_space<vmem>>, vector<1x2xf32>,
    return
  }
  func.func @transform_0(%arg0: i32) -> (i32, i32) {
    %c0_i32 = arith.constant 0 : i32
    %c0_i32_0 = arith.constant 0 : i32
    %c0_i32_1 = arith.constant 0 : i32
    return %c0_i32, %c0_i32_0 : i32, i32
  }
  func.func @transform_1(%arg0: i32) -> (i32, i32) {
    %c0_i32 = arith.constant 0 : i32
    %c0_i32_0 = arith.constant 0 : i32
    %c0_i32_1 = arith.constant 0 : i32
    return %c0_i32, %c0_i32_0 : i32, i32
  }
  func.func @transform_2(%arg0: i32) -> (i32, i32) {
    %c0_i32 = arith.constant 0 : i32
    %c0_i32_0 = arith.constant 0 : i32
    %c0_i32_1 = arith.constant 0 : i32
    return %c0_i32, %c0_i32_0 : i32, i32
  }
  func.func @transform_3(%arg0: i32) -> (i32, i32, i32) {
    %c0_i32 = arith.constant 0 : i32
    %c0_i32_0 = arith.constant 0 : i32
    %c0_i32_1 = arith.constant 0 : i32
    %c0_i32_2 = arith.constant 0 : i32
    return %c0_i32, %c0_i32_0, %c0_i32_1 : i32, i32, i32
  }
  func.func @transform_4(%arg0: i32) -> (i32, i32, i32) {
    %c0_i32 = arith.constant 0 : i32
    %c0_i32_0 = arith.constant 0 : i32
    %c0_i32_1 = arith.constant 0 : i32
    %c0_i32_2 = arith.constant 0 : i32
    return %c0_i32, %c0_i32_0, %c0_i32_1 : i32, i32, i32
  }
  func.func @transform_5(%arg0: i32) -> (i32, i32) {
    %c0_i32 = arith.constant 0 : i32
    %c0_i32_0 = arith.constant 0 : i32
    %c0_i32_1 = arith.constant 0 : i32
    return %c0_i32, %c0_i32_0 : i32, i32
  }
  func.func @transform_6(%arg0: i32) -> (i32, i32, i32) {
    %c0_i32 = arith.constant 0 : i32
    %c0_i32_0 = arith.constant 0 : i32
    %c0_i32_1 = arith.constant 0 : i32
    %c0_i32_2 = arith.constant 0 : i32
    return %c0_i32, %c0_i32_0, %c0_i32_1 : i32, i32, i32
  }
  func.func @transform_7(%arg0: i32) -> (i32, i32, i32) {
    %c0_i32 = arith.constant 0 : i32
    %c0_i32_0 = arith.constant 0 : i32
    %c0_i32_1 = arith.constant 0 : i32
    %c0_i32_2 = arith.constant 0 : i32
    return %c0_i32, %c0_i32_0, %c0_i32_1 : i32, i32, i32
  }
  func.func @transform_8(%arg0: i32) -> (i32, i32) {
    %c0_i32 = arith.constant 0 : i32
    %c0_i32_0 = arith.constant 0 : i32
    %c0_i32_1 = arith.constant 0 : i32
    return %c0_i32, %c0_i32_0 : i32, i32
  }
  func.func @transform_9(%arg0: i32) -> (i32, i32) {
    %c0_i32 = arith.constant 0 : i32
    %c0_i32_0 = arith.constant 0 : i32
    %c0_i32_1 = arith.constant 0 : i32
    return %c0_i32, %c0_i32_0 : i32, i32
  }
  func.func @transform_10(%arg0: i32) -> (i32, i32) {
    %c0_i32 = arith.constant 0 : i32
    %c0_i32_0 = arith.constant 0 : i32
    %c0_i32_1 = arith.constant 0 : i32
    return %c0_i32, %c0_i32_0 : i32, i32
  }
}

</mosaic_0001>

<llo_original>
// kernel: tpu_custom_call.1
$region0: #{tpu_custom_call.1}
  #allocation0 [shape = 'u32[]', space=smem, size = 0x4, offset = 0x4, fixed_abs, tag = 'smem constant byte address 0x4 - core index']
  #allocation1 [shape = 'u32[144,128]{1,0:T(1,128)}', space=vmem, size = 0x12000, scoped, tag = 'internal scratch']
  #allocation2 [shape = 'f32[1,1]{1,0:T(1,128)S(1)}', space=vmem, size = 0x200, scoped, tag = 'scoped memory for tpu_custom_call.1']
  %s0 = inlined_call_operand.vmem [shape: f32[48,128], index: 0, kind: input, shape index: {}]
  %s1 = inlined_call_operand.vmem [shape: f32[8,48], index: 1, kind: input, shape index: {}]
  %s2 = inlined_call_operand.vmem [shape: f32[8,1], index: 2, kind: input, shape index: {}]
  %s3 = inlined_call_operand.vmem [shape: f32[16,16,8], index: 3, kind: input, shape index: {}]
  %s4 = inlined_call_operand.vmem [shape: f32[16,128,32], index: 4, kind: input, shape index: {}]
  %s5 = inlined_call_operand.vmem [shape: f32[16,1], index: 5, kind: input, shape index: {}]
  %s6 = inlined_call_operand.vmem [shape: f32[16,16,1], index: 6, kind: input, shape index: {}]
  %s7 = inlined_call_operand.vmem [shape: f32[16,32,2], index: 7, kind: input, shape index: {}]
  %s8 = inlined_call_operand.<no memory space> [shape: f32[1,1], index: 8, kind: input, shape index: {}]
  %s9 = inlined_call_operand.hbm [shape: f32[16,32], index: 9, kind: output, shape index: {0}]
  %s10 = inlined_call_operand.hbm [shape: f32[1,2], index: 10, kind: output, shape index: {1}]
  %11 = xla_tuple %s9, %s10
  %s12 = sld [smem:[#allocation0]]
  $region54: #{tpu_custom_call.1} parent=0
    _
  %s14 = ssub.s32 1, %s12
  %s15 = scalar_select 0, %s14, %s12
  %v16 = vstv %s8
  %17 = vst [vmem:[#allocation2] sm:$0x1] %v16
  $region1: #{tpu_custom_call.1} parent=0
    #allocation3 [shape = 'u8[8192]{0}', space=vmem, size = 0x2000, scoped, tag = 'output window, operand 0, single buffered']
    #allocation4 [shape = 's32[1]{0}', space=sflag, size = 0x4, scoped, tag = 'scoped memory for tpu_custom_call.1']
    #allocation5 [shape = 'u8[512]{0}', space=vmem, size = 0x400, scoped, tag = 'output window, operand 1, single buffered']
    #allocation6 [shape = 's32[1]{0}', space=sflag, size = 0x4, scoped, tag = 'scoped memory for tpu_custom_call.1']
    %18 = vsyncpa [#allocation4], 0
    %19 = vsyncpa [#allocation6], 0
    // Predicated region
    $region2: #{tpu_custom_call.1} parent=1 // pred_check
      _
    $region3: #{tpu_custom_call.1} parent=1 // pred_check_branch
      %21 = sbr.rel (0) target = $region5
    $region4: #{tpu_custom_call.1} parent=1 // pred_region
      _
    $region5: #{tpu_custom_call.1} parent=1 // pred_fallthru
      _
    // Predicated region
    $region6: #{tpu_custom_call.1} parent=1 // pred_check
      _
    $region7: #{tpu_custom_call.1} parent=1 // pred_check_branch
      %23 = sbr.rel (0) target = $region9
    $region8: #{tpu_custom_call.1} parent=1 // pred_region
      _
    $region9: #{tpu_custom_call.1} parent=1 // pred_fallthru
      _
    // Predicated region
    $region10: #{tpu_custom_call.1} parent=1 // pred_check
      _
    $region11: #{tpu_custom_call.1} parent=1 // pred_check_branch
      %25 = sbr.rel (0) target = $region13
    $region12: #{tpu_custom_call.1} parent=1 // pred_region
      _
    $region13: #{tpu_custom_call.1} parent=1 // pred_fallthru
      _
    // Predicated region
    $region14: #{tpu_custom_call.1} parent=1 // pred_check
      _
    $region15: #{tpu_custom_call.1} parent=1 // pred_check_branch
      %27 = sbr.rel (0) target = $region17
    $region16: #{tpu_custom_call.1} parent=1 // pred_region
      _
    $region17: #{tpu_custom_call.1} parent=1 // pred_fallthru
      _
    // Predicated region
    $region18: #{tpu_custom_call.1} parent=1 // pred_check
      _
    $region19: #{tpu_custom_call.1} parent=1 // pred_check_branch
      %29 = sbr.rel (0) target = $region21
    $region20: #{tpu_custom_call.1} parent=1 // pred_region
      _
    $region21: #{tpu_custom_call.1} parent=1 // pred_fallthru
      _
    // Predicated region
    $region22: #{tpu_custom_call.1} parent=1 // pred_check
      _
    $region23: #{tpu_custom_call.1} parent=1 // pred_check_branch
      %31 = sbr.rel (0) target = $region25
    $region24: #{tpu_custom_call.1} parent=1 // pred_region
      _
    $region25: #{tpu_custom_call.1} parent=1 // pred_fallthru
      _
    // Predicated region
    $region26: #{tpu_custom_call.1} parent=1 // pred_check
      _
    $region27: #{tpu_custom_call.1} parent=1 // pred_check_branch
      %33 = sbr.rel (0) target = $region29
    $region28: #{tpu_custom_call.1} parent=1 // pred_region
      _
    $region29: #{tpu_custom_call.1} parent=1 // pred_fallthru
      _
    // Predicated region
    $region30: #{tpu_custom_call.1} parent=1 // pred_check
      _
    $region31: #{tpu_custom_call.1} parent=1 // pred_check_branch
      %35 = sbr.rel (0) target = $region33
    $region32: #{tpu_custom_call.1} parent=1 // pred_region
      _
    $region33: #{tpu_custom_call.1} parent=1 // pred_fallthru
      _
    // Predicated region
    $region34: #{tpu_custom_call.1} parent=1 // pred_check
      _
    $region35: #{tpu_custom_call.1} parent=1 // pred_check_branch
      %37 = sbr.rel (0) target = $region37
    $region36: #{tpu_custom_call.1} parent=1 // pred_region
      _
    $region37: #{tpu_custom_call.1} parent=1 // pred_fallthru
      _
    %v38 = vld [vmem:[%s1] sm:$0xff]
    %v39 = vld [vmem:[%s0] sm:$0xff]
    %v40 = vld [vmem:[%s0 + $0x8] sm:$0xff]
    %v41 = vld [vmem:[%s0 + $0x10] sm:$0xff]
    %v42 = vld [vmem:[%s0 + $0x18] sm:$0xff]
    %v43 = vld [vmem:[%s0 + $0x20] sm:$0xff]
    %v44 = vld [vmem:[%s0 + $0x28] sm:$0xff]
    %v45 = vld [vmem:[%s2] sm:$0xff]
    %47 = vset.pattern.permute.xlu0 0
    %48 = vperm.xlu0 %47, %v45
    %v49 = vpop.permute.xlu0 %48
    %vm51 = vcmask 392192
    %v53 = vsel %vm51, %v38, 0
    %55 = vmatprep.subr.mxu0 0.0
    %56 = vmatpush1.msra.mxu0 0.0
    %57 = vmatprep.subr.mxu0 0.0
    %58 = vmatpush1.msra.mxu0 0.0
    %59 = vmatprep.subr.mxu0 0.0
    %60 = vmatpush1.msra.mxu0 0.0
    %61 = vmatprep.subr.mxu0 0.0
    %62 = vmatpush1.msra.mxu0 0.0
    %63 = vmatprep.subr.mxu0 0.0
    %64 = vmatpush1.msra.mxu0 0.0
    %65 = vmatprep.subr.mxu0 0.0
    %66 = vmatpush1.msra.mxu0 0.0
    %67 = vmatprep.subr.mxu0 0.0
    %68 = vmatpush1.msra.mxu0 0.0
    %69 = vmatprep.subr.mxu0 0.0
    %70 = vmatpush1.msra.mxu0 0.0
    %71 = vmatprep.subr.mxu0 0.0
    %72 = vmatpush1.msra.mxu0 0.0
    %73 = vmatprep.subr.mxu0 0.0
    %74 = vmatpush1.msra.mxu0 0.0
    %75 = vmatprep.subr.mxu0 0.0
    %76 = vmatpush1.msra.mxu0 %v44
    %77 = vmatprep.subr.mxu0 0.0
    %78 = vmatpush1.msra.mxu0 %v43
    %79 = vmatprep.subr.mxu0 0.0
    %80 = vmatpush1.msra.mxu0 %v42
    %81 = vmatprep.subr.mxu0 0.0
    %82 = vmatpush1.msra.mxu0 %v41
    %83 = vmatprep.subr.mxu0 0.0
    %84 = vmatpush1.msra.mxu0 %v40
    %85 = vmatprep.subr.mxu0 0.0
    %86 = vmatpush1.msra.mxu0 %v39
    %87 = vmatprep.subr.mxu0 0.0
    %88 = vmatpush2.msra.mxu0 0.0
    %89 = vmatprep.subr.mxu0 0.0
    %90 = vmatpush2.msra.mxu0 0.0
    %91 = vmatprep.subr.mxu0 0.0
    %92 = vmatpush2.msra.mxu0 0.0
    %93 = vmatprep.subr.mxu0 0.0
    %94 = vmatpush2.msra.mxu0 0.0
    %95 = vmatprep.subr.mxu0 0.0
    %96 = vmatpush2.msra.mxu0 0.0
    %97 = vmatprep.subr.mxu0 0.0
    %98 = vmatpush2.msra.mxu0 0.0
    %99 = vmatprep.subr.mxu0 0.0
    %100 = vmatpush2.msra.mxu0 0.0
    %101 = vmatprep.subr.mxu0 0.0
    %102 = vmatpush2.msra.mxu0 0.0
    %103 = vmatprep.subr.mxu0 0.0
    %104 = vmatpush2.msra.mxu0 0.0
    %105 = vmatprep.subr.mxu0 0.0
    %106 = vmatpush2.msra.mxu0 0.0
    %107 = vmatprep.subr.mxu0 0.0
    %108 = vmatpush2.msra.mxu0 0.0
    %109 = vmatprep.subr.mxu0 0.0
    %110 = vmatpush2.msra.mxu0 0.0
    %111 = vmatprep.subr.mxu0 0.0
    %112 = vmatpush2.msra.mxu0 0.0
    %113 = vmatprep.subr.mxu0 0.0
    %114 = vmatpush2.msra.mxu0 0.0
    %115 = vmatprep.subr.mxu0 0.0
    %116 = vmatpush2.msra.mxu0 0.0
    %117 = vmatprep.subr.mxu0 0.0
    %118 = vmatpush2.msra.mxu0 0.0
    %119 = vmatprep.mubr.f32.mxu0 0.0
    %120 = vmatmul.mubr.f32.gmra.mxu0 %v53
    %v121 = vpop.f32.mrf.mxu0
    %v122 = vadd.f32 %v49, %v121
    %v123 = vpop.f32.mrf.mxu0
    %124 = vdwg.mxu0
    %vm125 = vcmp.ge.f32.partialorder %v122, 0.0
    %v126 = vmul.f32 %v122, 0.2
    %v127 = vsel %vm125, %v122, %v126
    %v128 = vld [vmem:[%s4] sm:$0xff]
    %v129 = vld [vmem:[%s4 + $0x8] sm:$0xff]
    %v130 = vld [vmem:[%s4 + $0x10] sm:$0xff]
    %v131 = vld [vmem:[%s4 + $0x18] sm:$0xff]
    %v132 = vld [vmem:[%s4 + $0x20] sm:$0xff]
    %v133 = vld [vmem:[%s4 + $0x28] sm:$0xff]
    %v134 = vld [vmem:[%s4 + $0x30] sm:$0xff]
    %v135 = vld [vmem:[%s4 + $0x38] sm:$0xff]
    %v136 = vld [vmem:[%s4 + $0x40] sm:$0xff]
    %v137 = vld [vmem:[%s4 + $0x48] sm:$0xff]
    %v138 = vld [vmem:[%s4 + $0x50] sm:$0xff]
    %v139 = vld [vmem:[%s4 + $0x58] sm:$0xff]
    %v140 = vld [vmem:[%s4 + $0x60] sm:$0xff]
    %v141 = vld [vmem:[%s4 + $0x68] sm:$0xff]
    %v142 = vld [vmem:[%s4 + $0x70] sm:$0xff]
    %v143 = vld [vmem:[%s4 + $0x78] sm:$0xff]
    %144 = vmatprep.subr.mxu0 0.0
    %145 = vmatpush1.msra.mxu0 %v143
    %146 = vmatprep.subr.mxu0 0.0
    %147 = vmatpush1.msra.mxu0 %v142
    %148 = vmatprep.subr.mxu0 0.0
    %149 = vmatpush1.msra.mxu0 %v141
    %150 = vmatprep.subr.mxu0 0.0
    %151 = vmatpush1.msra.mxu0 %v140
    %152 = vmatprep.subr.mxu0 0.0
    %153 = vmatpush1.msra.mxu0 %v139
    %154 = vmatprep.subr.mxu0 0.0
    %155 = vmatpush1.msra.mxu0 %v138
    %156 = vmatprep.subr.mxu0 0.0
    %157 = vmatpush1.msra.mxu0 %v137
    %158 = vmatprep.subr.mxu0 0.0
    %159 = vmatpush1.msra.mxu0 %v136
    %160 = vmatprep.subr.mxu0 0.0
    %161 = vmatpush1.msra.mxu0 %v135
    %162 = vmatprep.subr.mxu0 0.0
    %163 = vmatpush1.msra.mxu0 %v134
    %164 = vmatprep.subr.mxu0 0.0
    %165 = vmatpush1.msra.mxu0 %v133
    %166 = vmatprep.subr.mxu0 0.0
    %167 = vmatpush1.msra.mxu0 %v132
    %168 = vmatprep.subr.mxu0 0.0
    %169 = vmatpush1.msra.mxu0 %v131
    %170 = vmatprep.subr.mxu0 0.0
    %171 = vmatpush1.msra.mxu0 %v130
    %172 = vmatprep.subr.mxu0 0.0
    %173 = vmatpush1.msra.mxu0 %v129
    %174 = vmatprep.subr.mxu0 0.0
    %175 = vmatpush1.msra.mxu0 %v128
    %176 = vmatprep.subr.mxu0 0.0
    %177 = vmatpush2.msra.mxu0 0.0
    %178 = vmatprep.subr.mxu0 0.0
    %179 = vmatpush2.msra.mxu0 0.0
    %180 = vmatprep.subr.mxu0 0.0
    %181 = vmatpush2.msra.mxu0 0.0
    %182 = vmatprep.subr.mxu0 0.0
    %183 = vmatpush2.msra.mxu0 0.0
    %184 = vmatprep.subr.mxu0 0.0
    %185 = vmatpush2.msra.mxu0 0.0
    %186 = vmatprep.subr.mxu0 0.0
    %187 = vmatpush2.msra.mxu0 0.0
    %188 = vmatprep.subr.mxu0 0.0
    %189 = vmatpush2.msra.mxu0 0.0
    %190 = vmatprep.subr.mxu0 0.0
    %191 = vmatpush2.msra.mxu0 0.0
    %192 = vmatprep.subr.mxu0 0.0
    %193 = vmatpush2.msra.mxu0 0.0
    %194 = vmatprep.subr.mxu0 0.0
    %195 = vmatpush2.msra.mxu0 0.0
    %196 = vmatprep.subr.mxu0 0.0
    %197 = vmatpush2.msra.mxu0 0.0
    %198 = vmatprep.subr.mxu0 0.0
    %199 = vmatpush2.msra.mxu0 0.0
    %200 = vmatprep.subr.mxu0 0.0
    %201 = vmatpush2.msra.mxu0 0.0
    %202 = vmatprep.subr.mxu0 0.0
    %203 = vmatpush2.msra.mxu0 0.0
    %204 = vmatprep.subr.mxu0 0.0
    %205 = vmatpush2.msra.mxu0 0.0
    %206 = vmatprep.subr.mxu0 0.0
    %207 = vmatpush2.msra.mxu0 0.0
    %208 = vmatprep.mubr.f32.mxu0 0.0
    %209 = vmatmul.mubr.f32.gmra.mxu0 %v127
    %v210 = vpop.f32.mrf.mxu0
    %v211 = vadd.f32 0.0, %v210
    %v212 = vpop.f32.mrf.mxu0
    %213 = vdwg.mxu0
    %v214 = vld [vmem:[%s3] sm:$0xff]
    %v215 = vld [vmem:[%s3 + $0x8] sm:$0xff]
    %s216 = scalar_lea.vmem %s4, 128
    %v217 = vld [vmem:[%s216] sm:$0xff]
    %v218 = vld [vmem:[%s216 + $0x8] sm:$0xff]
    %v219 = vld [vmem:[%s216 + $0x10] sm:$0xff]
    %v220 = vld [vmem:[%s216 + $0x18] sm:$0xff]
    %v221 = vld [vmem:[%s216 + $0x20] sm:$0xff]
    %v222 = vld [vmem:[%s216 + $0x28] sm:$0xff]
    %v223 = vld [vmem:[%s216 + $0x30] sm:$0xff]
    %v224 = vld [vmem:[%s216 + $0x38] sm:$0xff]
    %v225 = vld [vmem:[%s216 + $0x40] sm:$0xff]
    %v226 = vld [vmem:[%s216 + $0x48] sm:$0xff]
    %v227 = vld [vmem:[%s216 + $0x50] sm:$0xff]
    %v228 = vld [vmem:[%s216 + $0x58] sm:$0xff]
    %v229 = vld [vmem:[%s216 + $0x60] sm:$0xff]
    %v230 = vld [vmem:[%s216 + $0x68] sm:$0xff]
    %v231 = vld [vmem:[%s216 + $0x70] sm:$0xff]
    %v232 = vld [vmem:[%s216 + $0x78] sm:$0xff]
    %233 = vmatprep.subr.mxu0 0.0
    %234 = vmatpush1.msra.mxu0 %v232
    %235 = vmatprep.subr.mxu0 0.0
    %236 = vmatpush1.msra.mxu0 %v231
    %237 = vmatprep.subr.mxu0 0.0
    %238 = vmatpush1.msra.mxu0 %v230
    %239 = vmatprep.subr.mxu0 0.0
    %240 = vmatpush1.msra.mxu0 %v229
    %241 = vmatprep.subr.mxu0 0.0
    %242 = vmatpush1.msra.mxu0 %v228
    %243 = vmatprep.subr.mxu0 0.0
    %244 = vmatpush1.msra.mxu0 %v227
    %245 = vmatprep.subr.mxu0 0.0
    %246 = vmatpush1.msra.mxu0 %v226
    %247 = vmatprep.subr.mxu0 0.0
    %248 = vmatpush1.msra.mxu0 %v225
    %249 = vmatprep.subr.mxu0 0.0
    %250 = vmatpush1.msra.mxu0 %v224
    %251 = vmatprep.subr.mxu0 0.0
    %252 = vmatpush1.msra.mxu0 %v223
    %253 = vmatprep.subr.mxu0 0.0
    %254 = vmatpush1.msra.mxu0 %v222
    %255 = vmatprep.subr.mxu0 0.0
    %256 = vmatpush1.msra.mxu0 %v221
    %257 = vmatprep.subr.mxu0 0.0
    %258 = vmatpush1.msra.mxu0 %v220
    %259 = vmatprep.subr.mxu0 0.0
    %260 = vmatpush1.msra.mxu0 %v219
    %261 = vmatprep.subr.mxu0 0.0
    %262 = vmatpush1.msra.mxu0 %v218
    %263 = vmatprep.subr.mxu0 0.0
    %264 = vmatpush1.msra.mxu0 %v217
    %265 = vmatprep.subr.mxu0 0.0
    %266 = vmatpush2.msra.mxu0 0.0
    %267 = vmatprep.subr.mxu0 0.0
    %268 = vmatpush2.msra.mxu0 0.0
    %269 = vmatprep.subr.mxu0 0.0
    %270 = vmatpush2.msra.mxu0 0.0
    %271 = vmatprep.subr.mxu0 0.0
    %272 = vmatpush2.msra.mxu0 0.0
    %273 = vmatprep.subr.mxu0 0.0
    %274 = vmatpush2.msra.mxu0 0.0
    %275 = vmatprep.subr.mxu0 0.0
    %276 = vmatpush2.msra.mxu0 0.0
    %277 = vmatprep.subr.mxu0 0.0
    %278 = vmatpush2.msra.mxu0 0.0
    %279 = vmatprep.subr.mxu0 0.0
    %280 = vmatpush2.msra.mxu0 0.0
    %281 = vmatprep.subr.mxu0 0.0
    %282 = vmatpush2.msra.mxu0 0.0
    %283 = vmatprep.subr.mxu0 0.0
    %284 = vmatpush2.msra.mxu0 0.0
    %285 = vmatprep.subr.mxu0 0.0
    %286 = vmatpush2.msra.mxu0 0.0
    %287 = vmatprep.subr.mxu0 0.0
    %288 = vmatpush2.msra.mxu0 0.0
    %289 = vmatprep.subr.mxu0 0.0
    %290 = vmatpush2.msra.mxu0 0.0
    %291 = vmatprep.subr.mxu0 0.0
    %292 = vmatpush2.msra.mxu0 0.0
    %293 = vmatprep.subr.mxu0 0.0
    %294 = vmatpush2.msra.mxu0 0.0
    %295 = vmatprep.subr.mxu0 0.0
    %296 = vmatpush2.msra.mxu0 0.0
    %297 = vmatprep.mubr.f32.mxu0 0.0
    %298 = vmatmul.mubr.f32.gmra.mxu0 %v127
    %v299 = vpop.f32.mrf.mxu0
    %v300 = vadd.f32 0.0, %v299
    %v301 = vpop.f32.mrf.mxu0
    %302 = vdwg.mxu0
    %s303 = scalar_lea.vmem %s3, 16
    %v304 = vld [vmem:[%s303] sm:$0xff]
    %v305 = vld [vmem:[%s303 + $0x8] sm:$0xff]
    %vm306 = vcmask 64512
    %v308 = vsel %vm306, %v304, 0
    %v311 = vsel %vm306, %v305, 0
    %313 = vmatprep.subr.mxu0 0.0
    %314 = vmatpush1.msra.mxu0 0.0
    %315 = vmatprep.subr.mxu0 0.0
    %316 = vmatpush1.msra.mxu0 0.0
    %317 = vmatprep.subr.mxu0 0.0
    %318 = vmatpush1.msra.mxu0 0.0
    %319 = vmatprep.subr.mxu0 0.0
    %320 = vmatpush1.msra.mxu0 0.0
    %321 = vmatprep.subr.mxu0 0.0
    %322 = vmatpush1.msra.mxu0 0.0
    %323 = vmatprep.subr.mxu0 0.0
    %324 = vmatpush1.msra.mxu0 0.0
    %325 = vmatprep.subr.mxu0 0.0
    %326 = vmatpush1.msra.mxu0 0.0
    %327 = vmatprep.subr.mxu0 0.0
    %328 = vmatpush1.msra.mxu0 0.0
    %329 = vmatprep.subr.mxu0 0.0
    %330 = vmatpush1.msra.mxu0 0.0
    %331 = vmatprep.subr.mxu0 0.0
    %332 = vmatpush1.msra.mxu0 0.0
    %333 = vmatprep.subr.mxu0 0.0
    %334 = vmatpush1.msra.mxu0 0.0
    %335 = vmatprep.subr.mxu0 0.0
    %336 = vmatpush1.msra.mxu0 0.0
    %337 = vmatprep.subr.mxu0 0.0
    %338 = vmatpush1.msra.mxu0 0.0
    %339 = vmatprep.subr.mxu0 0.0
    %340 = vmatpush1.msra.mxu0 0.0
    %341 = vmatprep.subr.mxu0 0.0
    %342 = vmatpush1.msra.mxu0 0.0
    %343 = vmatprep.subr.mxu0 0.0
    %344 = vmatpush1.msra.mxu0 %v300
    %345 = vmatprep.subr.mxu0 0.0
    %346 = vmatpush2.msra.mxu0 0.0
    %347 = vmatprep.subr.mxu0 0.0
    %348 = vmatpush2.msra.mxu0 0.0
    %349 = vmatprep.subr.mxu0 0.0
    %350 = vmatpush2.msra.mxu0 0.0
    %351 = vmatprep.subr.mxu0 0.0
    %352 = vmatpush2.msra.mxu0 0.0
    %353 = vmatprep.subr.mxu0 0.0
    %354 = vmatpush2.msra.mxu0 0.0
    %355 = vmatprep.subr.mxu0 0.0
    %356 = vmatpush2.msra.mxu0 0.0
    %357 = vmatprep.subr.mxu0 0.0
    %358 = vmatpush2.msra.mxu0 0.0
    %359 = vmatprep.subr.mxu0 0.0
    %360 = vmatpush2.msra.mxu0 0.0
    %361 = vmatprep.subr.mxu0 0.0
    %362 = vmatpush2.msra.mxu0 0.0
    %363 = vmatprep.subr.mxu0 0.0
    %364 = vmatpush2.msra.mxu0 0.0
    %365 = vmatprep.subr.mxu0 0.0
    %366 = vmatpush2.msra.mxu0 0.0
    %367 = vmatprep.subr.mxu0 0.0
    %368 = vmatpush2.msra.mxu0 0.0
    %369 = vmatprep.subr.mxu0 0.0
    %370 = vmatpush2.msra.mxu0 0.0
    %371 = vmatprep.subr.mxu0 0.0
    %372 = vmatpush2.msra.mxu0 0.0
    %373 = vmatprep.subr.mxu0 0.0
    %374 = vmatpush2.msra.mxu0 0.0
    %375 = vmatprep.subr.mxu0 0.0
    %376 = vmatpush2.msra.mxu0 0.0
    %377 = vmatprep.mubr.f32.mxu0 0.0
    %378 = vmatmul.mubr.f32.gmra.mxu0 %v308
    %v379 = vpop.f32.mrf.mxu0
    %v380 = vadd.f32 0.0, %v379
    %v381 = vpop.f32.mrf.mxu0
    %382 = vmatprep.mubr.f32.mxu0 0.0
    %383 = vmatmul.mubr.f32.gmra.mxu0 %v311
    %v384 = vpop.f32.mrf.mxu0
    %v385 = vadd.f32 0.0, %v384
    %v386 = vpop.f32.mrf.mxu0
    %387 = vdwg.mxu0
    %v389 = vsel %vm306, %v214, 0
    %v392 = vsel %vm306, %v215, 0
    %394 = vmatprep.subr.mxu0 0.0
    %395 = vmatpush1.msra.mxu0 0.0
    %396 = vmatprep.subr.mxu0 0.0
    %397 = vmatpush1.msra.mxu0 0.0
    %398 = vmatprep.subr.mxu0 0.0
    %399 = vmatpush1.msra.mxu0 0.0
    %400 = vmatprep.subr.mxu0 0.0
    %401 = vmatpush1.msra.mxu0 0.0
    %402 = vmatprep.subr.mxu0 0.0
    %403 = vmatpush1.msra.mxu0 0.0
    %404 = vmatprep.subr.mxu0 0.0
    %405 = vmatpush1.msra.mxu0 0.0
    %406 = vmatprep.subr.mxu0 0.0
    %407 = vmatpush1.msra.mxu0 0.0
    %408 = vmatprep.subr.mxu0 0.0
    %409 = vmatpush1.msra.mxu0 0.0
    %410 = vmatprep.subr.mxu0 0.0
    %411 = vmatpush1.msra.mxu0 0.0
    %412 = vmatprep.subr.mxu0 0.0
    %413 = vmatpush1.msra.mxu0 0.0
    %414 = vmatprep.subr.mxu0 0.0
    %415 = vmatpush1.msra.mxu0 0.0
    %416 = vmatprep.subr.mxu0 0.0
    %417 = vmatpush1.msra.mxu0 0.0
    %418 = vmatprep.subr.mxu0 0.0
    %419 = vmatpush1.msra.mxu0 0.0
    %420 = vmatprep.subr.mxu0 0.0
    %421 = vmatpush1.msra.mxu0 0.0
    %422 = vmatprep.subr.mxu0 0.0
    %423 = vmatpush1.msra.mxu0 0.0
    %424 = vmatprep.subr.mxu0 0.0
    %425 = vmatpush1.msra.mxu0 %v211
    %426 = vmatprep.subr.mxu0 0.0
    %427 = vmatpush2.msra.mxu0 0.0
    %428 = vmatprep.subr.mxu0 0.0
    %429 = vmatpush2.msra.mxu0 0.0
    %430 = vmatprep.subr.mxu0 0.0
    %431 = vmatpush2.msra.mxu0 0.0
    %432 = vmatprep.subr.mxu0 0.0
    %433 = vmatpush2.msra.mxu0 0.0
    %434 = vmatprep.subr.mxu0 0.0
    %435 = vmatpush2.msra.mxu0 0.0
    %436 = vmatprep.subr.mxu0 0.0
    %437 = vmatpush2.msra.mxu0 0.0
    %438 = vmatprep.subr.mxu0 0.0
    %439 = vmatpush2.msra.mxu0 0.0
    %440 = vmatprep.subr.mxu0 0.0
    %441 = vmatpush2.msra.mxu0 0.0
    %442 = vmatprep.subr.mxu0 0.0
    %443 = vmatpush2.msra.mxu0 0.0
    %444 = vmatprep.subr.mxu0 0.0
    %445 = vmatpush2.msra.mxu0 0.0
    %446 = vmatprep.subr.mxu0 0.0
    %447 = vmatpush2.msra.mxu0 0.0
    %448 = vmatprep.subr.mxu0 0.0
    %449 = vmatpush2.msra.mxu0 0.0
    %450 = vmatprep.subr.mxu0 0.0
    %451 = vmatpush2.msra.mxu0 0.0
    %452 = vmatprep.subr.mxu0 0.0
    %453 = vmatpush2.msra.mxu0 0.0
    %454 = vmatprep.subr.mxu0 0.0
    %455 = vmatpush2.msra.mxu0 0.0
    %456 = vmatprep.subr.mxu0 0.0
    %457 = vmatpush2.msra.mxu0 0.0
    %458 = vmatprep.mubr.f32.mxu0 0.0
    %459 = vmatmul.mubr.f32.gmra.mxu0 %v389
    %v460 = vpop.f32.mrf.mxu0
    %v461 = vadd.f32 %v380, %v460
    %v462 = vpop.f32.mrf.mxu0
    %463 = vmatprep.mubr.f32.mxu0 0.0
    %464 = vmatmul.mubr.f32.gmra.mxu0 %v392
    %v465 = vpop.f32.mrf.mxu0
    %v466 = vadd.f32 %v385, %v465
    %v467 = vpop.f32.mrf.mxu0
    %468 = vdwg.mxu0
    %s469 = scalar_lea.vmem %s4, 256
    %v470 = vld [vmem:[%s469] sm:$0xff]
    %v471 = vld [vmem:[%s469 + $0x8] sm:$0xff]
    %v472 = vld [vmem:[%s469 + $0x10] sm:$0xff]
    %v473 = vld [vmem:[%s469 + $0x18] sm:$0xff]
    %v474 = vld [vmem:[%s469 + $0x20] sm:$0xff]
    %v475 = vld [vmem:[%s469 + $0x28] sm:$0xff]
    %v476 = vld [vmem:[%s469 + $0x30] sm:$0xff]
    %v477 = vld [vmem:[%s469 + $0x38] sm:$0xff]
    %v478 = vld [vmem:[%s469 + $0x40] sm:$0xff]
    %v479 = vld [vmem:[%s469 + $0x48] sm:$0xff]
    %v480 = vld [vmem:[%s469 + $0x50] sm:$0xff]
    %v481 = vld [vmem:[%s469 + $0x58] sm:$0xff]
    %v482 = vld [vmem:[%s469 + $0x60] sm:$0xff]
    %v483 = vld [vmem:[%s469 + $0x68] sm:$0xff]
    %v484 = vld [vmem:[%s469 + $0x70] sm:$0xff]
    %v485 = vld [vmem:[%s469 + $0x78] sm:$0xff]
    %486 = vmatprep.subr.mxu0 0.0
    %487 = vmatpush1.msra.mxu0 %v485
    %488 = vmatprep.subr.mxu0 0.0
    %489 = vmatpush1.msra.mxu0 %v484
    %490 = vmatprep.subr.mxu0 0.0
    %491 = vmatpush1.msra.mxu0 %v483
    %492 = vmatprep.subr.mxu0 0.0
    %493 = vmatpush1.msra.mxu0 %v482
    %494 = vmatprep.subr.mxu0 0.0
    %495 = vmatpush1.msra.mxu0 %v481
    %496 = vmatprep.subr.mxu0 0.0
    %497 = vmatpush1.msra.mxu0 %v480
    %498 = vmatprep.subr.mxu0 0.0
    %499 = vmatpush1.msra.mxu0 %v479
    %500 = vmatprep.subr.mxu0 0.0
    %501 = vmatpush1.msra.mxu0 %v478
    %502 = vmatprep.subr.mxu0 0.0
    %503 = vmatpush1.msra.mxu0 %v477
    %504 = vmatprep.subr.mxu0 0.0
    %505 = vmatpush1.msra.mxu0 %v476
    %506 = vmatprep.subr.mxu0 0.0
    %507 = vmatpush1.msra.mxu0 %v475
    %508 = vmatprep.subr.mxu0 0.0
    %509 = vmatpush1.msra.mxu0 %v474
    %510 = vmatprep.subr.mxu0 0.0
    %511 = vmatpush1.msra.mxu0 %v473
    %512 = vmatprep.subr.mxu0 0.0
    %513 = vmatpush1.msra.mxu0 %v472
    %514 = vmatprep.subr.mxu0 0.0
    %515 = vmatpush1.msra.mxu0 %v471
    %516 = vmatprep.subr.mxu0 0.0
    %517 = vmatpush1.msra.mxu0 %v470
    %518 = vmatprep.subr.mxu0 0.0
    %519 = vmatpush2.msra.mxu0 0.0
    %520 = vmatprep.subr.mxu0 0.0
    %521 = vmatpush2.msra.mxu0 0.0
    %522 = vmatprep.subr.mxu0 0.0
    %523 = vmatpush2.msra.mxu0 0.0
    %524 = vmatprep.subr.mxu0 0.0
    %525 = vmatpush2.msra.mxu0 0.0
    %526 = vmatprep.subr.mxu0 0.0
    %527 = vmatpush2.msra.mxu0 0.0
    %528 = vmatprep.subr.mxu0 0.0
    %529 = vmatpush2.msra.mxu0 0.0
    %530 = vmatprep.subr.mxu0 0.0
    %531 = vmatpush2.msra.mxu0 0.0
    %532 = vmatprep.subr.mxu0 0.0
    %533 = vmatpush2.msra.mxu0 0.0
    %534 = vmatprep.subr.mxu0 0.0
    %535 = vmatpush2.msra.mxu0 0.0
    %536 = vmatprep.subr.mxu0 0.0
    %537 = vmatpush2.msra.mxu0 0.0
    %538 = vmatprep.subr.mxu0 0.0
    %539 = vmatpush2.msra.mxu0 0.0
    %540 = vmatprep.subr.mxu0 0.0
    %541 = vmatpush2.msra.mxu0 0.0
    %542 = vmatprep.subr.mxu0 0.0
    %543 = vmatpush2.msra.mxu0 0.0
    %544 = vmatprep.subr.mxu0 0.0
    %545 = vmatpush2.msra.mxu0 0.0
    %546 = vmatprep.subr.mxu0 0.0
    %547 = vmatpush2.msra.mxu0 0.0
    %548 = vmatprep.subr.mxu0 0.0
    %549 = vmatpush2.msra.mxu0 0.0
    %550 = vmatprep.mubr.f32.mxu0 0.0
    %551 = vmatmul.mubr.f32.gmra.mxu0 %v127
    %v552 = vpop.f32.mrf.mxu0
    %v553 = vadd.f32 0.0, %v552
    %v554 = vpop.f32.mrf.mxu0
    %555 = vdwg.mxu0
    %s556 = scalar_lea.vmem %s3, 32
    %v557 = vld [vmem:[%s556] sm:$0xff]
    %v558 = vld [vmem:[%s556 + $0x8] sm:$0xff]
    %v560 = vsel %vm306, %v557, 0
    %v563 = vsel %vm306, %v558, 0
    %565 = vmatprep.subr.mxu0 0.0
    %566 = vmatpush1.msra.mxu0 0.0
    %567 = vmatprep.subr.mxu0 0.0
    %568 = vmatpush1.msra.mxu0 0.0
    %569 = vmatprep.subr.mxu0 0.0
    %570 = vmatpush1.msra.mxu0 0.0
    %571 = vmatprep.subr.mxu0 0.0
    %572 = vmatpush1.msra.mxu0 0.0
    %573 = vmatprep.subr.mxu0 0.0
    %574 = vmatpush1.msra.mxu0 0.0
    %575 = vmatprep.subr.mxu0 0.0
    %576 = vmatpush1.msra.mxu0 0.0
    %577 = vmatprep.subr.mxu0 0.0
    %578 = vmatpush1.msra.mxu0 0.0
    %579 = vmatprep.subr.mxu0 0.0
    %580 = vmatpush1.msra.mxu0 0.0
    %581 = vmatprep.subr.mxu0 0.0
    %582 = vmatpush1.msra.mxu0 0.0
    %583 = vmatprep.subr.mxu0 0.0
    %584 = vmatpush1.msra.mxu0 0.0
    %585 = vmatprep.subr.mxu0 0.0
    %586 = vmatpush1.msra.mxu0 0.0
    %587 = vmatprep.subr.mxu0 0.0
    %588 = vmatpush1.msra.mxu0 0.0
    %589 = vmatprep.subr.mxu0 0.0
    %590 = vmatpush1.msra.mxu0 0.0
    %591 = vmatprep.subr.mxu0 0.0
    %592 = vmatpush1.msra.mxu0 0.0
    %593 = vmatprep.subr.mxu0 0.0
    %594 = vmatpush1.msra.mxu0 0.0
    %595 = vmatprep.subr.mxu0 0.0
    %596 = vmatpush1.msra.mxu0 %v553
    %597 = vmatprep.subr.mxu0 0.0
    %598 = vmatpush2.msra.mxu0 0.0
    %599 = vmatprep.subr.mxu0 0.0
    %600 = vmatpush2.msra.mxu0 0.0
    %601 = vmatprep.subr.mxu0 0.0
    %602 = vmatpush2.msra.mxu0 0.0
    %603 = vmatprep.subr.mxu0 0.0
    %604 = vmatpush2.msra.mxu0 0.0
    %605 = vmatprep.subr.mxu0 0.0
    %606 = vmatpush2.msra.mxu0 0.0
    %607 = vmatprep.subr.mxu0 0.0
    %608 = vmatpush2.msra.mxu0 0.0
    %609 = vmatprep.subr.mxu0 0.0
    %610 = vmatpush2.msra.mxu0 0.0
    %611 = vmatprep.subr.mxu0 0.0
    %612 = vmatpush2.msra.mxu0 0.0
    %613 = vmatprep.subr.mxu0 0.0
    %614 = vmatpush2.msra.mxu0 0.0
    %615 = vmatprep.subr.mxu0 0.0
    %616 = vmatpush2.msra.mxu0 0.0
    %617 = vmatprep.subr.mxu0 0.0
    %618 = vmatpush2.msra.mxu0 0.0
    %619 = vmatprep.subr.mxu0 0.0
    %620 = vmatpush2.msra.mxu0 0.0
    %621 = vmatprep.subr.mxu0 0.0
    %622 = vmatpush2.msra.mxu0 0.0
    %623 = vmatprep.subr.mxu0 0.0
    %624 = vmatpush2.msra.mxu0 0.0
    %625 = vmatprep.subr.mxu0 0.0
    %626 = vmatpush2.msra.mxu0 0.0
    %627 = vmatprep.subr.mxu0 0.0
    %628 = vmatpush2.msra.mxu0 0.0
    %629 = vmatprep.mubr.f32.mxu0 0.0
    %630 = vmatmul.mubr.f32.gmra.mxu0 %v560
    %v631 = vpop.f32.mrf.mxu0
    %v632 = vadd.f32 0.0, %v631
    %v633 = vpop.f32.mrf.mxu0
    %634 = vmatprep.mubr.f32.mxu0 0.0
    %635 = vmatmul.mubr.f32.gmra.mxu0 %v563
    %v636 = vpop.f32.mrf.mxu0
    %v637 = vadd.f32 0.0, %v636
    %v638 = vpop.f32.mrf.mxu0
    %639 = vdwg.mxu0
    %v640 = vadd.f32 %v461, %v632
    %v641 = vadd.f32 %v466, %v637
    %s642 = scalar_lea.vmem %s4, 384
    %v643 = vld [vmem:[%s642] sm:$0xff]
    %v644 = vld [vmem:[%s642 + $0x8] sm:$0xff]
    %v645 = vld [vmem:[%s642 + $0x10] sm:$0xff]
    %v646 = vld [vmem:[%s642 + $0x18] sm:$0xff]
    %v647 = vld [vmem:[%s642 + $0x20] sm:$0xff]
    %v648 = vld [vmem:[%s642 + $0x28] sm:$0xff]
    %v649 = vld [vmem:[%s642 + $0x30] sm:$0xff]
    %v650 = vld [vmem:[%s642 + $0x38] sm:$0xff]
    %v651 = vld [vmem:[%s642 + $0x40] sm:$0xff]
    %v652 = vld [vmem:[%s642 + $0x48] sm:$0xff]
    %v653 = vld [vmem:[%s642 + $0x50] sm:$0xff]
    %v654 = vld [vmem:[%s642 + $0x58] sm:$0xff]
    %v655 = vld [vmem:[%s642 + $0x60] sm:$0xff]
    %v656 = vld [vmem:[%s642 + $0x68] sm:$0xff]
    %v657 = vld [vmem:[%s642 + $0x70] sm:$0xff]
    %v658 = vld [vmem:[%s642 + $0x78] sm:$0xff]
    %659 = vmatprep.subr.mxu0 0.0
    %660 = vmatpush1.msra.mxu0 %v658
    %661 = vmatprep.subr.mxu0 0.0
    %662 = vmatpush1.msra.mxu0 %v657
    %663 = vmatprep.subr.mxu0 0.0
    %664 = vmatpush1.msra.mxu0 %v656
    %665 = vmatprep.subr.mxu0 0.0
    %666 = vmatpush1.msra.mxu0 %v655
    %667 = vmatprep.subr.mxu0 0.0
    %668 = vmatpush1.msra.mxu0 %v654
    %669 = vmatprep.subr.mxu0 0.0
    %670 = vmatpush1.msra.mxu0 %v653
    %671 = vmatprep.subr.mxu0 0.0
    %672 = vmatpush1.msra.mxu0 %v652
    %673 = vmatprep.subr.mxu0 0.0
    %674 = vmatpush1.msra.mxu0 %v651
    %675 = vmatprep.subr.mxu0 0.0
    %676 = vmatpush1.msra.mxu0 %v650
    %677 = vmatprep.subr.mxu0 0.0
    %678 = vmatpush1.msra.mxu0 %v649
    %679 = vmatprep.subr.mxu0 0.0
    %680 = vmatpush1.msra.mxu0 %v648
    %681 = vmatprep.subr.mxu0 0.0
    %682 = vmatpush1.msra.mxu0 %v647
    %683 = vmatprep.subr.mxu0 0.0
    %684 = vmatpush1.msra.mxu0 %v646
    %685 = vmatprep.subr.mxu0 0.0
    %686 = vmatpush1.msra.mxu0 %v645
    %687 = vmatprep.subr.mxu0 0.0
    %688 = vmatpush1.msra.mxu0 %v644
    %689 = vmatprep.subr.mxu0 0.0
    %690 = vmatpush1.msra.mxu0 %v643
    %691 = vmatprep.subr.mxu0 0.0
    %692 = vmatpush2.msra.mxu0 0.0
    %693 = vmatprep.subr.mxu0 0.0
    %694 = vmatpush2.msra.mxu0 0.0
    %695 = vmatprep.subr.mxu0 0.0
    %696 = vmatpush2.msra.mxu0 0.0
    %697 = vmatprep.subr.mxu0 0.0
    %698 = vmatpush2.msra.mxu0 0.0
    %699 = vmatprep.subr.mxu0 0.0
    %700 = vmatpush2.msra.mxu0 0.0
    %701 = vmatprep.subr.mxu0 0.0
    %702 = vmatpush2.msra.mxu0 0.0
    %703 = vmatprep.subr.mxu0 0.0
    %704 = vmatpush2.msra.mxu0 0.0
    %705 = vmatprep.subr.mxu0 0.0
    %706 = vmatpush2.msra.mxu0 0.0
    %707 = vmatprep.subr.mxu0 0.0
    %708 = vmatpush2.msra.mxu0 0.0
    %709 = vmatprep.subr.mxu0 0.0
    %710 = vmatpush2.msra.mxu0 0.0
    %711 = vmatprep.subr.mxu0 0.0
    %712 = vmatpush2.msra.mxu0 0.0
    %713 = vmatprep.subr.mxu0 0.0
    %714 = vmatpush2.msra.mxu0 0.0
    %715 = vmatprep.subr.mxu0 0.0
    %716 = vmatpush2.msra.mxu0 0.0
    %717 = vmatprep.subr.mxu0 0.0
    %718 = vmatpush2.msra.mxu0 0.0
    %719 = vmatprep.subr.mxu0 0.0
    %720 = vmatpush2.msra.mxu0 0.0
    %721 = vmatprep.subr.mxu0 0.0
    %722 = vmatpush2.msra.mxu0 0.0
    %723 = vmatprep.mubr.f32.mxu0 0.0
    %724 = vmatmul.mubr.f32.gmra.mxu0 %v127
    %v725 = vpop.f32.mrf.mxu0
    %v726 = vadd.f32 0.0, %v725
    %v727 = vpop.f32.mrf.mxu0
    %728 = vdwg.mxu0
    %s729 = scalar_lea.vmem %s3, 48
    %v730 = vld [vmem:[%s729] sm:$0xff]
    %v731 = vld [vmem:[%s729 + $0x8] sm:$0xff]
    %v733 = vsel %vm306, %v730, 0
    %v736 = vsel %vm306, %v731, 0
    %738 = vmatprep.subr.mxu0 0.0
    %739 = vmatpush1.msra.mxu0 0.0
    %740 = vmatprep.subr.mxu0 0.0
    %741 = vmatpush1.msra.mxu0 0.0
    %742 = vmatprep.subr.mxu0 0.0
    %743 = vmatpush1.msra.mxu0 0.0
    %744 = vmatprep.subr.mxu0 0.0
    %745 = vmatpush1.msra.mxu0 0.0
    %746 = vmatprep.subr.mxu0 0.0
    %747 = vmatpush1.msra.mxu0 0.0
    %748 = vmatprep.subr.mxu0 0.0
    %749 = vmatpush1.msra.mxu0 0.0
    %750 = vmatprep.subr.mxu0 0.0
    %751 = vmatpush1.msra.mxu0 0.0
    %752 = vmatprep.subr.mxu0 0.0
    %753 = vmatpush1.msra.mxu0 0.0
    %754 = vmatprep.subr.mxu0 0.0
    %755 = vmatpush1.msra.mxu0 0.0
    %756 = vmatprep.subr.mxu0 0.0
    %757 = vmatpush1.msra.mxu0 0.0
    %758 = vmatprep.subr.mxu0 0.0
    %759 = vmatpush1.msra.mxu0 0.0
    %760 = vmatprep.subr.mxu0 0.0
    %761 = vmatpush1.msra.mxu0 0.0
    %762 = vmatprep.subr.mxu0 0.0
    %763 = vmatpush1.msra.mxu0 0.0
    %764 = vmatprep.subr.mxu0 0.0
    %765 = vmatpush1.msra.mxu0 0.0
    %766 = vmatprep.subr.mxu0 0.0
    %767 = vmatpush1.msra.mxu0 0.0
    %768 = vmatprep.subr.mxu0 0.0
    %769 = vmatpush1.msra.mxu0 %v726
    %770 = vmatprep.subr.mxu0 0.0
    %771 = vmatpush2.msra.mxu0 0.0
    %772 = vmatprep.subr.mxu0 0.0
    %773 = vmatpush2.msra.mxu0 0.0
    %774 = vmatprep.subr.mxu0 0.0
    %775 = vmatpush2.msra.mxu0 0.0
    %776 = vmatprep.subr.mxu0 0.0
    %777 = vmatpush2.msra.mxu0 0.0
    %778 = vmatprep.subr.mxu0 0.0
    %779 = vmatpush2.msra.mxu0 0.0
    %780 = vmatprep.subr.mxu0 0.0
    %781 = vmatpush2.msra.mxu0 0.0
    %782 = vmatprep.subr.mxu0 0.0
    %783 = vmatpush2.msra.mxu0 0.0
    %784 = vmatprep.subr.mxu0 0.0
    %785 = vmatpush2.msra.mxu0 0.0
    %786 = vmatprep.subr.mxu0 0.0
    %787 = vmatpush2.msra.mxu0 0.0
    %788 = vmatprep.subr.mxu0 0.0
    %789 = vmatpush2.msra.mxu0 0.0
    %790 = vmatprep.subr.mxu0 0.0
    %791 = vmatpush2.msra.mxu0 0.0
    %792 = vmatprep.subr.mxu0 0.0
    %793 = vmatpush2.msra.mxu0 0.0
    %794 = vmatprep.subr.mxu0 0.0
    %795 = vmatpush2.msra.mxu0 0.0
    %796 = vmatprep.subr.mxu0 0.0
    %797 = vmatpush2.msra.mxu0 0.0
    %798 = vmatprep.subr.mxu0 0.0
    %799 = vmatpush2.msra.mxu0 0.0
    %800 = vmatprep.subr.mxu0 0.0
    %801 = vmatpush2.msra.mxu0 0.0
    %802 = vmatprep.mubr.f32.mxu0 0.0
    %803 = vmatmul.mubr.f32.gmra.mxu0 %v733
    %v804 = vpop.f32.mrf.mxu0
    %v805 = vadd.f32 0.0, %v804
    %v806 = vpop.f32.mrf.mxu0
    %807 = vmatprep.mubr.f32.mxu0 0.0
    %808 = vmatmul.mubr.f32.gmra.mxu0 %v736
    %v809 = vpop.f32.mrf.mxu0
    %v810 = vadd.f32 0.0, %v809
    %v811 = vpop.f32.mrf.mxu0
    %812 = vdwg.mxu0
    %v813 = vadd.f32 %v640, %v805
    %v814 = vadd.f32 %v641, %v810
    %s815 = scalar_lea.vmem %s4, 512
    %v816 = vld [vmem:[%s815] sm:$0xff]
    %v817 = vld [vmem:[%s815 + $0x8] sm:$0xff]
    %v818 = vld [vmem:[%s815 + $0x10] sm:$0xff]
    %v819 = vld [vmem:[%s815 + $0x18] sm:$0xff]
    %v820 = vld [vmem:[%s815 + $0x20] sm:$0xff]
    %v821 = vld [vmem:[%s815 + $0x28] sm:$0xff]
    %v822 = vld [vmem:[%s815 + $0x30] sm:$0xff]
    %v823 = vld [vmem:[%s815 + $0x38] sm:$0xff]
    %v824 = vld [vmem:[%s815 + $0x40] sm:$0xff]
    %v825 = vld [vmem:[%s815 + $0x48] sm:$0xff]
    %v826 = vld [vmem:[%s815 + $0x50] sm:$0xff]
    %v827 = vld [vmem:[%s815 + $0x58] sm:$0xff]
    %v828 = vld [vmem:[%s815 + $0x60] sm:$0xff]
    %v829 = vld [vmem:[%s815 + $0x68] sm:$0xff]
    %v830 = vld [vmem:[%s815 + $0x70] sm:$0xff]
    %v831 = vld [vmem:[%s815 + $0x78] sm:$0xff]
    %832 = vmatprep.subr.mxu0 0.0
    %833 = vmatpush1.msra.mxu0 %v831
    %834 = vmatprep.subr.mxu0 0.0
    %835 = vmatpush1.msra.mxu0 %v830
    %836 = vmatprep.subr.mxu0 0.0
    %837 = vmatpush1.msra.mxu0 %v829
    %838 = vmatprep.subr.mxu0 0.0
    %839 = vmatpush1.msra.mxu0 %v828
    %840 = vmatprep.subr.mxu0 0.0
    %841 = vmatpush1.msra.mxu0 %v827
    %842 = vmatprep.subr.mxu0 0.0
    %843 = vmatpush1.msra.mxu0 %v826
    %844 = vmatprep.subr.mxu0 0.0
    %845 = vmatpush1.msra.mxu0 %v825
    %846 = vmatprep.subr.mxu0 0.0
    %847 = vmatpush1.msra.mxu0 %v824
    %848 = vmatprep.subr.mxu0 0.0
    %849 = vmatpush1.msra.mxu0 %v823
    %850 = vmatprep.subr.mxu0 0.0
    %851 = vmatpush1.msra.mxu0 %v822
    %852 = vmatprep.subr.mxu0 0.0
    %853 = vmatpush1.msra.mxu0 %v821
    %854 = vmatprep.subr.mxu0 0.0
    %855 = vmatpush1.msra.mxu0 %v820
    %856 = vmatprep.subr.mxu0 0.0
    %857 = vmatpush1.msra.mxu0 %v819
    %858 = vmatprep.subr.mxu0 0.0
    %859 = vmatpush1.msra.mxu0 %v818
    %860 = vmatprep.subr.mxu0 0.0
    %861 = vmatpush1.msra.mxu0 %v817
    %862 = vmatprep.subr.mxu0 0.0
    %863 = vmatpush1.msra.mxu0 %v816
    %864 = vmatprep.subr.mxu0 0.0
    %865 = vmatpush2.msra.mxu0 0.0
    %866 = vmatprep.subr.mxu0 0.0
    %867 = vmatpush2.msra.mxu0 0.0
    %868 = vmatprep.subr.mxu0 0.0
    %869 = vmatpush2.msra.mxu0 0.0
    %870 = vmatprep.subr.mxu0 0.0
    %871 = vmatpush2.msra.mxu0 0.0
    %872 = vmatprep.subr.mxu0 0.0
    %873 = vmatpush2.msra.mxu0 0.0
    %874 = vmatprep.subr.mxu0 0.0
    %875 = vmatpush2.msra.mxu0 0.0
    %876 = vmatprep.subr.mxu0 0.0
    %877 = vmatpush2.msra.mxu0 0.0
    %878 = vmatprep.subr.mxu0 0.0
    %879 = vmatpush2.msra.mxu0 0.0
    %880 = vmatprep.subr.mxu0 0.0
    %881 = vmatpush2.msra.mxu0 0.0
    %882 = vmatprep.subr.mxu0 0.0
    %883 = vmatpush2.msra.mxu0 0.0
    %884 = vmatprep.subr.mxu0 0.0
    %885 = vmatpush2.msra.mxu0 0.0
    %886 = vmatprep.subr.mxu0 0.0
    %887 = vmatpush2.msra.mxu0 0.0
    %888 = vmatprep.subr.mxu0 0.0
    %889 = vmatpush2.msra.mxu0 0.0
    %890 = vmatprep.subr.mxu0 0.0
    %891 = vmatpush2.msra.mxu0 0.0
    %892 = vmatprep.subr.mxu0 0.0
    %893 = vmatpush2.msra.mxu0 0.0
    %894 = vmatprep.subr.mxu0 0.0
    %895 = vmatpush2.msra.mxu0 0.0
    %896 = vmatprep.mubr.f32.mxu0 0.0
    %897 = vmatmul.mubr.f32.gmra.mxu0 %v127
    %v898 = vpop.f32.mrf.mxu0
    %v899 = vadd.f32 0.0, %v898
    %v900 = vpop.f32.mrf.mxu0
    %901 = vdwg.mxu0
    %s902 = scalar_lea.vmem %s3, 64
    %v903 = vld [vmem:[%s902] sm:$0xff]
    %v904 = vld [vmem:[%s902 + $0x8] sm:$0xff]
    %v906 = vsel %vm306, %v903, 0
    %v909 = vsel %vm306, %v904, 0
    %911 = vmatprep.subr.mxu0 0.0
    %912 = vmatpush1.msra.mxu0 0.0
    %913 = vmatprep.subr.mxu0 0.0
    %914 = vmatpush1.msra.mxu0 0.0
    %915 = vmatprep.subr.mxu0 0.0
    %916 = vmatpush1.msra.mxu0 0.0
    %917 = vmatprep.subr.mxu0 0.0
    %918 = vmatpush1.msra.mxu0 0.0
    %919 = vmatprep.subr.mxu0 0.0
    %920 = vmatpush1.msra.mxu0 0.0
    %921 = vmatprep.subr.mxu0 0.0
    %922 = vmatpush1.msra.mxu0 0.0
    %923 = vmatprep.subr.mxu0 0.0
    %924 = vmatpush1.msra.mxu0 0.0
    %925 = vmatprep.subr.mxu0 0.0
    %926 = vmatpush1.msra.mxu0 0.0
    %927 = vmatprep.subr.mxu0 0.0
    %928 = vmatpush1.msra.mxu0 0.0
    %929 = vmatprep.subr.mxu0 0.0
    %930 = vmatpush1.msra.mxu0 0.0
    %931 = vmatprep.subr.mxu0 0.0
    %932 = vmatpush1.msra.mxu0 0.0
    %933 = vmatprep.subr.mxu0 0.0
    %934 = vmatpush1.msra.mxu0 0.0
    %935 = vmatprep.subr.mxu0 0.0
    %936 = vmatpush1.msra.mxu0 0.0
    %937 = vmatprep.subr.mxu0 0.0
    %938 = vmatpush1.msra.mxu0 0.0
    %939 = vmatprep.subr.mxu0 0.0
    %940 = vmatpush1.msra.mxu0 0.0
    %941 = vmatprep.subr.mxu0 0.0
    %942 = vmatpush1.msra.mxu0 %v899
    %943 = vmatprep.subr.mxu0 0.0
    %944 = vmatpush2.msra.mxu0 0.0
    %945 = vmatprep.subr.mxu0 0.0
    %946 = vmatpush2.msra.mxu0 0.0
    %947 = vmatprep.subr.mxu0 0.0
    %948 = vmatpush2.msra.mxu0 0.0
    %949 = vmatprep.subr.mxu0 0.0
    %950 = vmatpush2.msra.mxu0 0.0
    %951 = vmatprep.subr.mxu0 0.0
    %952 = vmatpush2.msra.mxu0 0.0
    %953 = vmatprep.subr.mxu0 0.0
    %954 = vmatpush2.msra.mxu0 0.0
    %955 = vmatprep.subr.mxu0 0.0
    %956 = vmatpush2.msra.mxu0 0.0
    %957 = vmatprep.subr.mxu0 0.0
    %958 = vmatpush2.msra.mxu0 0.0
    %959 = vmatprep.subr.mxu0 0.0
    %960 = vmatpush2.msra.mxu0 0.0
    %961 = vmatprep.subr.mxu0 0.0
    %962 = vmatpush2.msra.mxu0 0.0
    %963 = vmatprep.subr.mxu0 0.0
    %964 = vmatpush2.msra.mxu0 0.0
    %965 = vmatprep.subr.mxu0 0.0
    %966 = vmatpush2.msra.mxu0 0.0
    %967 = vmatprep.subr.mxu0 0.0
    %968 = vmatpush2.msra.mxu0 0.0
    %969 = vmatprep.subr.mxu0 0.0
    %970 = vmatpush2.msra.mxu0 0.0
    %971 = vmatprep.subr.mxu0 0.0
    %972 = vmatpush2.msra.mxu0 0.0
    %973 = vmatprep.subr.mxu0 0.0
    %974 = vmatpush2.msra.mxu0 0.0
    %975 = vmatprep.mubr.f32.mxu0 0.0
    %976 = vmatmul.mubr.f32.gmra.mxu0 %v906
    %v977 = vpop.f32.mrf.mxu0
    %v978 = vadd.f32 0.0, %v977
    %v979 = vpop.f32.mrf.mxu0
    %980 = vmatprep.mubr.f32.mxu0 0.0
    %981 = vmatmul.mubr.f32.gmra.mxu0 %v909
    %v982 = vpop.f32.mrf.mxu0
    %v983 = vadd.f32 0.0, %v982
    %v984 = vpop.f32.mrf.mxu0
    %985 = vdwg.mxu0
    %v986 = vadd.f32 %v813, %v978
    %v987 = vadd.f32 %v814, %v983
    %s988 = scalar_lea.vmem %s4, 640
    %v989 = vld [vmem:[%s988] sm:$0xff]
    %v990 = vld [vmem:[%s988 + $0x8] sm:$0xff]
    %v991 = vld [vmem:[%s988 + $0x10] sm:$0xff]
    %v992 = vld [vmem:[%s988 + $0x18] sm:$0xff]
    %v993 = vld [vmem:[%s988 + $0x20] sm:$0xff]
    %v994 = vld [vmem:[%s988 + $0x28] sm:$0xff]
    %v995 = vld [vmem:[%s988 + $0x30] sm:$0xff]
    %v996 = vld [vmem:[%s988 + $0x38] sm:$0xff]
    %v997 = vld [vmem:[%s988 + $0x40] sm:$0xff]
    %v998 = vld [vmem:[%s988 + $0x48] sm:$0xff]
    %v999 = vld [vmem:[%s988 + $0x50] sm:$0xff]
    %v1000 = vld [vmem:[%s988 + $0x58] sm:$0xff]
    %v1001 = vld [vmem:[%s988 + $0x60] sm:$0xff]
    %v1002 = vld [vmem:[%s988 + $0x68] sm:$0xff]
    %v1003 = vld [vmem:[%s988 + $0x70] sm:$0xff]
    %v1004 = vld [vmem:[%s988 + $0x78] sm:$0xff]
    %1005 = vmatprep.subr.mxu0 0.0
    %1006 = vmatpush1.msra.mxu0 %v1004
    %1007 = vmatprep.subr.mxu0 0.0
    %1008 = vmatpush1.msra.mxu0 %v1003
    %1009 = vmatprep.subr.mxu0 0.0
    %1010 = vmatpush1.msra.mxu0 %v1002
    %1011 = vmatprep.subr.mxu0 0.0
    %1012 = vmatpush1.msra.mxu0 %v1001
    %1013 = vmatprep.subr.mxu0 0.0
    %1014 = vmatpush1.msra.mxu0 %v1000
    %1015 = vmatprep.subr.mxu0 0.0
    %1016 = vmatpush1.msra.mxu0 %v999
    %1017 = vmatprep.subr.mxu0 0.0
    %1018 = vmatpush1.msra.mxu0 %v998
    %1019 = vmatprep.subr.mxu0 0.0
    %1020 = vmatpush1.msra.mxu0 %v997
    %1021 = vmatprep.subr.mxu0 0.0
    %1022 = vmatpush1.msra.mxu0 %v996
    %1023 = vmatprep.subr.mxu0 0.0
    %1024 = vmatpush1.msra.mxu0 %v995
    %1025 = vmatprep.subr.mxu0 0.0
    %1026 = vmatpush1.msra.mxu0 %v994
    %1027 = vmatprep.subr.mxu0 0.0
    %1028 = vmatpush1.msra.mxu0 %v993
    %1029 = vmatprep.subr.mxu0 0.0
    %1030 = vmatpush1.msra.mxu0 %v992
    %1031 = vmatprep.subr.mxu0 0.0
    %1032 = vmatpush1.msra.mxu0 %v991
    %1033 = vmatprep.subr.mxu0 0.0
    %1034 = vmatpush1.msra.mxu0 %v990
    %1035 = vmatprep.subr.mxu0 0.0
    %1036 = vmatpush1.msra.mxu0 %v989
    %1037 = vmatprep.subr.mxu0 0.0
    %1038 = vmatpush2.msra.mxu0 0.0
    %1039 = vmatprep.subr.mxu0 0.0
    %1040 = vmatpush2.msra.mxu0 0.0
    %1041 = vmatprep.subr.mxu0 0.0
    %1042 = vmatpush2.msra.mxu0 0.0
    %1043 = vmatprep.subr.mxu0 0.0
    %1044 = vmatpush2.msra.mxu0 0.0
    %1045 = vmatprep.subr.mxu0 0.0
    %1046 = vmatpush2.msra.mxu0 0.0
    %1047 = vmatprep.subr.mxu0 0.0
    %1048 = vmatpush2.msra.mxu0 0.0
    %1049 = vmatprep.subr.mxu0 0.0
    %1050 = vmatpush2.msra.mxu0 0.0
    %1051 = vmatprep.subr.mxu0 0.0
    %1052 = vmatpush2.msra.mxu0 0.0
    %1053 = vmatprep.subr.mxu0 0.0
    %1054 = vmatpush2.msra.mxu0 0.0
    %1055 = vmatprep.subr.mxu0 0.0
    %1056 = vmatpush2.msra.mxu0 0.0
    %1057 = vmatprep.subr.mxu0 0.0
    %1058 = vmatpush2.msra.mxu0 0.0
    %1059 = vmatprep.subr.mxu0 0.0
    %1060 = vmatpush2.msra.mxu0 0.0
    %1061 = vmatprep.subr.mxu0 0.0
    %1062 = vmatpush2.msra.mxu0 0.0
    %1063 = vmatprep.subr.mxu0 0.0
    %1064 = vmatpush2.msra.mxu0 0.0
    %1065 = vmatprep.subr.mxu0 0.0
    %1066 = vmatpush2.msra.mxu0 0.0
    %1067 = vmatprep.subr.mxu0 0.0
    %1068 = vmatpush2.msra.mxu0 0.0
    %1069 = vmatprep.mubr.f32.mxu0 0.0
    %1070 = vmatmul.mubr.f32.gmra.mxu0 %v127
    %v1071 = vpop.f32.mrf.mxu0
    %v1072 = vadd.f32 0.0, %v1071
    %v1073 = vpop.f32.mrf.mxu0
    %1074 = vdwg.mxu0
    %s1075 = scalar_lea.vmem %s3, 80
    %v1076 = vld [vmem:[%s1075] sm:$0xff]
    %v1077 = vld [vmem:[%s1075 + $0x8] sm:$0xff]
    %v1079 = vsel %vm306, %v1076, 0
    %v1082 = vsel %vm306, %v1077, 0
    %1084 = vmatprep.subr.mxu0 0.0
    %1085 = vmatpush1.msra.mxu0 0.0
    %1086 = vmatprep.subr.mxu0 0.0
    %1087 = vmatpush1.msra.mxu0 0.0
    %1088 = vmatprep.subr.mxu0 0.0
    %1089 = vmatpush1.msra.mxu0 0.0
    %1090 = vmatprep.subr.mxu0 0.0
    %1091 = vmatpush1.msra.mxu0 0.0
    %1092 = vmatprep.subr.mxu0 0.0
    %1093 = vmatpush1.msra.mxu0 0.0
    %1094 = vmatprep.subr.mxu0 0.0
    %1095 = vmatpush1.msra.mxu0 0.0
    %1096 = vmatprep.subr.mxu0 0.0
    %1097 = vmatpush1.msra.mxu0 0.0
    %1098 = vmatprep.subr.mxu0 0.0
    %1099 = vmatpush1.msra.mxu0 0.0
    %1100 = vmatprep.subr.mxu0 0.0
    %1101 = vmatpush1.msra.mxu0 0.0
    %1102 = vmatprep.subr.mxu0 0.0
    %1103 = vmatpush1.msra.mxu0 0.0
    %1104 = vmatprep.subr.mxu0 0.0
    %1105 = vmatpush1.msra.mxu0 0.0
    %1106 = vmatprep.subr.mxu0 0.0
    %1107 = vmatpush1.msra.mxu0 0.0
    %1108 = vmatprep.subr.mxu0 0.0
    %1109 = vmatpush1.msra.mxu0 0.0
    %1110 = vmatprep.subr.mxu0 0.0
    %1111 = vmatpush1.msra.mxu0 0.0
    %1112 = vmatprep.subr.mxu0 0.0
    %1113 = vmatpush1.msra.mxu0 0.0
    %1114 = vmatprep.subr.mxu0 0.0
    %1115 = vmatpush1.msra.mxu0 %v1072
    %1116 = vmatprep.subr.mxu0 0.0
    %1117 = vmatpush2.msra.mxu0 0.0
    %1118 = vmatprep.subr.mxu0 0.0
    %1119 = vmatpush2.msra.mxu0 0.0
    %1120 = vmatprep.subr.mxu0 0.0
    %1121 = vmatpush2.msra.mxu0 0.0
    %1122 = vmatprep.subr.mxu0 0.0
    %1123 = vmatpush2.msra.mxu0 0.0
    %1124 = vmatprep.subr.mxu0 0.0
    %1125 = vmatpush2.msra.mxu0 0.0
    %1126 = vmatprep.subr.mxu0 0.0
    %1127 = vmatpush2.msra.mxu0 0.0
    %1128 = vmatprep.subr.mxu0 0.0
    %1129 = vmatpush2.msra.mxu0 0.0
    %1130 = vmatprep.subr.mxu0 0.0
    %1131 = vmatpush2.msra.mxu0 0.0
    %1132 = vmatprep.subr.mxu0 0.0
    %1133 = vmatpush2.msra.mxu0 0.0
    %1134 = vmatprep.subr.mxu0 0.0
    %1135 = vmatpush2.msra.mxu0 0.0
    %1136 = vmatprep.subr.mxu0 0.0
    %1137 = vmatpush2.msra.mxu0 0.0
    %1138 = vmatprep.subr.mxu0 0.0
    %1139 = vmatpush2.msra.mxu0 0.0
    %1140 = vmatprep.subr.mxu0 0.0
    %1141 = vmatpush2.msra.mxu0 0.0
    %1142 = vmatprep.subr.mxu0 0.0
    %1143 = vmatpush2.msra.mxu0 0.0
    %1144 = vmatprep.subr.mxu0 0.0
    %1145 = vmatpush2.msra.mxu0 0.0
    %1146 = vmatprep.subr.mxu0 0.0
    %1147 = vmatpush2.msra.mxu0 0.0
    %1148 = vmatprep.mubr.f32.mxu0 0.0
    %1149 = vmatmul.mubr.f32.gmra.mxu0 %v1079
    %v1150 = vpop.f32.mrf.mxu0
    %v1151 = vadd.f32 0.0, %v1150
    %v1152 = vpop.f32.mrf.mxu0
    %1153 = vmatprep.mubr.f32.mxu0 0.0
    %1154 = vmatmul.mubr.f32.gmra.mxu0 %v1082
    %v1155 = vpop.f32.mrf.mxu0
    %v1156 = vadd.f32 0.0, %v1155
    %v1157 = vpop.f32.mrf.mxu0
    %1158 = vdwg.mxu0
    %v1159 = vadd.f32 %v986, %v1151
    %v1160 = vadd.f32 %v987, %v1156
    %s1161 = scalar_lea.vmem %s4, 768
    %v1162 = vld [vmem:[%s1161] sm:$0xff]
    %v1163 = vld [vmem:[%s1161 + $0x8] sm:$0xff]
    %v1164 = vld [vmem:[%s1161 + $0x10] sm:$0xff]
    %v1165 = vld [vmem:[%s1161 + $0x18] sm:$0xff]
    %v1166 = vld [vmem:[%s1161 + $0x20] sm:$0xff]
    %v1167 = vld [vmem:[%s1161 + $0x28] sm:$0xff]
    %v1168 = vld [vmem:[%s1161 + $0x30] sm:$0xff]
    %v1169 = vld [vmem:[%s1161 + $0x38] sm:$0xff]
    %v1170 = vld [vmem:[%s1161 + $0x40] sm:$0xff]
    %v1171 = vld [vmem:[%s1161 + $0x48] sm:$0xff]
    %v1172 = vld [vmem:[%s1161 + $0x50] sm:$0xff]
    %v1173 = vld [vmem:[%s1161 + $0x58] sm:$0xff]
    %v1174 = vld [vmem:[%s1161 + $0x60] sm:$0xff]
    %v1175 = vld [vmem:[%s1161 + $0x68] sm:$0xff]
    %v1176 = vld [vmem:[%s1161 + $0x70] sm:$0xff]
    %v1177 = vld [vmem:[%s1161 + $0x78] sm:$0xff]
    %1178 = vmatprep.subr.mxu0 0.0
    %1179 = vmatpush1.msra.mxu0 %v1177
    %1180 = vmatprep.subr.mxu0 0.0
    %1181 = vmatpush1.msra.mxu0 %v1176
    %1182 = vmatprep.subr.mxu0 0.0
    %1183 = vmatpush1.msra.mxu0 %v1175
    %1184 = vmatprep.subr.mxu0 0.0
    %1185 = vmatpush1.msra.mxu0 %v1174
    %1186 = vmatprep.subr.mxu0 0.0
    %1187 = vmatpush1.msra.mxu0 %v1173
    %1188 = vmatprep.subr.mxu0 0.0
    %1189 = vmatpush1.msra.mxu0 %v1172
    %1190 = vmatprep.subr.mxu0 0.0
    %1191 = vmatpush1.msra.mxu0 %v1171
    %1192 = vmatprep.subr.mxu0 0.0
    %1193 = vmatpush1.msra.mxu0 %v1170
    %1194 = vmatprep.subr.mxu0 0.0
    %1195 = vmatpush1.msra.mxu0 %v1169
    %1196 = vmatprep.subr.mxu0 0.0
    %1197 = vmatpush1.msra.mxu0 %v1168
    %1198 = vmatprep.subr.mxu0 0.0
    %1199 = vmatpush1.msra.mxu0 %v1167
    %1200 = vmatprep.subr.mxu0 0.0
    %1201 = vmatpush1.msra.mxu0 %v1166
    %1202 = vmatprep.subr.mxu0 0.0
    %1203 = vmatpush1.msra.mxu0 %v1165
    %1204 = vmatprep.subr.mxu0 0.0
    %1205 = vmatpush1.msra.mxu0 %v1164
    %1206 = vmatprep.subr.mxu0 0.0
    %1207 = vmatpush1.msra.mxu0 %v1163
    %1208 = vmatprep.subr.mxu0 0.0
    %1209 = vmatpush1.msra.mxu0 %v1162
    %1210 = vmatprep.subr.mxu0 0.0
    %1211 = vmatpush2.msra.mxu0 0.0
    %1212 = vmatprep.subr.mxu0 0.0
    %1213 = vmatpush2.msra.mxu0 0.0
    %1214 = vmatprep.subr.mxu0 0.0
    %1215 = vmatpush2.msra.mxu0 0.0
    %1216 = vmatprep.subr.mxu0 0.0
    %1217 = vmatpush2.msra.mxu0 0.0
    %1218 = vmatprep.subr.mxu0 0.0
    %1219 = vmatpush2.msra.mxu0 0.0
    %1220 = vmatprep.subr.mxu0 0.0
    %1221 = vmatpush2.msra.mxu0 0.0
    %1222 = vmatprep.subr.mxu0 0.0
    %1223 = vmatpush2.msra.mxu0 0.0
    %1224 = vmatprep.subr.mxu0 0.0
    %1225 = vmatpush2.msra.mxu0 0.0
    %1226 = vmatprep.subr.mxu0 0.0
    %1227 = vmatpush2.msra.mxu0 0.0
    %1228 = vmatprep.subr.mxu0 0.0
    %1229 = vmatpush2.msra.mxu0 0.0
    %1230 = vmatprep.subr.mxu0 0.0
    %1231 = vmatpush2.msra.mxu0 0.0
    %1232 = vmatprep.subr.mxu0 0.0
    %1233 = vmatpush2.msra.mxu0 0.0
    %1234 = vmatprep.subr.mxu0 0.0
    %1235 = vmatpush2.msra.mxu0 0.0
    %1236 = vmatprep.subr.mxu0 0.0
    %1237 = vmatpush2.msra.mxu0 0.0
    %1238 = vmatprep.subr.mxu0 0.0
    %1239 = vmatpush2.msra.mxu0 0.0
    %1240 = vmatprep.subr.mxu0 0.0
    %1241 = vmatpush2.msra.mxu0 0.0
    %1242 = vmatprep.mubr.f32.mxu0 0.0
    %1243 = vmatmul.mubr.f32.gmra.mxu0 %v127
    %v1244 = vpop.f32.mrf.mxu0
    %v1245 = vadd.f32 0.0, %v1244
    %v1246 = vpop.f32.mrf.mxu0
    %1247 = vdwg.mxu0
    %s1248 = scalar_lea.vmem %s3, 96
    %v1249 = vld [vmem:[%s1248] sm:$0xff]
    %v1250 = vld [vmem:[%s1248 + $0x8] sm:$0xff]
    %v1252 = vsel %vm306, %v1249, 0
    %v1255 = vsel %vm306, %v1250, 0
    %1257 = vmatprep.subr.mxu0 0.0
    %1258 = vmatpush1.msra.mxu0 0.0
    %1259 = vmatprep.subr.mxu0 0.0
    %1260 = vmatpush1.msra.mxu0 0.0
    %1261 = vmatprep.subr.mxu0 0.0
    %1262 = vmatpush1.msra.mxu0 0.0
    %1263 = vmatprep.subr.mxu0 0.0
    %1264 = vmatpush1.msra.mxu0 0.0
    %1265 = vmatprep.subr.mxu0 0.0
    %1266 = vmatpush1.msra.mxu0 0.0
    %1267 = vmatprep.subr.mxu0 0.0
    %1268 = vmatpush1.msra.mxu0 0.0
    %1269 = vmatprep.subr.mxu0 0.0
    %1270 = vmatpush1.msra.mxu0 0.0
    %1271 = vmatprep.subr.mxu0 0.0
    %1272 = vmatpush1.msra.mxu0 0.0
    %1273 = vmatprep.subr.mxu0 0.0
    %1274 = vmatpush1.msra.mxu0 0.0
    %1275 = vmatprep.subr.mxu0 0.0
    %1276 = vmatpush1.msra.mxu0 0.0
    %1277 = vmatprep.subr.mxu0 0.0
    %1278 = vmatpush1.msra.mxu0 0.0
    %1279 = vmatprep.subr.mxu0 0.0
    %1280 = vmatpush1.msra.mxu0 0.0
    %1281 = vmatprep.subr.mxu0 0.0
    %1282 = vmatpush1.msra.mxu0 0.0
    %1283 = vmatprep.subr.mxu0 0.0
    %1284 = vmatpush1.msra.mxu0 0.0
    %1285 = vmatprep.subr.mxu0 0.0
    %1286 = vmatpush1.msra.mxu0 0.0
    %1287 = vmatprep.subr.mxu0 0.0
    %1288 = vmatpush1.msra.mxu0 %v1245
    %1289 = vmatprep.subr.mxu0 0.0
    %1290 = vmatpush2.msra.mxu0 0.0
    %1291 = vmatprep.subr.mxu0 0.0
    %1292 = vmatpush2.msra.mxu0 0.0
    %1293 = vmatprep.subr.mxu0 0.0
    %1294 = vmatpush2.msra.mxu0 0.0
    %1295 = vmatprep.subr.mxu0 0.0
    %1296 = vmatpush2.msra.mxu0 0.0
    %1297 = vmatprep.subr.mxu0 0.0
    %1298 = vmatpush2.msra.mxu0 0.0
    %1299 = vmatprep.subr.mxu0 0.0
    %1300 = vmatpush2.msra.mxu0 0.0
    %1301 = vmatprep.subr.mxu0 0.0
    %1302 = vmatpush2.msra.mxu0 0.0
    %1303 = vmatprep.subr.mxu0 0.0
    %1304 = vmatpush2.msra.mxu0 0.0
    %1305 = vmatprep.subr.mxu0 0.0
    %1306 = vmatpush2.msra.mxu0 0.0
    %1307 = vmatprep.subr.mxu0 0.0
    %1308 = vmatpush2.msra.mxu0 0.0
    %1309 = vmatprep.subr.mxu0 0.0
    %1310 = vmatpush2.msra.mxu0 0.0
    %1311 = vmatprep.subr.mxu0 0.0
    %1312 = vmatpush2.msra.mxu0 0.0
    %1313 = vmatprep.subr.mxu0 0.0
    %1314 = vmatpush2.msra.mxu0 0.0
    %1315 = vmatprep.subr.mxu0 0.0
    %1316 = vmatpush2.msra.mxu0 0.0
    %1317 = vmatprep.subr.mxu0 0.0
    %1318 = vmatpush2.msra.mxu0 0.0
    %1319 = vmatprep.subr.mxu0 0.0
    %1320 = vmatpush2.msra.mxu0 0.0
    %1321 = vmatprep.mubr.f32.mxu0 0.0
    %1322 = vmatmul.mubr.f32.gmra.mxu0 %v1252
    %v1323 = vpop.f32.mrf.mxu0
    %v1324 = vadd.f32 0.0, %v1323
    %v1325 = vpop.f32.mrf.mxu0
    %1326 = vmatprep.mubr.f32.mxu0 0.0
    %1327 = vmatmul.mubr.f32.gmra.mxu0 %v1255
    %v1328 = vpop.f32.mrf.mxu0
    %v1329 = vadd.f32 0.0, %v1328
    %v1330 = vpop.f32.mrf.mxu0
    %1331 = vdwg.mxu0
    %v1332 = vadd.f32 %v1159, %v1324
    %v1333 = vadd.f32 %v1160, %v1329
    %s1334 = scalar_lea.vmem %s4, 896
    %v1335 = vld [vmem:[%s1334] sm:$0xff]
    %v1336 = vld [vmem:[%s1334 + $0x8] sm:$0xff]
    %v1337 = vld [vmem:[%s1334 + $0x10] sm:$0xff]
    %v1338 = vld [vmem:[%s1334 + $0x18] sm:$0xff]
    %v1339 = vld [vmem:[%s1334 + $0x20] sm:$0xff]
    %v1340 = vld [vmem:[%s1334 + $0x28] sm:$0xff]
    %v1341 = vld [vmem:[%s1334 + $0x30] sm:$0xff]
    %v1342 = vld [vmem:[%s1334 + $0x38] sm:$0xff]
    %v1343 = vld [vmem:[%s1334 + $0x40] sm:$0xff]
    %v1344 = vld [vmem:[%s1334 + $0x48] sm:$0xff]
    %v1345 = vld [vmem:[%s1334 + $0x50] sm:$0xff]
    %v1346 = vld [vmem:[%s1334 + $0x58] sm:$0xff]
    %v1347 = vld [vmem:[%s1334 + $0x60] sm:$0xff]
    %v1348 = vld [vmem:[%s1334 + $0x68] sm:$0xff]
    %v1349 = vld [vmem:[%s1334 + $0x70] sm:$0xff]
    %v1350 = vld [vmem:[%s1334 + $0x78] sm:$0xff]
    %1351 = vmatprep.subr.mxu0 0.0
    %1352 = vmatpush1.msra.mxu0 %v1350
    %1353 = vmatprep.subr.mxu0 0.0
    %1354 = vmatpush1.msra.mxu0 %v1349
    %1355 = vmatprep.subr.mxu0 0.0
    %1356 = vmatpush1.msra.mxu0 %v1348
    %1357 = vmatprep.subr.mxu0 0.0
    %1358 = vmatpush1.msra.mxu0 %v1347
    %1359 = vmatprep.subr.mxu0 0.0
    %1360 = vmatpush1.msra.mxu0 %v1346
    %1361 = vmatprep.subr.mxu0 0.0
    %1362 = vmatpush1.msra.mxu0 %v1345
    %1363 = vmatprep.subr.mxu0 0.0
    %1364 = vmatpush1.msra.mxu0 %v1344
    %1365 = vmatprep.subr.mxu0 0.0
    %1366 = vmatpush1.msra.mxu0 %v1343
    %1367 = vmatprep.subr.mxu0 0.0
    %1368 = vmatpush1.msra.mxu0 %v1342
    %1369 = vmatprep.subr.mxu0 0.0
    %1370 = vmatpush1.msra.mxu0 %v1341
    %1371 = vmatprep.subr.mxu0 0.0
    %1372 = vmatpush1.msra.mxu0 %v1340
    %1373 = vmatprep.subr.mxu0 0.0
    %1374 = vmatpush1.msra.mxu0 %v1339
    %1375 = vmatprep.subr.mxu0 0.0
    %1376 = vmatpush1.msra.mxu0 %v1338
    %1377 = vmatprep.subr.mxu0 0.0
    %1378 = vmatpush1.msra.mxu0 %v1337
    %1379 = vmatprep.subr.mxu0 0.0
    %1380 = vmatpush1.msra.mxu0 %v1336
    %1381 = vmatprep.subr.mxu0 0.0
    %1382 = vmatpush1.msra.mxu0 %v1335
    %1383 = vmatprep.subr.mxu0 0.0
    %1384 = vmatpush2.msra.mxu0 0.0
    %1385 = vmatprep.subr.mxu0 0.0
    %1386 = vmatpush2.msra.mxu0 0.0
    %1387 = vmatprep.subr.mxu0 0.0
    %1388 = vmatpush2.msra.mxu0 0.0
    %1389 = vmatprep.subr.mxu0 0.0
    %1390 = vmatpush2.msra.mxu0 0.0
    %1391 = vmatprep.subr.mxu0 0.0
    %1392 = vmatpush2.msra.mxu0 0.0
    %1393 = vmatprep.subr.mxu0 0.0
    %1394 = vmatpush2.msra.mxu0 0.0
    %1395 = vmatprep.subr.mxu0 0.0
    %1396 = vmatpush2.msra.mxu0 0.0
    %1397 = vmatprep.subr.mxu0 0.0
    %1398 = vmatpush2.msra.mxu0 0.0
    %1399 = vmatprep.subr.mxu0 0.0
    %1400 = vmatpush2.msra.mxu0 0.0
    %1401 = vmatprep.subr.mxu0 0.0
    %1402 = vmatpush2.msra.mxu0 0.0
    %1403 = vmatprep.subr.mxu0 0.0
    %1404 = vmatpush2.msra.mxu0 0.0
    %1405 = vmatprep.subr.mxu0 0.0
    %1406 = vmatpush2.msra.mxu0 0.0
    %1407 = vmatprep.subr.mxu0 0.0
    %1408 = vmatpush2.msra.mxu0 0.0
    %1409 = vmatprep.subr.mxu0 0.0
    %1410 = vmatpush2.msra.mxu0 0.0
    %1411 = vmatprep.subr.mxu0 0.0
    %1412 = vmatpush2.msra.mxu0 0.0
    %1413 = vmatprep.subr.mxu0 0.0
    %1414 = vmatpush2.msra.mxu0 0.0
    %1415 = vmatprep.mubr.f32.mxu0 0.0
    %1416 = vmatmul.mubr.f32.gmra.mxu0 %v127
    %v1417 = vpop.f32.mrf.mxu0
    %v1418 = vadd.f32 0.0, %v1417
    %v1419 = vpop.f32.mrf.mxu0
    %1420 = vdwg.mxu0
    %s1421 = scalar_lea.vmem %s3, 112
    %v1422 = vld [vmem:[%s1421] sm:$0xff]
    %v1423 = vld [vmem:[%s1421 + $0x8] sm:$0xff]
    %v1425 = vsel %vm306, %v1422, 0
    %v1428 = vsel %vm306, %v1423, 0
    %1430 = vmatprep.subr.mxu0 0.0
    %1431 = vmatpush1.msra.mxu0 0.0
    %1432 = vmatprep.subr.mxu0 0.0
    %1433 = vmatpush1.msra.mxu0 0.0
    %1434 = vmatprep.subr.mxu0 0.0
    %1435 = vmatpush1.msra.mxu0 0.0
    %1436 = vmatprep.subr.mxu0 0.0
    %1437 = vmatpush1.msra.mxu0 0.0
    %1438 = vmatprep.subr.mxu0 0.0
    %1439 = vmatpush1.msra.mxu0 0.0
    %1440 = vmatprep.subr.mxu0 0.0
    %1441 = vmatpush1.msra.mxu0 0.0
    %1442 = vmatprep.subr.mxu0 0.0
    %1443 = vmatpush1.msra.mxu0 0.0
    %1444 = vmatprep.subr.mxu0 0.0
    %1445 = vmatpush1.msra.mxu0 0.0
    %1446 = vmatprep.subr.mxu0 0.0
    %1447 = vmatpush1.msra.mxu0 0.0
    %1448 = vmatprep.subr.mxu0 0.0
    %1449 = vmatpush1.msra.mxu0 0.0
    %1450 = vmatprep.subr.mxu0 0.0
    %1451 = vmatpush1.msra.mxu0 0.0
    %1452 = vmatprep.subr.mxu0 0.0
    %1453 = vmatpush1.msra.mxu0 0.0
    %1454 = vmatprep.subr.mxu0 0.0
    %1455 = vmatpush1.msra.mxu0 0.0
    %1456 = vmatprep.subr.mxu0 0.0
    %1457 = vmatpush1.msra.mxu0 0.0
    %1458 = vmatprep.subr.mxu0 0.0
    %1459 = vmatpush1.msra.mxu0 0.0
    %1460 = vmatprep.subr.mxu0 0.0
    %1461 = vmatpush1.msra.mxu0 %v1418
    %1462 = vmatprep.subr.mxu0 0.0
    %1463 = vmatpush2.msra.mxu0 0.0
    %1464 = vmatprep.subr.mxu0 0.0
    %1465 = vmatpush2.msra.mxu0 0.0
    %1466 = vmatprep.subr.mxu0 0.0
    %1467 = vmatpush2.msra.mxu0 0.0
    %1468 = vmatprep.subr.mxu0 0.0
    %1469 = vmatpush2.msra.mxu0 0.0
    %1470 = vmatprep.subr.mxu0 0.0
    %1471 = vmatpush2.msra.mxu0 0.0
    %1472 = vmatprep.subr.mxu0 0.0
    %1473 = vmatpush2.msra.mxu0 0.0
    %1474 = vmatprep.subr.mxu0 0.0
    %1475 = vmatpush2.msra.mxu0 0.0
    %1476 = vmatprep.subr.mxu0 0.0
    %1477 = vmatpush2.msra.mxu0 0.0
    %1478 = vmatprep.subr.mxu0 0.0
    %1479 = vmatpush2.msra.mxu0 0.0
    %1480 = vmatprep.subr.mxu0 0.0
    %1481 = vmatpush2.msra.mxu0 0.0
    %1482 = vmatprep.subr.mxu0 0.0
    %1483 = vmatpush2.msra.mxu0 0.0
    %1484 = vmatprep.subr.mxu0 0.0
    %1485 = vmatpush2.msra.mxu0 0.0
    %1486 = vmatprep.subr.mxu0 0.0
    %1487 = vmatpush2.msra.mxu0 0.0
    %1488 = vmatprep.subr.mxu0 0.0
    %1489 = vmatpush2.msra.mxu0 0.0
    %1490 = vmatprep.subr.mxu0 0.0
    %1491 = vmatpush2.msra.mxu0 0.0
    %1492 = vmatprep.subr.mxu0 0.0
    %1493 = vmatpush2.msra.mxu0 0.0
    %1494 = vmatprep.mubr.f32.mxu0 0.0
    %1495 = vmatmul.mubr.f32.gmra.mxu0 %v1425
    %v1496 = vpop.f32.mrf.mxu0
    %v1497 = vadd.f32 0.0, %v1496
    %v1498 = vpop.f32.mrf.mxu0
    %1499 = vmatprep.mubr.f32.mxu0 0.0
    %1500 = vmatmul.mubr.f32.gmra.mxu0 %v1428
    %v1501 = vpop.f32.mrf.mxu0
    %v1502 = vadd.f32 0.0, %v1501
    %v1503 = vpop.f32.mrf.mxu0
    %1504 = vdwg.mxu0
    %v1505 = vadd.f32 %v1332, %v1497
    %v1506 = vadd.f32 %v1333, %v1502
    %s1507 = scalar_lea.vmem %s4, 1024
    %v1508 = vld [vmem:[%s1507] sm:$0xff]
    %v1509 = vld [vmem:[%s1507 + $0x8] sm:$0xff]
    %v1510 = vld [vmem:[%s1507 + $0x10] sm:$0xff]
    %v1511 = vld [vmem:[%s1507 + $0x18] sm:$0xff]
    %v1512 = vld [vmem:[%s1507 + $0x20] sm:$0xff]
    %v1513 = vld [vmem:[%s1507 + $0x28] sm:$0xff]
    %v1514 = vld [vmem:[%s1507 + $0x30] sm:$0xff]
    %v1515 = vld [vmem:[%s1507 + $0x38] sm:$0xff]
    %v1516 = vld [vmem:[%s1507 + $0x40] sm:$0xff]
    %v1517 = vld [vmem:[%s1507 + $0x48] sm:$0xff]
    %v1518 = vld [vmem:[%s1507 + $0x50] sm:$0xff]
    %v1519 = vld [vmem:[%s1507 + $0x58] sm:$0xff]
    %v1520 = vld [vmem:[%s1507 + $0x60] sm:$0xff]
    %v1521 = vld [vmem:[%s1507 + $0x68] sm:$0xff]
    %v1522 = vld [vmem:[%s1507 + $0x70] sm:$0xff]
    %v1523 = vld [vmem:[%s1507 + $0x78] sm:$0xff]
    %1524 = vmatprep.subr.mxu0 0.0
    %1525 = vmatpush1.msra.mxu0 %v1523
    %1526 = vmatprep.subr.mxu0 0.0
    %1527 = vmatpush1.msra.mxu0 %v1522
    %1528 = vmatprep.subr.mxu0 0.0
    %1529 = vmatpush1.msra.mxu0 %v1521
    %1530 = vmatprep.subr.mxu0 0.0
    %1531 = vmatpush1.msra.mxu0 %v1520
    %1532 = vmatprep.subr.mxu0 0.0
    %1533 = vmatpush1.msra.mxu0 %v1519
    %1534 = vmatprep.subr.mxu0 0.0
    %1535 = vmatpush1.msra.mxu0 %v1518
    %1536 = vmatprep.subr.mxu0 0.0
    %1537 = vmatpush1.msra.mxu0 %v1517
    %1538 = vmatprep.subr.mxu0 0.0
    %1539 = vmatpush1.msra.mxu0 %v1516
    %1540 = vmatprep.subr.mxu0 0.0
    %1541 = vmatpush1.msra.mxu0 %v1515
    %1542 = vmatprep.subr.mxu0 0.0
    %1543 = vmatpush1.msra.mxu0 %v1514
    %1544 = vmatprep.subr.mxu0 0.0
    %1545 = vmatpush1.msra.mxu0 %v1513
    %1546 = vmatprep.subr.mxu0 0.0
    %1547 = vmatpush1.msra.mxu0 %v1512
    %1548 = vmatprep.subr.mxu0 0.0
    %1549 = vmatpush1.msra.mxu0 %v1511
    %1550 = vmatprep.subr.mxu0 0.0
    %1551 = vmatpush1.msra.mxu0 %v1510
    %1552 = vmatprep.subr.mxu0 0.0
    %1553 = vmatpush1.msra.mxu0 %v1509
    %1554 = vmatprep.subr.mxu0 0.0
    %1555 = vmatpush1.msra.mxu0 %v1508
    %1556 = vmatprep.subr.mxu0 0.0
    %1557 = vmatpush2.msra.mxu0 0.0
    %1558 = vmatprep.subr.mxu0 0.0
    %1559 = vmatpush2.msra.mxu0 0.0
    %1560 = vmatprep.subr.mxu0 0.0
    %1561 = vmatpush2.msra.mxu0 0.0
    %1562 = vmatprep.subr.mxu0 0.0
    %1563 = vmatpush2.msra.mxu0 0.0
    %1564 = vmatprep.subr.mxu0 0.0
    %1565 = vmatpush2.msra.mxu0 0.0
    %1566 = vmatprep.subr.mxu0 0.0
    %1567 = vmatpush2.msra.mxu0 0.0
    %1568 = vmatprep.subr.mxu0 0.0
    %1569 = vmatpush2.msra.mxu0 0.0
    %1570 = vmatprep.subr.mxu0 0.0
    %1571 = vmatpush2.msra.mxu0 0.0
    %1572 = vmatprep.subr.mxu0 0.0
    %1573 = vmatpush2.msra.mxu0 0.0
    %1574 = vmatprep.subr.mxu0 0.0
    %1575 = vmatpush2.msra.mxu0 0.0
    %1576 = vmatprep.subr.mxu0 0.0
    %1577 = vmatpush2.msra.mxu0 0.0
    %1578 = vmatprep.subr.mxu0 0.0
    %1579 = vmatpush2.msra.mxu0 0.0
    %1580 = vmatprep.subr.mxu0 0.0
    %1581 = vmatpush2.msra.mxu0 0.0
    %1582 = vmatprep.subr.mxu0 0.0
    %1583 = vmatpush2.msra.mxu0 0.0
    %1584 = vmatprep.subr.mxu0 0.0
    %1585 = vmatpush2.msra.mxu0 0.0
    %1586 = vmatprep.subr.mxu0 0.0
    %1587 = vmatpush2.msra.mxu0 0.0
    %1588 = vmatprep.mubr.f32.mxu0 0.0
    %1589 = vmatmul.mubr.f32.gmra.mxu0 %v127
    %v1590 = vpop.f32.mrf.mxu0
    %v1591 = vadd.f32 0.0, %v1590
    %v1592 = vpop.f32.mrf.mxu0
    %1593 = vdwg.mxu0
    %s1594 = scalar_lea.vmem %s3, 128
    %v1595 = vld [vmem:[%s1594] sm:$0xff]
    %v1596 = vld [vmem:[%s1594 + $0x8] sm:$0xff]
    %v1598 = vsel %vm306, %v1595, 0
    %v1601 = vsel %vm306, %v1596, 0
    %1603 = vmatprep.subr.mxu0 0.0
    %1604 = vmatpush1.msra.mxu0 0.0
    %1605 = vmatprep.subr.mxu0 0.0
    %1606 = vmatpush1.msra.mxu0 0.0
    %1607 = vmatprep.subr.mxu0 0.0
    %1608 = vmatpush1.msra.mxu0 0.0
    %1609 = vmatprep.subr.mxu0 0.0
    %1610 = vmatpush1.msra.mxu0 0.0
    %1611 = vmatprep.subr.mxu0 0.0
    %1612 = vmatpush1.msra.mxu0 0.0
    %1613 = vmatprep.subr.mxu0 0.0
    %1614 = vmatpush1.msra.mxu0 0.0
    %1615 = vmatprep.subr.mxu0 0.0
    %1616 = vmatpush1.msra.mxu0 0.0
    %1617 = vmatprep.subr.mxu0 0.0
    %1618 = vmatpush1.msra.mxu0 0.0
    %1619 = vmatprep.subr.mxu0 0.0
    %1620 = vmatpush1.msra.mxu0 0.0
    %1621 = vmatprep.subr.mxu0 0.0
    %1622 = vmatpush1.msra.mxu0 0.0
    %1623 = vmatprep.subr.mxu0 0.0
    %1624 = vmatpush1.msra.mxu0 0.0
    %1625 = vmatprep.subr.mxu0 0.0
    %1626 = vmatpush1.msra.mxu0 0.0
    %1627 = vmatprep.subr.mxu0 0.0
    %1628 = vmatpush1.msra.mxu0 0.0
    %1629 = vmatprep.subr.mxu0 0.0
    %1630 = vmatpush1.msra.mxu0 0.0
    %1631 = vmatprep.subr.mxu0 0.0
    %1632 = vmatpush1.msra.mxu0 0.0
    %1633 = vmatprep.subr.mxu0 0.0
    %1634 = vmatpush1.msra.mxu0 %v1591
    %1635 = vmatprep.subr.mxu0 0.0
    %1636 = vmatpush2.msra.mxu0 0.0
    %1637 = vmatprep.subr.mxu0 0.0
    %1638 = vmatpush2.msra.mxu0 0.0
    %1639 = vmatprep.subr.mxu0 0.0
    %1640 = vmatpush2.msra.mxu0 0.0
    %1641 = vmatprep.subr.mxu0 0.0
    %1642 = vmatpush2.msra.mxu0 0.0
    %1643 = vmatprep.subr.mxu0 0.0
    %1644 = vmatpush2.msra.mxu0 0.0
    %1645 = vmatprep.subr.mxu0 0.0
    %1646 = vmatpush2.msra.mxu0 0.0
    %1647 = vmatprep.subr.mxu0 0.0
    %1648 = vmatpush2.msra.mxu0 0.0
    %1649 = vmatprep.subr.mxu0 0.0
    %1650 = vmatpush2.msra.mxu0 0.0
    %1651 = vmatprep.subr.mxu0 0.0
    %1652 = vmatpush2.msra.mxu0 0.0
    %1653 = vmatprep.subr.mxu0 0.0
    %1654 = vmatpush2.msra.mxu0 0.0
    %1655 = vmatprep.subr.mxu0 0.0
    %1656 = vmatpush2.msra.mxu0 0.0
    %1657 = vmatprep.subr.mxu0 0.0
    %1658 = vmatpush2.msra.mxu0 0.0
    %1659 = vmatprep.subr.mxu0 0.0
    %1660 = vmatpush2.msra.mxu0 0.0
    %1661 = vmatprep.subr.mxu0 0.0
    %1662 = vmatpush2.msra.mxu0 0.0
    %1663 = vmatprep.subr.mxu0 0.0
    %1664 = vmatpush2.msra.mxu0 0.0
    %1665 = vmatprep.subr.mxu0 0.0
    %1666 = vmatpush2.msra.mxu0 0.0
    %1667 = vmatprep.mubr.f32.mxu0 0.0
    %1668 = vmatmul.mubr.f32.gmra.mxu0 %v1598
    %v1669 = vpop.f32.mrf.mxu0
    %v1670 = vadd.f32 0.0, %v1669
    %v1671 = vpop.f32.mrf.mxu0
    %1672 = vmatprep.mubr.f32.mxu0 0.0
    %1673 = vmatmul.mubr.f32.gmra.mxu0 %v1601
    %v1674 = vpop.f32.mrf.mxu0
    %v1675 = vadd.f32 0.0, %v1674
    %v1676 = vpop.f32.mrf.mxu0
    %1677 = vdwg.mxu0
    %v1678 = vadd.f32 %v1505, %v1670
    %v1679 = vadd.f32 %v1506, %v1675
    %s1680 = scalar_lea.vmem %s4, 1152
    %v1681 = vld [vmem:[%s1680] sm:$0xff]
    %v1682 = vld [vmem:[%s1680 + $0x8] sm:$0xff]
    %v1683 = vld [vmem:[%s1680 + $0x10] sm:$0xff]
    %v1684 = vld [vmem:[%s1680 + $0x18] sm:$0xff]
    %v1685 = vld [vmem:[%s1680 + $0x20] sm:$0xff]
    %v1686 = vld [vmem:[%s1680 + $0x28] sm:$0xff]
    %v1687 = vld [vmem:[%s1680 + $0x30] sm:$0xff]
    %v1688 = vld [vmem:[%s1680 + $0x38] sm:$0xff]
    %v1689 = vld [vmem:[%s1680 + $0x40] sm:$0xff]
    %v1690 = vld [vmem:[%s1680 + $0x48] sm:$0xff]
    %v1691 = vld [vmem:[%s1680 + $0x50] sm:$0xff]
    %v1692 = vld [vmem:[%s1680 + $0x58] sm:$0xff]
    %v1693 = vld [vmem:[%s1680 + $0x60] sm:$0xff]
    %v1694 = vld [vmem:[%s1680 + $0x68] sm:$0xff]
    %v1695 = vld [vmem:[%s1680 + $0x70] sm:$0xff]
    %v1696 = vld [vmem:[%s1680 + $0x78] sm:$0xff]
    %1697 = vmatprep.subr.mxu0 0.0
    %1698 = vmatpush1.msra.mxu0 %v1696
    %1699 = vmatprep.subr.mxu0 0.0
    %1700 = vmatpush1.msra.mxu0 %v1695
    %1701 = vmatprep.subr.mxu0 0.0
    %1702 = vmatpush1.msra.mxu0 %v1694
    %1703 = vmatprep.subr.mxu0 0.0
    %1704 = vmatpush1.msra.mxu0 %v1693
    %1705 = vmatprep.subr.mxu0 0.0
    %1706 = vmatpush1.msra.mxu0 %v1692
    %1707 = vmatprep.subr.mxu0 0.0
    %1708 = vmatpush1.msra.mxu0 %v1691
    %1709 = vmatprep.subr.mxu0 0.0
    %1710 = vmatpush1.msra.mxu0 %v1690
    %1711 = vmatprep.subr.mxu0 0.0
    %1712 = vmatpush1.msra.mxu0 %v1689
    %1713 = vmatprep.subr.mxu0 0.0
    %1714 = vmatpush1.msra.mxu0 %v1688
    %1715 = vmatprep.subr.mxu0 0.0
    %1716 = vmatpush1.msra.mxu0 %v1687
    %1717 = vmatprep.subr.mxu0 0.0
    %1718 = vmatpush1.msra.mxu0 %v1686
    %1719 = vmatprep.subr.mxu0 0.0
    %1720 = vmatpush1.msra.mxu0 %v1685
    %1721 = vmatprep.subr.mxu0 0.0
    %1722 = vmatpush1.msra.mxu0 %v1684
    %1723 = vmatprep.subr.mxu0 0.0
    %1724 = vmatpush1.msra.mxu0 %v1683
    %1725 = vmatprep.subr.mxu0 0.0
    %1726 = vmatpush1.msra.mxu0 %v1682
    %1727 = vmatprep.subr.mxu0 0.0
    %1728 = vmatpush1.msra.mxu0 %v1681
    %1729 = vmatprep.subr.mxu0 0.0
    %1730 = vmatpush2.msra.mxu0 0.0
    %1731 = vmatprep.subr.mxu0 0.0
    %1732 = vmatpush2.msra.mxu0 0.0
    %1733 = vmatprep.subr.mxu0 0.0
    %1734 = vmatpush2.msra.mxu0 0.0
    %1735 = vmatprep.subr.mxu0 0.0
    %1736 = vmatpush2.msra.mxu0 0.0
    %1737 = vmatprep.subr.mxu0 0.0
    %1738 = vmatpush2.msra.mxu0 0.0
    %1739 = vmatprep.subr.mxu0 0.0
    %1740 = vmatpush2.msra.mxu0 0.0
    %1741 = vmatprep.subr.mxu0 0.0
    %1742 = vmatpush2.msra.mxu0 0.0
    %1743 = vmatprep.subr.mxu0 0.0
    %1744 = vmatpush2.msra.mxu0 0.0
    %1745 = vmatprep.subr.mxu0 0.0
    %1746 = vmatpush2.msra.mxu0 0.0
    %1747 = vmatprep.subr.mxu0 0.0
    %1748 = vmatpush2.msra.mxu0 0.0
    %1749 = vmatprep.subr.mxu0 0.0
    %1750 = vmatpush2.msra.mxu0 0.0
    %1751 = vmatprep.subr.mxu0 0.0
    %1752 = vmatpush2.msra.mxu0 0.0
    %1753 = vmatprep.subr.mxu0 0.0
    %1754 = vmatpush2.msra.mxu0 0.0
    %1755 = vmatprep.subr.mxu0 0.0
    %1756 = vmatpush2.msra.mxu0 0.0
    %1757 = vmatprep.subr.mxu0 0.0
    %1758 = vmatpush2.msra.mxu0 0.0
    %1759 = vmatprep.subr.mxu0 0.0
    %1760 = vmatpush2.msra.mxu0 0.0
    %1761 = vmatprep.mubr.f32.mxu0 0.0
    %1762 = vmatmul.mubr.f32.gmra.mxu0 %v127
    %v1763 = vpop.f32.mrf.mxu0
    %v1764 = vadd.f32 0.0, %v1763
    %v1765 = vpop.f32.mrf.mxu0
    %1766 = vdwg.mxu0
    %s1767 = scalar_lea.vmem %s3, 144
    %v1768 = vld [vmem:[%s1767] sm:$0xff]
    %v1769 = vld [vmem:[%s1767 + $0x8] sm:$0xff]
    %v1771 = vsel %vm306, %v1768, 0
    %v1774 = vsel %vm306, %v1769, 0
    %1776 = vmatprep.subr.mxu0 0.0
    %1777 = vmatpush1.msra.mxu0 0.0
    %1778 = vmatprep.subr.mxu0 0.0
    %1779 = vmatpush1.msra.mxu0 0.0
    %1780 = vmatprep.subr.mxu0 0.0
    %1781 = vmatpush1.msra.mxu0 0.0
    %1782 = vmatprep.subr.mxu0 0.0
    %1783 = vmatpush1.msra.mxu0 0.0
    %1784 = vmatprep.subr.mxu0 0.0
    %1785 = vmatpush1.msra.mxu0 0.0
    %1786 = vmatprep.subr.mxu0 0.0
    %1787 = vmatpush1.msra.mxu0 0.0
    %1788 = vmatprep.subr.mxu0 0.0
    %1789 = vmatpush1.msra.mxu0 0.0
    %1790 = vmatprep.subr.mxu0 0.0
    %1791 = vmatpush1.msra.mxu0 0.0
    %1792 = vmatprep.subr.mxu0 0.0
    %1793 = vmatpush1.msra.mxu0 0.0
    %1794 = vmatprep.subr.mxu0 0.0
    %1795 = vmatpush1.msra.mxu0 0.0
    %1796 = vmatprep.subr.mxu0 0.0
    %1797 = vmatpush1.msra.mxu0 0.0
    %1798 = vmatprep.subr.mxu0 0.0
    %1799 = vmatpush1.msra.mxu0 0.0
    %1800 = vmatprep.subr.mxu0 0.0
    %1801 = vmatpush1.msra.mxu0 0.0
    %1802 = vmatprep.subr.mxu0 0.0
    %1803 = vmatpush1.msra.mxu0 0.0
    %1804 = vmatprep.subr.mxu0 0.0
    %1805 = vmatpush1.msra.mxu0 0.0
    %1806 = vmatprep.subr.mxu0 0.0
    %1807 = vmatpush1.msra.mxu0 %v1764
    %1808 = vmatprep.subr.mxu0 0.0
    %1809 = vmatpush2.msra.mxu0 0.0
    %1810 = vmatprep.subr.mxu0 0.0
    %1811 = vmatpush2.msra.mxu0 0.0
    %1812 = vmatprep.subr.mxu0 0.0
    %1813 = vmatpush2.msra.mxu0 0.0
    %1814 = vmatprep.subr.mxu0 0.0
    %1815 = vmatpush2.msra.mxu0 0.0
    %1816 = vmatprep.subr.mxu0 0.0
    %1817 = vmatpush2.msra.mxu0 0.0
    %1818 = vmatprep.subr.mxu0 0.0
    %1819 = vmatpush2.msra.mxu0 0.0
    %1820 = vmatprep.subr.mxu0 0.0
    %1821 = vmatpush2.msra.mxu0 0.0
    %1822 = vmatprep.subr.mxu0 0.0
    %1823 = vmatpush2.msra.mxu0 0.0
    %1824 = vmatprep.subr.mxu0 0.0
    %1825 = vmatpush2.msra.mxu0 0.0
    %1826 = vmatprep.subr.mxu0 0.0
    %1827 = vmatpush2.msra.mxu0 0.0
    %1828 = vmatprep.subr.mxu0 0.0
    %1829 = vmatpush2.msra.mxu0 0.0
    %1830 = vmatprep.subr.mxu0 0.0
    %1831 = vmatpush2.msra.mxu0 0.0
    %1832 = vmatprep.subr.mxu0 0.0
    %1833 = vmatpush2.msra.mxu0 0.0
    %1834 = vmatprep.subr.mxu0 0.0
    %1835 = vmatpush2.msra.mxu0 0.0
    %1836 = vmatprep.subr.mxu0 0.0
    %1837 = vmatpush2.msra.mxu0 0.0
    %1838 = vmatprep.subr.mxu0 0.0
    %1839 = vmatpush2.msra.mxu0 0.0
    %1840 = vmatprep.mubr.f32.mxu0 0.0
    %1841 = vmatmul.mubr.f32.gmra.mxu0 %v1771
    %v1842 = vpop.f32.mrf.mxu0
    %v1843 = vadd.f32 0.0, %v1842
    %v1844 = vpop.f32.mrf.mxu0
    %1845 = vmatprep.mubr.f32.mxu0 0.0
    %1846 = vmatmul.mubr.f32.gmra.mxu0 %v1774
    %v1847 = vpop.f32.mrf.mxu0
    %v1848 = vadd.f32 0.0, %v1847
    %v1849 = vpop.f32.mrf.mxu0
    %1850 = vdwg.mxu0
    %v1851 = vadd.f32 %v1678, %v1843
    %v1852 = vadd.f32 %v1679, %v1848
    %s1853 = scalar_lea.vmem %s4, 1280
    %v1854 = vld [vmem:[%s1853] sm:$0xff]
    %v1855 = vld [vmem:[%s1853 + $0x8] sm:$0xff]
    %v1856 = vld [vmem:[%s1853 + $0x10] sm:$0xff]
    %v1857 = vld [vmem:[%s1853 + $0x18] sm:$0xff]
    %v1858 = vld [vmem:[%s1853 + $0x20] sm:$0xff]
    %v1859 = vld [vmem:[%s1853 + $0x28] sm:$0xff]
    %v1860 = vld [vmem:[%s1853 + $0x30] sm:$0xff]
    %v1861 = vld [vmem:[%s1853 + $0x38] sm:$0xff]
    %v1862 = vld [vmem:[%s1853 + $0x40] sm:$0xff]
    %v1863 = vld [vmem:[%s1853 + $0x48] sm:$0xff]
    %v1864 = vld [vmem:[%s1853 + $0x50] sm:$0xff]
    %v1865 = vld [vmem:[%s1853 + $0x58] sm:$0xff]
    %v1866 = vld [vmem:[%s1853 + $0x60] sm:$0xff]
    %v1867 = vld [vmem:[%s1853 + $0x68] sm:$0xff]
    %v1868 = vld [vmem:[%s1853 + $0x70] sm:$0xff]
    %v1869 = vld [vmem:[%s1853 + $0x78] sm:$0xff]
    %1870 = vmatprep.subr.mxu0 0.0
    %1871 = vmatpush1.msra.mxu0 %v1869
    %1872 = vmatprep.subr.mxu0 0.0
    %1873 = vmatpush1.msra.mxu0 %v1868
    %1874 = vmatprep.subr.mxu0 0.0
    %1875 = vmatpush1.msra.mxu0 %v1867
    %1876 = vmatprep.subr.mxu0 0.0
    %1877 = vmatpush1.msra.mxu0 %v1866
    %1878 = vmatprep.subr.mxu0 0.0
    %1879 = vmatpush1.msra.mxu0 %v1865
    %1880 = vmatprep.subr.mxu0 0.0
    %1881 = vmatpush1.msra.mxu0 %v1864
    %1882 = vmatprep.subr.mxu0 0.0
    %1883 = vmatpush1.msra.mxu0 %v1863
    %1884 = vmatprep.subr.mxu0 0.0
    %1885 = vmatpush1.msra.mxu0 %v1862
    %1886 = vmatprep.subr.mxu0 0.0
    %1887 = vmatpush1.msra.mxu0 %v1861
    %1888 = vmatprep.subr.mxu0 0.0
    %1889 = vmatpush1.msra.mxu0 %v1860
    %1890 = vmatprep.subr.mxu0 0.0
    %1891 = vmatpush1.msra.mxu0 %v1859
    %1892 = vmatprep.subr.mxu0 0.0
    %1893 = vmatpush1.msra.mxu0 %v1858
    %1894 = vmatprep.subr.mxu0 0.0
    %1895 = vmatpush1.msra.mxu0 %v1857
    %1896 = vmatprep.subr.mxu0 0.0
    %1897 = vmatpush1.msra.mxu0 %v1856
    %1898 = vmatprep.subr.mxu0 0.0
    %1899 = vmatpush1.msra.mxu0 %v1855
    %1900 = vmatprep.subr.mxu0 0.0
    %1901 = vmatpush1.msra.mxu0 %v1854
    %1902 = vmatprep.subr.mxu0 0.0
    %1903 = vmatpush2.msra.mxu0 0.0
    %1904 = vmatprep.subr.mxu0 0.0
    %1905 = vmatpush2.msra.mxu0 0.0
    %1906 = vmatprep.subr.mxu0 0.0
    %1907 = vmatpush2.msra.mxu0 0.0
    %1908 = vmatprep.subr.mxu0 0.0
    %1909 = vmatpush2.msra.mxu0 0.0
    %1910 = vmatprep.subr.mxu0 0.0
    %1911 = vmatpush2.msra.mxu0 0.0
    %1912 = vmatprep.subr.mxu0 0.0
    %1913 = vmatpush2.msra.mxu0 0.0
    %1914 = vmatprep.subr.mxu0 0.0
    %1915 = vmatpush2.msra.mxu0 0.0
    %1916 = vmatprep.subr.mxu0 0.0
    %1917 = vmatpush2.msra.mxu0 0.0
    %1918 = vmatprep.subr.mxu0 0.0
    %1919 = vmatpush2.msra.mxu0 0.0
    %1920 = vmatprep.subr.mxu0 0.0
    %1921 = vmatpush2.msra.mxu0 0.0
    %1922 = vmatprep.subr.mxu0 0.0
    %1923 = vmatpush2.msra.mxu0 0.0
    %1924 = vmatprep.subr.mxu0 0.0
    %1925 = vmatpush2.msra.mxu0 0.0
    %1926 = vmatprep.subr.mxu0 0.0
    %1927 = vmatpush2.msra.mxu0 0.0
    %1928 = vmatprep.subr.mxu0 0.0
    %1929 = vmatpush2.msra.mxu0 0.0
    %1930 = vmatprep.subr.mxu0 0.0
    %1931 = vmatpush2.msra.mxu0 0.0
    %1932 = vmatprep.subr.mxu0 0.0
    %1933 = vmatpush2.msra.mxu0 0.0
    %1934 = vmatprep.mubr.f32.mxu0 0.0
    %1935 = vmatmul.mubr.f32.gmra.mxu0 %v127
    %v1936 = vpop.f32.mrf.mxu0
    %v1937 = vadd.f32 0.0, %v1936
    %v1938 = vpop.f32.mrf.mxu0
    %1939 = vdwg.mxu0
    %s1940 = scalar_lea.vmem %s3, 160
    %v1941 = vld [vmem:[%s1940] sm:$0xff]
    %v1942 = vld [vmem:[%s1940 + $0x8] sm:$0xff]
    %v1944 = vsel %vm306, %v1941, 0
    %v1947 = vsel %vm306, %v1942, 0
    %1949 = vmatprep.subr.mxu0 0.0
    %1950 = vmatpush1.msra.mxu0 0.0
    %1951 = vmatprep.subr.mxu0 0.0
    %1952 = vmatpush1.msra.mxu0 0.0
    %1953 = vmatprep.subr.mxu0 0.0
    %1954 = vmatpush1.msra.mxu0 0.0
    %1955 = vmatprep.subr.mxu0 0.0
    %1956 = vmatpush1.msra.mxu0 0.0
    %1957 = vmatprep.subr.mxu0 0.0
    %1958 = vmatpush1.msra.mxu0 0.0
    %1959 = vmatprep.subr.mxu0 0.0
    %1960 = vmatpush1.msra.mxu0 0.0
    %1961 = vmatprep.subr.mxu0 0.0
    %1962 = vmatpush1.msra.mxu0 0.0
    %1963 = vmatprep.subr.mxu0 0.0
    %1964 = vmatpush1.msra.mxu0 0.0
    %1965 = vmatprep.subr.mxu0 0.0
    %1966 = vmatpush1.msra.mxu0 0.0
    %1967 = vmatprep.subr.mxu0 0.0
    %1968 = vmatpush1.msra.mxu0 0.0
    %1969 = vmatprep.subr.mxu0 0.0
    %1970 = vmatpush1.msra.mxu0 0.0
    %1971 = vmatprep.subr.mxu0 0.0
    %1972 = vmatpush1.msra.mxu0 0.0
    %1973 = vmatprep.subr.mxu0 0.0
    %1974 = vmatpush1.msra.mxu0 0.0
    %1975 = vmatprep.subr.mxu0 0.0
    %1976 = vmatpush1.msra.mxu0 0.0
    %1977 = vmatprep.subr.mxu0 0.0
    %1978 = vmatpush1.msra.mxu0 0.0
    %1979 = vmatprep.subr.mxu0 0.0
    %1980 = vmatpush1.msra.mxu0 %v1937
    %1981 = vmatprep.subr.mxu0 0.0
    %1982 = vmatpush2.msra.mxu0 0.0
    %1983 = vmatprep.subr.mxu0 0.0
    %1984 = vmatpush2.msra.mxu0 0.0
    %1985 = vmatprep.subr.mxu0 0.0
    %1986 = vmatpush2.msra.mxu0 0.0
    %1987 = vmatprep.subr.mxu0 0.0
    %1988 = vmatpush2.msra.mxu0 0.0
    %1989 = vmatprep.subr.mxu0 0.0
    %1990 = vmatpush2.msra.mxu0 0.0
    %1991 = vmatprep.subr.mxu0 0.0
    %1992 = vmatpush2.msra.mxu0 0.0
    %1993 = vmatprep.subr.mxu0 0.0
    %1994 = vmatpush2.msra.mxu0 0.0
    %1995 = vmatprep.subr.mxu0 0.0
    %1996 = vmatpush2.msra.mxu0 0.0
    %1997 = vmatprep.subr.mxu0 0.0
    %1998 = vmatpush2.msra.mxu0 0.0
    %1999 = vmatprep.subr.mxu0 0.0
    %2000 = vmatpush2.msra.mxu0 0.0
    %2001 = vmatprep.subr.mxu0 0.0
    %2002 = vmatpush2.msra.mxu0 0.0
    %2003 = vmatprep.subr.mxu0 0.0
    %2004 = vmatpush2.msra.mxu0 0.0
    %2005 = vmatprep.subr.mxu0 0.0
    %2006 = vmatpush2.msra.mxu0 0.0
    %2007 = vmatprep.subr.mxu0 0.0
    %2008 = vmatpush2.msra.mxu0 0.0
    %2009 = vmatprep.subr.mxu0 0.0
    %2010 = vmatpush2.msra.mxu0 0.0
    %2011 = vmatprep.subr.mxu0 0.0
    %2012 = vmatpush2.msra.mxu0 0.0
    %2013 = vmatprep.mubr.f32.mxu0 0.0
    %2014 = vmatmul.mubr.f32.gmra.mxu0 %v1944
    %v2015 = vpop.f32.mrf.mxu0
    %v2016 = vadd.f32 0.0, %v2015
    %v2017 = vpop.f32.mrf.mxu0
    %2018 = vmatprep.mubr.f32.mxu0 0.0
    %2019 = vmatmul.mubr.f32.gmra.mxu0 %v1947
    %v2020 = vpop.f32.mrf.mxu0
    %v2021 = vadd.f32 0.0, %v2020
    %v2022 = vpop.f32.mrf.mxu0
    %2023 = vdwg.mxu0
    %v2024 = vadd.f32 %v1851, %v2016
    %v2025 = vadd.f32 %v1852, %v2021
    %s2026 = scalar_lea.vmem %s4, 1408
    %v2027 = vld [vmem:[%s2026] sm:$0xff]
    %v2028 = vld [vmem:[%s2026 + $0x8] sm:$0xff]
    %v2029 = vld [vmem:[%s2026 + $0x10] sm:$0xff]
    %v2030 = vld [vmem:[%s2026 + $0x18] sm:$0xff]
    %v2031 = vld [vmem:[%s2026 + $0x20] sm:$0xff]
    %v2032 = vld [vmem:[%s2026 + $0x28] sm:$0xff]
    %v2033 = vld [vmem:[%s2026 + $0x30] sm:$0xff]
    %v2034 = vld [vmem:[%s2026 + $0x38] sm:$0xff]
    %v2035 = vld [vmem:[%s2026 + $0x40] sm:$0xff]
    %v2036 = vld [vmem:[%s2026 + $0x48] sm:$0xff]
    %v2037 = vld [vmem:[%s2026 + $0x50] sm:$0xff]
    %v2038 = vld [vmem:[%s2026 + $0x58] sm:$0xff]
    %v2039 = vld [vmem:[%s2026 + $0x60] sm:$0xff]
    %v2040 = vld [vmem:[%s2026 + $0x68] sm:$0xff]
    %v2041 = vld [vmem:[%s2026 + $0x70] sm:$0xff]
    %v2042 = vld [vmem:[%s2026 + $0x78] sm:$0xff]
    %2043 = vmatprep.subr.mxu0 0.0
    %2044 = vmatpush1.msra.mxu0 %v2042
    %2045 = vmatprep.subr.mxu0 0.0
    %2046 = vmatpush1.msra.mxu0 %v2041
    %2047 = vmatprep.subr.mxu0 0.0
    %2048 = vmatpush1.msra.mxu0 %v2040
    %2049 = vmatprep.subr.mxu0 0.0
    %2050 = vmatpush1.msra.mxu0 %v2039
    %2051 = vmatprep.subr.mxu0 0.0
    %2052 = vmatpush1.msra.mxu0 %v2038
    %2053 = vmatprep.subr.mxu0 0.0
    %2054 = vmatpush1.msra.mxu0 %v2037
    %2055 = vmatprep.subr.mxu0 0.0
    %2056 = vmatpush1.msra.mxu0 %v2036
    %2057 = vmatprep.subr.mxu0 0.0
    %2058 = vmatpush1.msra.mxu0 %v2035
    %2059 = vmatprep.subr.mxu0 0.0
    %2060 = vmatpush1.msra.mxu0 %v2034
    %2061 = vmatprep.subr.mxu0 0.0
    %2062 = vmatpush1.msra.mxu0 %v2033
    %2063 = vmatprep.subr.mxu0 0.0
    %2064 = vmatpush1.msra.mxu0 %v2032
    %2065 = vmatprep.subr.mxu0 0.0
    %2066 = vmatpush1.msra.mxu0 %v2031
    %2067 = vmatprep.subr.mxu0 0.0
    %2068 = vmatpush1.msra.mxu0 %v2030
    %2069 = vmatprep.subr.mxu0 0.0
    %2070 = vmatpush1.msra.mxu0 %v2029
    %2071 = vmatprep.subr.mxu0 0.0
    %2072 = vmatpush1.msra.mxu0 %v2028
    %2073 = vmatprep.subr.mxu0 0.0
    %2074 = vmatpush1.msra.mxu0 %v2027
    %2075 = vmatprep.subr.mxu0 0.0
    %2076 = vmatpush2.msra.mxu0 0.0
    %2077 = vmatprep.subr.mxu0 0.0
    %2078 = vmatpush2.msra.mxu0 0.0
    %2079 = vmatprep.subr.mxu0 0.0
    %2080 = vmatpush2.msra.mxu0 0.0
    %2081 = vmatprep.subr.mxu0 0.0
    %2082 = vmatpush2.msra.mxu0 0.0
    %2083 = vmatprep.subr.mxu0 0.0
    %2084 = vmatpush2.msra.mxu0 0.0
    %2085 = vmatprep.subr.mxu0 0.0
    %2086 = vmatpush2.msra.mxu0 0.0
    %2087 = vmatprep.subr.mxu0 0.0
    %2088 = vmatpush2.msra.mxu0 0.0
    %2089 = vmatprep.subr.mxu0 0.0
    %2090 = vmatpush2.msra.mxu0 0.0
    %2091 = vmatprep.subr.mxu0 0.0
    %2092 = vmatpush2.msra.mxu0 0.0
    %2093 = vmatprep.subr.mxu0 0.0
    %2094 = vmatpush2.msra.mxu0 0.0
    %2095 = vmatprep.subr.mxu0 0.0
    %2096 = vmatpush2.msra.mxu0 0.0
    %2097 = vmatprep.subr.mxu0 0.0
    %2098 = vmatpush2.msra.mxu0 0.0
    %2099 = vmatprep.subr.mxu0 0.0
    %2100 = vmatpush2.msra.mxu0 0.0
    %2101 = vmatprep.subr.mxu0 0.0
    %2102 = vmatpush2.msra.mxu0 0.0
    %2103 = vmatprep.subr.mxu0 0.0
    %2104 = vmatpush2.msra.mxu0 0.0
    %2105 = vmatprep.subr.mxu0 0.0
    %2106 = vmatpush2.msra.mxu0 0.0
    %2107 = vmatprep.mubr.f32.mxu0 0.0
    %2108 = vmatmul.mubr.f32.gmra.mxu0 %v127
    %v2109 = vpop.f32.mrf.mxu0
    %v2110 = vadd.f32 0.0, %v2109
    %v2111 = vpop.f32.mrf.mxu0
    %2112 = vdwg.mxu0
    %s2113 = scalar_lea.vmem %s3, 176
    %v2114 = vld [vmem:[%s2113] sm:$0xff]
    %v2115 = vld [vmem:[%s2113 + $0x8] sm:$0xff]
    %v2117 = vsel %vm306, %v2114, 0
    %v2120 = vsel %vm306, %v2115, 0
    %2122 = vmatprep.subr.mxu0 0.0
    %2123 = vmatpush1.msra.mxu0 0.0
    %2124 = vmatprep.subr.mxu0 0.0
    %2125 = vmatpush1.msra.mxu0 0.0
    %2126 = vmatprep.subr.mxu0 0.0
    %2127 = vmatpush1.msra.mxu0 0.0
    %2128 = vmatprep.subr.mxu0 0.0
    %2129 = vmatpush1.msra.mxu0 0.0
    %2130 = vmatprep.subr.mxu0 0.0
    %2131 = vmatpush1.msra.mxu0 0.0
    %2132 = vmatprep.subr.mxu0 0.0
    %2133 = vmatpush1.msra.mxu0 0.0
    %2134 = vmatprep.subr.mxu0 0.0
    %2135 = vmatpush1.msra.mxu0 0.0
    %2136 = vmatprep.subr.mxu0 0.0
    %2137 = vmatpush1.msra.mxu0 0.0
    %2138 = vmatprep.subr.mxu0 0.0
    %2139 = vmatpush1.msra.mxu0 0.0
    %2140 = vmatprep.subr.mxu0 0.0
    %2141 = vmatpush1.msra.mxu0 0.0
    %2142 = vmatprep.subr.mxu0 0.0
    %2143 = vmatpush1.msra.mxu0 0.0
    %2144 = vmatprep.subr.mxu0 0.0
    %2145 = vmatpush1.msra.mxu0 0.0
    %2146 = vmatprep.subr.mxu0 0.0
    %2147 = vmatpush1.msra.mxu0 0.0
    %2148 = vmatprep.subr.mxu0 0.0
    %2149 = vmatpush1.msra.mxu0 0.0
    %2150 = vmatprep.subr.mxu0 0.0
    %2151 = vmatpush1.msra.mxu0 0.0
    %2152 = vmatprep.subr.mxu0 0.0
    %2153 = vmatpush1.msra.mxu0 %v2110
    %2154 = vmatprep.subr.mxu0 0.0
    %2155 = vmatpush2.msra.mxu0 0.0
    %2156 = vmatprep.subr.mxu0 0.0
    %2157 = vmatpush2.msra.mxu0 0.0
    %2158 = vmatprep.subr.mxu0 0.0
    %2159 = vmatpush2.msra.mxu0 0.0
    %2160 = vmatprep.subr.mxu0 0.0
    %2161 = vmatpush2.msra.mxu0 0.0
    %2162 = vmatprep.subr.mxu0 0.0
    %2163 = vmatpush2.msra.mxu0 0.0
    %2164 = vmatprep.subr.mxu0 0.0
    %2165 = vmatpush2.msra.mxu0 0.0
    %2166 = vmatprep.subr.mxu0 0.0
    %2167 = vmatpush2.msra.mxu0 0.0
    %2168 = vmatprep.subr.mxu0 0.0
    %2169 = vmatpush2.msra.mxu0 0.0
    %2170 = vmatprep.subr.mxu0 0.0
    %2171 = vmatpush2.msra.mxu0 0.0
    %2172 = vmatprep.subr.mxu0 0.0
    %2173 = vmatpush2.msra.mxu0 0.0
    %2174 = vmatprep.subr.mxu0 0.0
    %2175 = vmatpush2.msra.mxu0 0.0
    %2176 = vmatprep.subr.mxu0 0.0
    %2177 = vmatpush2.msra.mxu0 0.0
    %2178 = vmatprep.subr.mxu0 0.0
    %2179 = vmatpush2.msra.mxu0 0.0
    %2180 = vmatprep.subr.mxu0 0.0
    %2181 = vmatpush2.msra.mxu0 0.0
    %2182 = vmatprep.subr.mxu0 0.0
    %2183 = vmatpush2.msra.mxu0 0.0
    %2184 = vmatprep.subr.mxu0 0.0
    %2185 = vmatpush2.msra.mxu0 0.0
    %2186 = vmatprep.mubr.f32.mxu0 0.0
    %2187 = vmatmul.mubr.f32.gmra.mxu0 %v2117
    %v2188 = vpop.f32.mrf.mxu0
    %v2189 = vadd.f32 0.0, %v2188
    %v2190 = vpop.f32.mrf.mxu0
    %2191 = vmatprep.mubr.f32.mxu0 0.0
    %2192 = vmatmul.mubr.f32.gmra.mxu0 %v2120
    %v2193 = vpop.f32.mrf.mxu0
    %v2194 = vadd.f32 0.0, %v2193
    %v2195 = vpop.f32.mrf.mxu0
    %2196 = vdwg.mxu0
    %v2197 = vadd.f32 %v2024, %v2189
    %v2198 = vadd.f32 %v2025, %v2194
    %s2199 = scalar_lea.vmem %s4, 1536
    %v2200 = vld [vmem:[%s2199] sm:$0xff]
    %v2201 = vld [vmem:[%s2199 + $0x8] sm:$0xff]
    %v2202 = vld [vmem:[%s2199 + $0x10] sm:$0xff]
    %v2203 = vld [vmem:[%s2199 + $0x18] sm:$0xff]
    %v2204 = vld [vmem:[%s2199 + $0x20] sm:$0xff]
    %v2205 = vld [vmem:[%s2199 + $0x28] sm:$0xff]
    %v2206 = vld [vmem:[%s2199 + $0x30] sm:$0xff]
    %v2207 = vld [vmem:[%s2199 + $0x38] sm:$0xff]
    %v2208 = vld [vmem:[%s2199 + $0x40] sm:$0xff]
    %v2209 = vld [vmem:[%s2199 + $0x48] sm:$0xff]
    %v2210 = vld [vmem:[%s2199 + $0x50] sm:$0xff]
    %v2211 = vld [vmem:[%s2199 + $0x58] sm:$0xff]
    %v2212 = vld [vmem:[%s2199 + $0x60] sm:$0xff]
    %v2213 = vld [vmem:[%s2199 + $0x68] sm:$0xff]
    %v2214 = vld [vmem:[%s2199 + $0x70] sm:$0xff]
    %v2215 = vld [vmem:[%s2199 + $0x78] sm:$0xff]
    %2216 = vmatprep.subr.mxu0 0.0
    %2217 = vmatpush1.msra.mxu0 %v2215
    %2218 = vmatprep.subr.mxu0 0.0
    %2219 = vmatpush1.msra.mxu0 %v2214
    %2220 = vmatprep.subr.mxu0 0.0
    %2221 = vmatpush1.msra.mxu0 %v2213
    %2222 = vmatprep.subr.mxu0 0.0
    %2223 = vmatpush1.msra.mxu0 %v2212
    %2224 = vmatprep.subr.mxu0 0.0
    %2225 = vmatpush1.msra.mxu0 %v2211
    %2226 = vmatprep.subr.mxu0 0.0
    %2227 = vmatpush1.msra.mxu0 %v2210
    %2228 = vmatprep.subr.mxu0 0.0
    %2229 = vmatpush1.msra.mxu0 %v2209
    %2230 = vmatprep.subr.mxu0 0.0
    %2231 = vmatpush1.msra.mxu0 %v2208
    %2232 = vmatprep.subr.mxu0 0.0
    %2233 = vmatpush1.msra.mxu0 %v2207
    %2234 = vmatprep.subr.mxu0 0.0
    %2235 = vmatpush1.msra.mxu0 %v2206
    %2236 = vmatprep.subr.mxu0 0.0
    %2237 = vmatpush1.msra.mxu0 %v2205
    %2238 = vmatprep.subr.mxu0 0.0
    %2239 = vmatpush1.msra.mxu0 %v2204
    %2240 = vmatprep.subr.mxu0 0.0
    %2241 = vmatpush1.msra.mxu0 %v2203
    %2242 = vmatprep.subr.mxu0 0.0
    %2243 = vmatpush1.msra.mxu0 %v2202
    %2244 = vmatprep.subr.mxu0 0.0
    %2245 = vmatpush1.msra.mxu0 %v2201
    %2246 = vmatprep.subr.mxu0 0.0
    %2247 = vmatpush1.msra.mxu0 %v2200
    %2248 = vmatprep.subr.mxu0 0.0
    %2249 = vmatpush2.msra.mxu0 0.0
    %2250 = vmatprep.subr.mxu0 0.0
    %2251 = vmatpush2.msra.mxu0 0.0
    %2252 = vmatprep.subr.mxu0 0.0
    %2253 = vmatpush2.msra.mxu0 0.0
    %2254 = vmatprep.subr.mxu0 0.0
    %2255 = vmatpush2.msra.mxu0 0.0
    %2256 = vmatprep.subr.mxu0 0.0
    %2257 = vmatpush2.msra.mxu0 0.0
    %2258 = vmatprep.subr.mxu0 0.0
    %2259 = vmatpush2.msra.mxu0 0.0
    %2260 = vmatprep.subr.mxu0 0.0
    %2261 = vmatpush2.msra.mxu0 0.0
    %2262 = vmatprep.subr.mxu0 0.0
    %2263 = vmatpush2.msra.mxu0 0.0
    %2264 = vmatprep.subr.mxu0 0.0
    %2265 = vmatpush2.msra.mxu0 0.0
    %2266 = vmatprep.subr.mxu0 0.0
    %2267 = vmatpush2.msra.mxu0 0.0
    %2268 = vmatprep.subr.mxu0 0.0
    %2269 = vmatpush2.msra.mxu0 0.0
    %2270 = vmatprep.subr.mxu0 0.0
    %2271 = vmatpush2.msra.mxu0 0.0
    %2272 = vmatprep.subr.mxu0 0.0
    %2273 = vmatpush2.msra.mxu0 0.0
    %2274 = vmatprep.subr.mxu0 0.0
    %2275 = vmatpush2.msra.mxu0 0.0
    %2276 = vmatprep.subr.mxu0 0.0
    %2277 = vmatpush2.msra.mxu0 0.0
    %2278 = vmatprep.subr.mxu0 0.0
    %2279 = vmatpush2.msra.mxu0 0.0
    %2280 = vmatprep.mubr.f32.mxu0 0.0
    %2281 = vmatmul.mubr.f32.gmra.mxu0 %v127
    %v2282 = vpop.f32.mrf.mxu0
    %v2283 = vadd.f32 0.0, %v2282
    %v2284 = vpop.f32.mrf.mxu0
    %2285 = vdwg.mxu0
    %s2286 = scalar_lea.vmem %s3, 192
    %v2287 = vld [vmem:[%s2286] sm:$0xff]
    %v2288 = vld [vmem:[%s2286 + $0x8] sm:$0xff]
    %v2290 = vsel %vm306, %v2287, 0
    %v2293 = vsel %vm306, %v2288, 0
    %2295 = vmatprep.subr.mxu0 0.0
    %2296 = vmatpush1.msra.mxu0 0.0
    %2297 = vmatprep.subr.mxu0 0.0
    %2298 = vmatpush1.msra.mxu0 0.0
    %2299 = vmatprep.subr.mxu0 0.0
    %2300 = vmatpush1.msra.mxu0 0.0
    %2301 = vmatprep.subr.mxu0 0.0
    %2302 = vmatpush1.msra.mxu0 0.0
    %2303 = vmatprep.subr.mxu0 0.0
    %2304 = vmatpush1.msra.mxu0 0.0
    %2305 = vmatprep.subr.mxu0 0.0
    %2306 = vmatpush1.msra.mxu0 0.0
    %2307 = vmatprep.subr.mxu0 0.0
    %2308 = vmatpush1.msra.mxu0 0.0
    %2309 = vmatprep.subr.mxu0 0.0
    %2310 = vmatpush1.msra.mxu0 0.0
    %2311 = vmatprep.subr.mxu0 0.0
    %2312 = vmatpush1.msra.mxu0 0.0
    %2313 = vmatprep.subr.mxu0 0.0
    %2314 = vmatpush1.msra.mxu0 0.0
    %2315 = vmatprep.subr.mxu0 0.0
    %2316 = vmatpush1.msra.mxu0 0.0
    %2317 = vmatprep.subr.mxu0 0.0
    %2318 = vmatpush1.msra.mxu0 0.0
    %2319 = vmatprep.subr.mxu0 0.0
    %2320 = vmatpush1.msra.mxu0 0.0
    %2321 = vmatprep.subr.mxu0 0.0
    %2322 = vmatpush1.msra.mxu0 0.0
    %2323 = vmatprep.subr.mxu0 0.0
    %2324 = vmatpush1.msra.mxu0 0.0
    %2325 = vmatprep.subr.mxu0 0.0
    %2326 = vmatpush1.msra.mxu0 %v2283
    %2327 = vmatprep.subr.mxu0 0.0
    %2328 = vmatpush2.msra.mxu0 0.0
    %2329 = vmatprep.subr.mxu0 0.0
    %2330 = vmatpush2.msra.mxu0 0.0
    %2331 = vmatprep.subr.mxu0 0.0
    %2332 = vmatpush2.msra.mxu0 0.0
    %2333 = vmatprep.subr.mxu0 0.0
    %2334 = vmatpush2.msra.mxu0 0.0
    %2335 = vmatprep.subr.mxu0 0.0
    %2336 = vmatpush2.msra.mxu0 0.0
    %2337 = vmatprep.subr.mxu0 0.0
    %2338 = vmatpush2.msra.mxu0 0.0
    %2339 = vmatprep.subr.mxu0 0.0
    %2340 = vmatpush2.msra.mxu0 0.0
    %2341 = vmatprep.subr.mxu0 0.0
    %2342 = vmatpush2.msra.mxu0 0.0
    %2343 = vmatprep.subr.mxu0 0.0
    %2344 = vmatpush2.msra.mxu0 0.0
    %2345 = vmatprep.subr.mxu0 0.0
    %2346 = vmatpush2.msra.mxu0 0.0
    %2347 = vmatprep.subr.mxu0 0.0
    %2348 = vmatpush2.msra.mxu0 0.0
    %2349 = vmatprep.subr.mxu0 0.0
    %2350 = vmatpush2.msra.mxu0 0.0
    %2351 = vmatprep.subr.mxu0 0.0
    %2352 = vmatpush2.msra.mxu0 0.0
    %2353 = vmatprep.subr.mxu0 0.0
    %2354 = vmatpush2.msra.mxu0 0.0
    %2355 = vmatprep.subr.mxu0 0.0
    %2356 = vmatpush2.msra.mxu0 0.0
    %2357 = vmatprep.subr.mxu0 0.0
    %2358 = vmatpush2.msra.mxu0 0.0
    %2359 = vmatprep.mubr.f32.mxu0 0.0
    %2360 = vmatmul.mubr.f32.gmra.mxu0 %v2290
    %v2361 = vpop.f32.mrf.mxu0
    %v2362 = vadd.f32 0.0, %v2361
    %v2363 = vpop.f32.mrf.mxu0
    %2364 = vmatprep.mubr.f32.mxu0 0.0
    %2365 = vmatmul.mubr.f32.gmra.mxu0 %v2293
    %v2366 = vpop.f32.mrf.mxu0
    %v2367 = vadd.f32 0.0, %v2366
    %v2368 = vpop.f32.mrf.mxu0
    %2369 = vdwg.mxu0
    %v2370 = vadd.f32 %v2197, %v2362
    %v2371 = vadd.f32 %v2198, %v2367
    %s2372 = scalar_lea.vmem %s4, 1664
    %v2373 = vld [vmem:[%s2372] sm:$0xff]
    %v2374 = vld [vmem:[%s2372 + $0x8] sm:$0xff]
    %v2375 = vld [vmem:[%s2372 + $0x10] sm:$0xff]
    %v2376 = vld [vmem:[%s2372 + $0x18] sm:$0xff]
    %v2377 = vld [vmem:[%s2372 + $0x20] sm:$0xff]
    %v2378 = vld [vmem:[%s2372 + $0x28] sm:$0xff]
    %v2379 = vld [vmem:[%s2372 + $0x30] sm:$0xff]
    %v2380 = vld [vmem:[%s2372 + $0x38] sm:$0xff]
    %v2381 = vld [vmem:[%s2372 + $0x40] sm:$0xff]
    %v2382 = vld [vmem:[%s2372 + $0x48] sm:$0xff]
    %v2383 = vld [vmem:[%s2372 + $0x50] sm:$0xff]
    %v2384 = vld [vmem:[%s2372 + $0x58] sm:$0xff]
    %v2385 = vld [vmem:[%s2372 + $0x60] sm:$0xff]
    %v2386 = vld [vmem:[%s2372 + $0x68] sm:$0xff]
    %v2387 = vld [vmem:[%s2372 + $0x70] sm:$0xff]
    %v2388 = vld [vmem:[%s2372 + $0x78] sm:$0xff]
    %2389 = vmatprep.subr.mxu0 0.0
    %2390 = vmatpush1.msra.mxu0 %v2388
    %2391 = vmatprep.subr.mxu0 0.0
    %2392 = vmatpush1.msra.mxu0 %v2387
    %2393 = vmatprep.subr.mxu0 0.0
    %2394 = vmatpush1.msra.mxu0 %v2386
    %2395 = vmatprep.subr.mxu0 0.0
    %2396 = vmatpush1.msra.mxu0 %v2385
    %2397 = vmatprep.subr.mxu0 0.0
    %2398 = vmatpush1.msra.mxu0 %v2384
    %2399 = vmatprep.subr.mxu0 0.0
    %2400 = vmatpush1.msra.mxu0 %v2383
    %2401 = vmatprep.subr.mxu0 0.0
    %2402 = vmatpush1.msra.mxu0 %v2382
    %2403 = vmatprep.subr.mxu0 0.0
    %2404 = vmatpush1.msra.mxu0 %v2381
    %2405 = vmatprep.subr.mxu0 0.0
    %2406 = vmatpush1.msra.mxu0 %v2380
    %2407 = vmatprep.subr.mxu0 0.0
    %2408 = vmatpush1.msra.mxu0 %v2379
    %2409 = vmatprep.subr.mxu0 0.0
    %2410 = vmatpush1.msra.mxu0 %v2378
    %2411 = vmatprep.subr.mxu0 0.0
    %2412 = vmatpush1.msra.mxu0 %v2377
    %2413 = vmatprep.subr.mxu0 0.0
    %2414 = vmatpush1.msra.mxu0 %v2376
    %2415 = vmatprep.subr.mxu0 0.0
    %2416 = vmatpush1.msra.mxu0 %v2375
    %2417 = vmatprep.subr.mxu0 0.0
    %2418 = vmatpush1.msra.mxu0 %v2374
    %2419 = vmatprep.subr.mxu0 0.0
    %2420 = vmatpush1.msra.mxu0 %v2373
    %2421 = vmatprep.subr.mxu0 0.0
    %2422 = vmatpush2.msra.mxu0 0.0
    %2423 = vmatprep.subr.mxu0 0.0
    %2424 = vmatpush2.msra.mxu0 0.0
    %2425 = vmatprep.subr.mxu0 0.0
    %2426 = vmatpush2.msra.mxu0 0.0
    %2427 = vmatprep.subr.mxu0 0.0
    %2428 = vmatpush2.msra.mxu0 0.0
    %2429 = vmatprep.subr.mxu0 0.0
    %2430 = vmatpush2.msra.mxu0 0.0
    %2431 = vmatprep.subr.mxu0 0.0
    %2432 = vmatpush2.msra.mxu0 0.0
    %2433 = vmatprep.subr.mxu0 0.0
    %2434 = vmatpush2.msra.mxu0 0.0
    %2435 = vmatprep.subr.mxu0 0.0
    %2436 = vmatpush2.msra.mxu0 0.0
    %2437 = vmatprep.subr.mxu0 0.0
    %2438 = vmatpush2.msra.mxu0 0.0
    %2439 = vmatprep.subr.mxu0 0.0
    %2440 = vmatpush2.msra.mxu0 0.0
    %2441 = vmatprep.subr.mxu0 0.0
    %2442 = vmatpush2.msra.mxu0 0.0
    %2443 = vmatprep.subr.mxu0 0.0
    %2444 = vmatpush2.msra.mxu0 0.0
    %2445 = vmatprep.subr.mxu0 0.0
    %2446 = vmatpush2.msra.mxu0 0.0
    %2447 = vmatprep.subr.mxu0 0.0
    %2448 = vmatpush2.msra.mxu0 0.0
    %2449 = vmatprep.subr.mxu0 0.0
    %2450 = vmatpush2.msra.mxu0 0.0
    %2451 = vmatprep.subr.mxu0 0.0
    %2452 = vmatpush2.msra.mxu0 0.0
    %2453 = vmatprep.mubr.f32.mxu0 0.0
    %2454 = vmatmul.mubr.f32.gmra.mxu0 %v127
    %v2455 = vpop.f32.mrf.mxu0
    %v2456 = vadd.f32 0.0, %v2455
    %v2457 = vpop.f32.mrf.mxu0
    %2458 = vdwg.mxu0
    %s2459 = scalar_lea.vmem %s3, 208
    %v2460 = vld [vmem:[%s2459] sm:$0xff]
    %v2461 = vld [vmem:[%s2459 + $0x8] sm:$0xff]
    %v2463 = vsel %vm306, %v2460, 0
    %v2466 = vsel %vm306, %v2461, 0
    %2468 = vmatprep.subr.mxu0 0.0
    %2469 = vmatpush1.msra.mxu0 0.0
    %2470 = vmatprep.subr.mxu0 0.0
    %2471 = vmatpush1.msra.mxu0 0.0
    %2472 = vmatprep.subr.mxu0 0.0
    %2473 = vmatpush1.msra.mxu0 0.0
    %2474 = vmatprep.subr.mxu0 0.0
    %2475 = vmatpush1.msra.mxu0 0.0
    %2476 = vmatprep.subr.mxu0 0.0
    %2477 = vmatpush1.msra.mxu0 0.0
    %2478 = vmatprep.subr.mxu0 0.0
    %2479 = vmatpush1.msra.mxu0 0.0
    %2480 = vmatprep.subr.mxu0 0.0
    %2481 = vmatpush1.msra.mxu0 0.0
    %2482 = vmatprep.subr.mxu0 0.0
    %2483 = vmatpush1.msra.mxu0 0.0
    %2484 = vmatprep.subr.mxu0 0.0
    %2485 = vmatpush1.msra.mxu0 0.0
    %2486 = vmatprep.subr.mxu0 0.0
    %2487 = vmatpush1.msra.mxu0 0.0
    %2488 = vmatprep.subr.mxu0 0.0
    %2489 = vmatpush1.msra.mxu0 0.0
    %2490 = vmatprep.subr.mxu0 0.0
    %2491 = vmatpush1.msra.mxu0 0.0
    %2492 = vmatprep.subr.mxu0 0.0
    %2493 = vmatpush1.msra.mxu0 0.0
    %2494 = vmatprep.subr.mxu0 0.0
    %2495 = vmatpush1.msra.mxu0 0.0
    %2496 = vmatprep.subr.mxu0 0.0
    %2497 = vmatpush1.msra.mxu0 0.0
    %2498 = vmatprep.subr.mxu0 0.0
    %2499 = vmatpush1.msra.mxu0 %v2456
    %2500 = vmatprep.subr.mxu0 0.0
    %2501 = vmatpush2.msra.mxu0 0.0
    %2502 = vmatprep.subr.mxu0 0.0
    %2503 = vmatpush2.msra.mxu0 0.0
    %2504 = vmatprep.subr.mxu0 0.0
    %2505 = vmatpush2.msra.mxu0 0.0
    %2506 = vmatprep.subr.mxu0 0.0
    %2507 = vmatpush2.msra.mxu0 0.0
    %2508 = vmatprep.subr.mxu0 0.0
    %2509 = vmatpush2.msra.mxu0 0.0
    %2510 = vmatprep.subr.mxu0 0.0
    %2511 = vmatpush2.msra.mxu0 0.0
    %2512 = vmatprep.subr.mxu0 0.0
    %2513 = vmatpush2.msra.mxu0 0.0
    %2514 = vmatprep.subr.mxu0 0.0
    %2515 = vmatpush2.msra.mxu0 0.0
    %2516 = vmatprep.subr.mxu0 0.0
    %2517 = vmatpush2.msra.mxu0 0.0
    %2518 = vmatprep.subr.mxu0 0.0
    %2519 = vmatpush2.msra.mxu0 0.0
    %2520 = vmatprep.subr.mxu0 0.0
    %2521 = vmatpush2.msra.mxu0 0.0
    %2522 = vmatprep.subr.mxu0 0.0
    %2523 = vmatpush2.msra.mxu0 0.0
    %2524 = vmatprep.subr.mxu0 0.0
    %2525 = vmatpush2.msra.mxu0 0.0
    %2526 = vmatprep.subr.mxu0 0.0
    %2527 = vmatpush2.msra.mxu0 0.0
    %2528 = vmatprep.subr.mxu0 0.0
    %2529 = vmatpush2.msra.mxu0 0.0
    %2530 = vmatprep.subr.mxu0 0.0
    %2531 = vmatpush2.msra.mxu0 0.0
    %2532 = vmatprep.mubr.f32.mxu0 0.0
    %2533 = vmatmul.mubr.f32.gmra.mxu0 %v2463
    %v2534 = vpop.f32.mrf.mxu0
    %v2535 = vadd.f32 0.0, %v2534
    %v2536 = vpop.f32.mrf.mxu0
    %2537 = vmatprep.mubr.f32.mxu0 0.0
    %2538 = vmatmul.mubr.f32.gmra.mxu0 %v2466
    %v2539 = vpop.f32.mrf.mxu0
    %v2540 = vadd.f32 0.0, %v2539
    %v2541 = vpop.f32.mrf.mxu0
    %2542 = vdwg.mxu0
    %v2543 = vadd.f32 %v2370, %v2535
    %v2544 = vadd.f32 %v2371, %v2540
    %s2545 = scalar_lea.vmem %s4, 1792
    %v2546 = vld [vmem:[%s2545] sm:$0xff]
    %v2547 = vld [vmem:[%s2545 + $0x8] sm:$0xff]
    %v2548 = vld [vmem:[%s2545 + $0x10] sm:$0xff]
    %v2549 = vld [vmem:[%s2545 + $0x18] sm:$0xff]
    %v2550 = vld [vmem:[%s2545 + $0x20] sm:$0xff]
    %v2551 = vld [vmem:[%s2545 + $0x28] sm:$0xff]
    %v2552 = vld [vmem:[%s2545 + $0x30] sm:$0xff]
    %v2553 = vld [vmem:[%s2545 + $0x38] sm:$0xff]
    %v2554 = vld [vmem:[%s2545 + $0x40] sm:$0xff]
    %v2555 = vld [vmem:[%s2545 + $0x48] sm:$0xff]
    %v2556 = vld [vmem:[%s2545 + $0x50] sm:$0xff]
    %v2557 = vld [vmem:[%s2545 + $0x58] sm:$0xff]
    %v2558 = vld [vmem:[%s2545 + $0x60] sm:$0xff]
    %v2559 = vld [vmem:[%s2545 + $0x68] sm:$0xff]
    %v2560 = vld [vmem:[%s2545 + $0x70] sm:$0xff]
    %v2561 = vld [vmem:[%s2545 + $0x78] sm:$0xff]
    %2562 = vmatprep.subr.mxu0 0.0
    %2563 = vmatpush1.msra.mxu0 %v2561
    %2564 = vmatprep.subr.mxu0 0.0
    %2565 = vmatpush1.msra.mxu0 %v2560
    %2566 = vmatprep.subr.mxu0 0.0
    %2567 = vmatpush1.msra.mxu0 %v2559
    %2568 = vmatprep.subr.mxu0 0.0
    %2569 = vmatpush1.msra.mxu0 %v2558
    %2570 = vmatprep.subr.mxu0 0.0
    %2571 = vmatpush1.msra.mxu0 %v2557
    %2572 = vmatprep.subr.mxu0 0.0
    %2573 = vmatpush1.msra.mxu0 %v2556
    %2574 = vmatprep.subr.mxu0 0.0
    %2575 = vmatpush1.msra.mxu0 %v2555
    %2576 = vmatprep.subr.mxu0 0.0
    %2577 = vmatpush1.msra.mxu0 %v2554
    %2578 = vmatprep.subr.mxu0 0.0
    %2579 = vmatpush1.msra.mxu0 %v2553
    %2580 = vmatprep.subr.mxu0 0.0
    %2581 = vmatpush1.msra.mxu0 %v2552
    %2582 = vmatprep.subr.mxu0 0.0
    %2583 = vmatpush1.msra.mxu0 %v2551
    %2584 = vmatprep.subr.mxu0 0.0
    %2585 = vmatpush1.msra.mxu0 %v2550
    %2586 = vmatprep.subr.mxu0 0.0
    %2587 = vmatpush1.msra.mxu0 %v2549
    %2588 = vmatprep.subr.mxu0 0.0
    %2589 = vmatpush1.msra.mxu0 %v2548
    %2590 = vmatprep.subr.mxu0 0.0
    %2591 = vmatpush1.msra.mxu0 %v2547
    %2592 = vmatprep.subr.mxu0 0.0
    %2593 = vmatpush1.msra.mxu0 %v2546
    %2594 = vmatprep.subr.mxu0 0.0
    %2595 = vmatpush2.msra.mxu0 0.0
    %2596 = vmatprep.subr.mxu0 0.0
    %2597 = vmatpush2.msra.mxu0 0.0
    %2598 = vmatprep.subr.mxu0 0.0
    %2599 = vmatpush2.msra.mxu0 0.0
    %2600 = vmatprep.subr.mxu0 0.0
    %2601 = vmatpush2.msra.mxu0 0.0
    %2602 = vmatprep.subr.mxu0 0.0
    %2603 = vmatpush2.msra.mxu0 0.0
    %2604 = vmatprep.subr.mxu0 0.0
    %2605 = vmatpush2.msra.mxu0 0.0
    %2606 = vmatprep.subr.mxu0 0.0
    %2607 = vmatpush2.msra.mxu0 0.0
    %2608 = vmatprep.subr.mxu0 0.0
    %2609 = vmatpush2.msra.mxu0 0.0
    %2610 = vmatprep.subr.mxu0 0.0
    %2611 = vmatpush2.msra.mxu0 0.0
    %2612 = vmatprep.subr.mxu0 0.0
    %2613 = vmatpush2.msra.mxu0 0.0
    %2614 = vmatprep.subr.mxu0 0.0
    %2615 = vmatpush2.msra.mxu0 0.0
    %2616 = vmatprep.subr.mxu0 0.0
    %2617 = vmatpush2.msra.mxu0 0.0
    %2618 = vmatprep.subr.mxu0 0.0
    %2619 = vmatpush2.msra.mxu0 0.0
    %2620 = vmatprep.subr.mxu0 0.0
    %2621 = vmatpush2.msra.mxu0 0.0
    %2622 = vmatprep.subr.mxu0 0.0
    %2623 = vmatpush2.msra.mxu0 0.0
    %2624 = vmatprep.subr.mxu0 0.0
    %2625 = vmatpush2.msra.mxu0 0.0
    %2626 = vmatprep.mubr.f32.mxu0 0.0
    %2627 = vmatmul.mubr.f32.gmra.mxu0 %v127
    %v2628 = vpop.f32.mrf.mxu0
    %v2629 = vadd.f32 0.0, %v2628
    %v2630 = vpop.f32.mrf.mxu0
    %2631 = vdwg.mxu0
    %s2632 = scalar_lea.vmem %s3, 224
    %v2633 = vld [vmem:[%s2632] sm:$0xff]
    %v2634 = vld [vmem:[%s2632 + $0x8] sm:$0xff]
    %v2636 = vsel %vm306, %v2633, 0
    %v2639 = vsel %vm306, %v2634, 0
    %2641 = vmatprep.subr.mxu0 0.0
    %2642 = vmatpush1.msra.mxu0 0.0
    %2643 = vmatprep.subr.mxu0 0.0
    %2644 = vmatpush1.msra.mxu0 0.0
    %2645 = vmatprep.subr.mxu0 0.0
    %2646 = vmatpush1.msra.mxu0 0.0
    %2647 = vmatprep.subr.mxu0 0.0
    %2648 = vmatpush1.msra.mxu0 0.0
    %2649 = vmatprep.subr.mxu0 0.0
    %2650 = vmatpush1.msra.mxu0 0.0
    %2651 = vmatprep.subr.mxu0 0.0
    %2652 = vmatpush1.msra.mxu0 0.0
    %2653 = vmatprep.subr.mxu0 0.0
    %2654 = vmatpush1.msra.mxu0 0.0
    %2655 = vmatprep.subr.mxu0 0.0
    %2656 = vmatpush1.msra.mxu0 0.0
    %2657 = vmatprep.subr.mxu0 0.0
    %2658 = vmatpush1.msra.mxu0 0.0
    %2659 = vmatprep.subr.mxu0 0.0
    %2660 = vmatpush1.msra.mxu0 0.0
    %2661 = vmatprep.subr.mxu0 0.0
    %2662 = vmatpush1.msra.mxu0 0.0
    %2663 = vmatprep.subr.mxu0 0.0
    %2664 = vmatpush1.msra.mxu0 0.0
    %2665 = vmatprep.subr.mxu0 0.0
    %2666 = vmatpush1.msra.mxu0 0.0
    %2667 = vmatprep.subr.mxu0 0.0
    %2668 = vmatpush1.msra.mxu0 0.0
    %2669 = vmatprep.subr.mxu0 0.0
    %2670 = vmatpush1.msra.mxu0 0.0
    %2671 = vmatprep.subr.mxu0 0.0
    %2672 = vmatpush1.msra.mxu0 %v2629
    %2673 = vmatprep.subr.mxu0 0.0
    %2674 = vmatpush2.msra.mxu0 0.0
    %2675 = vmatprep.subr.mxu0 0.0
    %2676 = vmatpush2.msra.mxu0 0.0
    %2677 = vmatprep.subr.mxu0 0.0
    %2678 = vmatpush2.msra.mxu0 0.0
    %2679 = vmatprep.subr.mxu0 0.0
    %2680 = vmatpush2.msra.mxu0 0.0
    %2681 = vmatprep.subr.mxu0 0.0
    %2682 = vmatpush2.msra.mxu0 0.0
    %2683 = vmatprep.subr.mxu0 0.0
    %2684 = vmatpush2.msra.mxu0 0.0
    %2685 = vmatprep.subr.mxu0 0.0
    %2686 = vmatpush2.msra.mxu0 0.0
    %2687 = vmatprep.subr.mxu0 0.0
    %2688 = vmatpush2.msra.mxu0 0.0
    %2689 = vmatprep.subr.mxu0 0.0
    %2690 = vmatpush2.msra.mxu0 0.0
    %2691 = vmatprep.subr.mxu0 0.0
    %2692 = vmatpush2.msra.mxu0 0.0
    %2693 = vmatprep.subr.mxu0 0.0
    %2694 = vmatpush2.msra.mxu0 0.0
    %2695 = vmatprep.subr.mxu0 0.0
    %2696 = vmatpush2.msra.mxu0 0.0
    %2697 = vmatprep.subr.mxu0 0.0
    %2698 = vmatpush2.msra.mxu0 0.0
    %2699 = vmatprep.subr.mxu0 0.0
    %2700 = vmatpush2.msra.mxu0 0.0
    %2701 = vmatprep.subr.mxu0 0.0
    %2702 = vmatpush2.msra.mxu0 0.0
    %2703 = vmatprep.subr.mxu0 0.0
    %2704 = vmatpush2.msra.mxu0 0.0
    %2705 = vmatprep.mubr.f32.mxu0 0.0
    %2706 = vmatmul.mubr.f32.gmra.mxu0 %v2636
    %v2707 = vpop.f32.mrf.mxu0
    %v2708 = vadd.f32 0.0, %v2707
    %v2709 = vpop.f32.mrf.mxu0
    %2710 = vmatprep.mubr.f32.mxu0 0.0
    %2711 = vmatmul.mubr.f32.gmra.mxu0 %v2639
    %v2712 = vpop.f32.mrf.mxu0
    %v2713 = vadd.f32 0.0, %v2712
    %v2714 = vpop.f32.mrf.mxu0
    %2715 = vdwg.mxu0
    %v2716 = vadd.f32 %v2543, %v2708
    %v2717 = vadd.f32 %v2544, %v2713
    %s2718 = scalar_lea.vmem %s4, 1920
    %v2719 = vld [vmem:[%s2718] sm:$0xff]
    %v2720 = vld [vmem:[%s2718 + $0x8] sm:$0xff]
    %v2721 = vld [vmem:[%s2718 + $0x10] sm:$0xff]
    %v2722 = vld [vmem:[%s2718 + $0x18] sm:$0xff]
    %v2723 = vld [vmem:[%s2718 + $0x20] sm:$0xff]
    %v2724 = vld [vmem:[%s2718 + $0x28] sm:$0xff]
    %v2725 = vld [vmem:[%s2718 + $0x30] sm:$0xff]
    %v2726 = vld [vmem:[%s2718 + $0x38] sm:$0xff]
    %v2727 = vld [vmem:[%s2718 + $0x40] sm:$0xff]
    %v2728 = vld [vmem:[%s2718 + $0x48] sm:$0xff]
    %v2729 = vld [vmem:[%s2718 + $0x50] sm:$0xff]
    %v2730 = vld [vmem:[%s2718 + $0x58] sm:$0xff]
    %v2731 = vld [vmem:[%s2718 + $0x60] sm:$0xff]
    %v2732 = vld [vmem:[%s2718 + $0x68] sm:$0xff]
    %v2733 = vld [vmem:[%s2718 + $0x70] sm:$0xff]
    %v2734 = vld [vmem:[%s2718 + $0x78] sm:$0xff]
    %2735 = vmatprep.subr.mxu0 0.0
    %2736 = vmatpush1.msra.mxu0 %v2734
    %2737 = vmatprep.subr.mxu0 0.0
    %2738 = vmatpush1.msra.mxu0 %v2733
    %2739 = vmatprep.subr.mxu0 0.0
    %2740 = vmatpush1.msra.mxu0 %v2732
    %2741 = vmatprep.subr.mxu0 0.0
    %2742 = vmatpush1.msra.mxu0 %v2731
    %2743 = vmatprep.subr.mxu0 0.0
    %2744 = vmatpush1.msra.mxu0 %v2730
    %2745 = vmatprep.subr.mxu0 0.0
    %2746 = vmatpush1.msra.mxu0 %v2729
    %2747 = vmatprep.subr.mxu0 0.0
    %2748 = vmatpush1.msra.mxu0 %v2728
    %2749 = vmatprep.subr.mxu0 0.0
    %2750 = vmatpush1.msra.mxu0 %v2727
    %2751 = vmatprep.subr.mxu0 0.0
    %2752 = vmatpush1.msra.mxu0 %v2726
    %2753 = vmatprep.subr.mxu0 0.0
    %2754 = vmatpush1.msra.mxu0 %v2725
    %2755 = vmatprep.subr.mxu0 0.0
    %2756 = vmatpush1.msra.mxu0 %v2724
    %2757 = vmatprep.subr.mxu0 0.0
    %2758 = vmatpush1.msra.mxu0 %v2723
    %2759 = vmatprep.subr.mxu0 0.0
    %2760 = vmatpush1.msra.mxu0 %v2722
    %2761 = vmatprep.subr.mxu0 0.0
    %2762 = vmatpush1.msra.mxu0 %v2721
    %2763 = vmatprep.subr.mxu0 0.0
    %2764 = vmatpush1.msra.mxu0 %v2720
    %2765 = vmatprep.subr.mxu0 0.0
    %2766 = vmatpush1.msra.mxu0 %v2719
    %2767 = vmatprep.subr.mxu0 0.0
    %2768 = vmatpush2.msra.mxu0 0.0
    %2769 = vmatprep.subr.mxu0 0.0
    %2770 = vmatpush2.msra.mxu0 0.0
    %2771 = vmatprep.subr.mxu0 0.0
    %2772 = vmatpush2.msra.mxu0 0.0
    %2773 = vmatprep.subr.mxu0 0.0
    %2774 = vmatpush2.msra.mxu0 0.0
    %2775 = vmatprep.subr.mxu0 0.0
    %2776 = vmatpush2.msra.mxu0 0.0
    %2777 = vmatprep.subr.mxu0 0.0
    %2778 = vmatpush2.msra.mxu0 0.0
    %2779 = vmatprep.subr.mxu0 0.0
    %2780 = vmatpush2.msra.mxu0 0.0
    %2781 = vmatprep.subr.mxu0 0.0
    %2782 = vmatpush2.msra.mxu0 0.0
    %2783 = vmatprep.subr.mxu0 0.0
    %2784 = vmatpush2.msra.mxu0 0.0
    %2785 = vmatprep.subr.mxu0 0.0
    %2786 = vmatpush2.msra.mxu0 0.0
    %2787 = vmatprep.subr.mxu0 0.0
    %2788 = vmatpush2.msra.mxu0 0.0
    %2789 = vmatprep.subr.mxu0 0.0
    %2790 = vmatpush2.msra.mxu0 0.0
    %2791 = vmatprep.subr.mxu0 0.0
    %2792 = vmatpush2.msra.mxu0 0.0
    %2793 = vmatprep.subr.mxu0 0.0
    %2794 = vmatpush2.msra.mxu0 0.0
    %2795 = vmatprep.subr.mxu0 0.0
    %2796 = vmatpush2.msra.mxu0 0.0
    %2797 = vmatprep.subr.mxu0 0.0
    %2798 = vmatpush2.msra.mxu0 0.0
    %2799 = vmatprep.mubr.f32.mxu0 0.0
    %2800 = vmatmul.mubr.f32.gmra.mxu0 %v127
    %v2801 = vpop.f32.mrf.mxu0
    %v2802 = vadd.f32 0.0, %v2801
    %v2803 = vpop.f32.mrf.mxu0
    %2804 = vdwg.mxu0
    %s2805 = scalar_lea.vmem %s3, 240
    %v2806 = vld [vmem:[%s2805] sm:$0xff]
    %v2807 = vld [vmem:[%s2805 + $0x8] sm:$0xff]
    %v2809 = vsel %vm306, %v2806, 0
    %v2812 = vsel %vm306, %v2807, 0
    %2814 = vmatprep.subr.mxu0 0.0
    %2815 = vmatpush1.msra.mxu0 0.0
    %2816 = vmatprep.subr.mxu0 0.0
    %2817 = vmatpush1.msra.mxu0 0.0
    %2818 = vmatprep.subr.mxu0 0.0
    %2819 = vmatpush1.msra.mxu0 0.0
    %2820 = vmatprep.subr.mxu0 0.0
    %2821 = vmatpush1.msra.mxu0 0.0
    %2822 = vmatprep.subr.mxu0 0.0
    %2823 = vmatpush1.msra.mxu0 0.0
    %2824 = vmatprep.subr.mxu0 0.0
    %2825 = vmatpush1.msra.mxu0 0.0
    %2826 = vmatprep.subr.mxu0 0.0
    %2827 = vmatpush1.msra.mxu0 0.0
    %2828 = vmatprep.subr.mxu0 0.0
    %2829 = vmatpush1.msra.mxu0 0.0
    %2830 = vmatprep.subr.mxu0 0.0
    %2831 = vmatpush1.msra.mxu0 0.0
    %2832 = vmatprep.subr.mxu0 0.0
    %2833 = vmatpush1.msra.mxu0 0.0
    %2834 = vmatprep.subr.mxu0 0.0
    %2835 = vmatpush1.msra.mxu0 0.0
    %2836 = vmatprep.subr.mxu0 0.0
    %2837 = vmatpush1.msra.mxu0 0.0
    %2838 = vmatprep.subr.mxu0 0.0
    %2839 = vmatpush1.msra.mxu0 0.0
    %2840 = vmatprep.subr.mxu0 0.0
    %2841 = vmatpush1.msra.mxu0 0.0
    %2842 = vmatprep.subr.mxu0 0.0
    %2843 = vmatpush1.msra.mxu0 0.0
    %2844 = vmatprep.subr.mxu0 0.0
    %2845 = vmatpush1.msra.mxu0 %v2802
    %2846 = vmatprep.subr.mxu0 0.0
    %2847 = vmatpush2.msra.mxu0 0.0
    %2848 = vmatprep.subr.mxu0 0.0
    %2849 = vmatpush2.msra.mxu0 0.0
    %2850 = vmatprep.subr.mxu0 0.0
    %2851 = vmatpush2.msra.mxu0 0.0
    %2852 = vmatprep.subr.mxu0 0.0
    %2853 = vmatpush2.msra.mxu0 0.0
    %2854 = vmatprep.subr.mxu0 0.0
    %2855 = vmatpush2.msra.mxu0 0.0
    %2856 = vmatprep.subr.mxu0 0.0
    %2857 = vmatpush2.msra.mxu0 0.0
    %2858 = vmatprep.subr.mxu0 0.0
    %2859 = vmatpush2.msra.mxu0 0.0
    %2860 = vmatprep.subr.mxu0 0.0
    %2861 = vmatpush2.msra.mxu0 0.0
    %2862 = vmatprep.subr.mxu0 0.0
    %2863 = vmatpush2.msra.mxu0 0.0
    %2864 = vmatprep.subr.mxu0 0.0
    %2865 = vmatpush2.msra.mxu0 0.0
    %2866 = vmatprep.subr.mxu0 0.0
    %2867 = vmatpush2.msra.mxu0 0.0
    %2868 = vmatprep.subr.mxu0 0.0
    %2869 = vmatpush2.msra.mxu0 0.0
    %2870 = vmatprep.subr.mxu0 0.0
    %2871 = vmatpush2.msra.mxu0 0.0
    %2872 = vmatprep.subr.mxu0 0.0
    %2873 = vmatpush2.msra.mxu0 0.0
    %2874 = vmatprep.subr.mxu0 0.0
    %2875 = vmatpush2.msra.mxu0 0.0
    %2876 = vmatprep.subr.mxu0 0.0
    %2877 = vmatpush2.msra.mxu0 0.0
    %2878 = vmatprep.mubr.f32.mxu0 0.0
    %2879 = vmatmul.mubr.f32.gmra.mxu0 %v2809
    %v2880 = vpop.f32.mrf.mxu0
    %v2881 = vadd.f32 0.0, %v2880
    %v2882 = vpop.f32.mrf.mxu0
    %2883 = vmatprep.mubr.f32.mxu0 0.0
    %2884 = vmatmul.mubr.f32.gmra.mxu0 %v2812
    %v2885 = vpop.f32.mrf.mxu0
    %v2886 = vadd.f32 0.0, %v2885
    %v2887 = vpop.f32.mrf.mxu0
    %2888 = vdwg.mxu0
    %v2889 = vadd.f32 %v2716, %v2881
    %v2890 = vadd.f32 %v2717, %v2886
    %v2891 = vld [vmem:[%s5] sm:$0xff]
    %v2892 = vld [vmem:[%s5 + $0x8] sm:$0xff]
    %2894 = vset.pattern.permute.xlu0 0
    %2895 = vperm.xlu0 %2894, %v2891
    %v2896 = vpop.permute.xlu0 %2895
    %2899 = vset.pattern.permute.xlu0 0
    %2900 = vperm.xlu0 %2899, %v2892
    %v2901 = vpop.permute.xlu0 %2900
    %v2903 = vadd.f32 %v2889, %v2896
    %v2904 = vadd.f32 %v2890, %v2901
    %vm2905 = vcmp.ge.f32.partialorder %v2903, 0.0
    %vm2906 = vcmp.ge.f32.partialorder %v2904, 0.0
    %v2907 = vmul.f32 %v2903, 0.2
    %v2908 = vmul.f32 %v2904, 0.2
    %v2909 = vsel %vm2905, %v2903, %v2907
    %v2910 = vsel %vm2906, %v2904, %v2908
    %vm2911 = vcmask 261120
    %2912 = vst.msk [vmem:[#allocation3] sm:$0xff] %vm2911, %v2909
    %2913 = vst.msk [vmem:[#allocation3 + $0x8] sm:$0xff] %vm2911, %v2910
    %v2914 = vld [vmem:[%s7] sm:$0xff]
    %v2915 = vld [vmem:[%s7 + $0x8] sm:$0xff]
    %v2916 = vld [vmem:[%s7 + $0x10] sm:$0xff]
    %v2917 = vld [vmem:[%s7 + $0x18] sm:$0xff]
    %v2919 = vsel %vm2911, %v2909, 0
    %v2922 = vsel %vm2911, %v2910, 0
    %2924 = vmatprep.subr.mxu0 0.0
    %2925 = vmatpush1.msra.mxu0 0.0
    %2926 = vmatprep.subr.mxu0 0.0
    %2927 = vmatpush1.msra.mxu0 0.0
    %2928 = vmatprep.subr.mxu0 0.0
    %2929 = vmatpush1.msra.mxu0 0.0
    %2930 = vmatprep.subr.mxu0 0.0
    %2931 = vmatpush1.msra.mxu0 0.0
    %2932 = vmatprep.subr.mxu0 0.0
    %2933 = vmatpush1.msra.mxu0 0.0
    %2934 = vmatprep.subr.mxu0 0.0
    %2935 = vmatpush1.msra.mxu0 0.0
    %2936 = vmatprep.subr.mxu0 0.0
    %2937 = vmatpush1.msra.mxu0 0.0
    %2938 = vmatprep.subr.mxu0 0.0
    %2939 = vmatpush1.msra.mxu0 0.0
    %2940 = vmatprep.subr.mxu0 0.0
    %2941 = vmatpush1.msra.mxu0 0.0
    %2942 = vmatprep.subr.mxu0 0.0
    %2943 = vmatpush1.msra.mxu0 0.0
    %2944 = vmatprep.subr.mxu0 0.0
    %2945 = vmatpush1.msra.mxu0 0.0
    %2946 = vmatprep.subr.mxu0 0.0
    %2947 = vmatpush1.msra.mxu0 0.0
    %2948 = vmatprep.subr.mxu0 0.0
    %2949 = vmatpush1.msra.mxu0 %v2917
    %2950 = vmatprep.subr.mxu0 0.0
    %2951 = vmatpush1.msra.mxu0 %v2916
    %2952 = vmatprep.subr.mxu0 0.0
    %2953 = vmatpush1.msra.mxu0 %v2915
    %2954 = vmatprep.subr.mxu0 0.0
    %2955 = vmatpush1.msra.mxu0 %v2914
    %2956 = vmatprep.subr.mxu0 0.0
    %2957 = vmatpush2.msra.mxu0 0.0
    %2958 = vmatprep.subr.mxu0 0.0
    %2959 = vmatpush2.msra.mxu0 0.0
    %2960 = vmatprep.subr.mxu0 0.0
    %2961 = vmatpush2.msra.mxu0 0.0
    %2962 = vmatprep.subr.mxu0 0.0
    %2963 = vmatpush2.msra.mxu0 0.0
    %2964 = vmatprep.subr.mxu0 0.0
    %2965 = vmatpush2.msra.mxu0 0.0
    %2966 = vmatprep.subr.mxu0 0.0
    %2967 = vmatpush2.msra.mxu0 0.0
    %2968 = vmatprep.subr.mxu0 0.0
    %2969 = vmatpush2.msra.mxu0 0.0
    %2970 = vmatprep.subr.mxu0 0.0
    %2971 = vmatpush2.msra.mxu0 0.0
    %2972 = vmatprep.subr.mxu0 0.0
    %2973 = vmatpush2.msra.mxu0 0.0
    %2974 = vmatprep.subr.mxu0 0.0
    %2975 = vmatpush2.msra.mxu0 0.0
    %2976 = vmatprep.subr.mxu0 0.0
    %2977 = vmatpush2.msra.mxu0 0.0
    %2978 = vmatprep.subr.mxu0 0.0
    %2979 = vmatpush2.msra.mxu0 0.0
    %2980 = vmatprep.subr.mxu0 0.0
    %2981 = vmatpush2.msra.mxu0 0.0
    %2982 = vmatprep.subr.mxu0 0.0
    %2983 = vmatpush2.msra.mxu0 0.0
    %2984 = vmatprep.subr.mxu0 0.0
    %2985 = vmatpush2.msra.mxu0 0.0
    %2986 = vmatprep.subr.mxu0 0.0
    %2987 = vmatpush2.msra.mxu0 0.0
    %2988 = vmatprep.mubr.f32.mxu0 0.0
    %2989 = vmatmul.mubr.f32.gmra.mxu0 %v2919
    %v2990 = vpop.f32.mrf.mxu0
    %v2991 = vadd.f32 0.0, %v2990
    %v2992 = vpop.f32.mrf.mxu0
    %2993 = vmatprep.mubr.f32.mxu0 0.0
    %2994 = vmatmul.mubr.f32.gmra.mxu0 %v2922
    %v2995 = vpop.f32.mrf.mxu0
    %v2996 = vadd.f32 0.0, %v2995
    %v2997 = vpop.f32.mrf.mxu0
    %2998 = vdwg.mxu0
    %v2999 = vld [vmem:[%s6] sm:$0xff]
    %v3000 = vld [vmem:[%s6 + $0x8] sm:$0xff]
    %3002 = vset.pattern.permute.xlu0 0
    %3003 = vperm.xlu0 %3002, %v2999
    %v3004 = vpop.permute.xlu0 %3003
    %3007 = vset.pattern.permute.xlu0 0
    %3008 = vperm.xlu0 %3007, %v3000
    %v3009 = vpop.permute.xlu0 %3008
    %v3011 = vmul.f32 %v3004, %v2991
    %v3012 = vmul.f32 %v3009, %v2996
    %v3013 = vadd.f32 %v3011, 0.0
    %v3014 = vadd.f32 %v3012, 0.0
    %s3015 = scalar_lea.vmem %s7, 32
    %v3016 = vld [vmem:[%s3015] sm:$0xff]
    %v3017 = vld [vmem:[%s3015 + $0x8] sm:$0xff]
    %v3018 = vld [vmem:[%s3015 + $0x10] sm:$0xff]
    %v3019 = vld [vmem:[%s3015 + $0x18] sm:$0xff]
    %3020 = vmatprep.subr.mxu0 0.0
    %3021 = vmatpush1.msra.mxu0 0.0
    %3022 = vmatprep.subr.mxu0 0.0
    %3023 = vmatpush1.msra.mxu0 0.0
    %3024 = vmatprep.subr.mxu0 0.0
    %3025 = vmatpush1.msra.mxu0 0.0
    %3026 = vmatprep.subr.mxu0 0.0
    %3027 = vmatpush1.msra.mxu0 0.0
    %3028 = vmatprep.subr.mxu0 0.0
    %3029 = vmatpush1.msra.mxu0 0.0
    %3030 = vmatprep.subr.mxu0 0.0
    %3031 = vmatpush1.msra.mxu0 0.0
    %3032 = vmatprep.subr.mxu0 0.0
    %3033 = vmatpush1.msra.mxu0 0.0
    %3034 = vmatprep.subr.mxu0 0.0
    %3035 = vmatpush1.msra.mxu0 0.0
    %3036 = vmatprep.subr.mxu0 0.0
    %3037 = vmatpush1.msra.mxu0 0.0
    %3038 = vmatprep.subr.mxu0 0.0
    %3039 = vmatpush1.msra.mxu0 0.0
    %3040 = vmatprep.subr.mxu0 0.0
    %3041 = vmatpush1.msra.mxu0 0.0
    %3042 = vmatprep.subr.mxu0 0.0
    %3043 = vmatpush1.msra.mxu0 0.0
    %3044 = vmatprep.subr.mxu0 0.0
    %3045 = vmatpush1.msra.mxu0 %v3019
    %3046 = vmatprep.subr.mxu0 0.0
    %3047 = vmatpush1.msra.mxu0 %v3018
    %3048 = vmatprep.subr.mxu0 0.0
    %3049 = vmatpush1.msra.mxu0 %v3017
    %3050 = vmatprep.subr.mxu0 0.0
    %3051 = vmatpush1.msra.mxu0 %v3016
    %3052 = vmatprep.subr.mxu0 0.0
    %3053 = vmatpush2.msra.mxu0 0.0
    %3054 = vmatprep.subr.mxu0 0.0
    %3055 = vmatpush2.msra.mxu0 0.0
    %3056 = vmatprep.subr.mxu0 0.0
    %3057 = vmatpush2.msra.mxu0 0.0
    %3058 = vmatprep.subr.mxu0 0.0
    %3059 = vmatpush2.msra.mxu0 0.0
    %3060 = vmatprep.subr.mxu0 0.0
    %3061 = vmatpush2.msra.mxu0 0.0
    %3062 = vmatprep.subr.mxu0 0.0
    %3063 = vmatpush2.msra.mxu0 0.0
    %3064 = vmatprep.subr.mxu0 0.0
    %3065 = vmatpush2.msra.mxu0 0.0
    %3066 = vmatprep.subr.mxu0 0.0
    %3067 = vmatpush2.msra.mxu0 0.0
    %3068 = vmatprep.subr.mxu0 0.0
    %3069 = vmatpush2.msra.mxu0 0.0
    %3070 = vmatprep.subr.mxu0 0.0
    %3071 = vmatpush2.msra.mxu0 0.0
    %3072 = vmatprep.subr.mxu0 0.0
    %3073 = vmatpush2.msra.mxu0 0.0
    %3074 = vmatprep.subr.mxu0 0.0
    %3075 = vmatpush2.msra.mxu0 0.0
    %3076 = vmatprep.subr.mxu0 0.0
    %3077 = vmatpush2.msra.mxu0 0.0
    %3078 = vmatprep.subr.mxu0 0.0
    %3079 = vmatpush2.msra.mxu0 0.0
    %3080 = vmatprep.subr.mxu0 0.0
    %3081 = vmatpush2.msra.mxu0 0.0
    %3082 = vmatprep.subr.mxu0 0.0
    %3083 = vmatpush2.msra.mxu0 0.0
    %3084 = vmatprep.mubr.f32.mxu0 0.0
    %3085 = vmatmul.mubr.f32.gmra.mxu0 %v2919
    %v3086 = vpop.f32.mrf.mxu0
    %v3087 = vadd.f32 0.0, %v3086
    %v3088 = vpop.f32.mrf.mxu0
    %3089 = vmatprep.mubr.f32.mxu0 0.0
    %3090 = vmatmul.mubr.f32.gmra.mxu0 %v2922
    %v3091 = vpop.f32.mrf.mxu0
    %v3092 = vadd.f32 0.0, %v3091
    %v3093 = vpop.f32.mrf.mxu0
    %3094 = vdwg.mxu0
    %s3095 = scalar_lea.vmem %s6, 16
    %v3096 = vld [vmem:[%s3095] sm:$0xff]
    %v3097 = vld [vmem:[%s3095 + $0x8] sm:$0xff]
    %3099 = vset.pattern.permute.xlu0 0
    %3100 = vperm.xlu0 %3099, %v3096
    %v3101 = vpop.permute.xlu0 %3100
    %3104 = vset.pattern.permute.xlu0 0
    %3105 = vperm.xlu0 %3104, %v3097
    %v3106 = vpop.permute.xlu0 %3105
    %v3108 = vmul.f32 %v3101, %v3087
    %v3109 = vmul.f32 %v3106, %v3092
    %v3110 = vadd.f32 %v3013, %v3108
    %v3111 = vadd.f32 %v3014, %v3109
    %s3112 = scalar_lea.vmem %s7, 64
    %v3113 = vld [vmem:[%s3112] sm:$0xff]
    %v3114 = vld [vmem:[%s3112 + $0x8] sm:$0xff]
    %v3115 = vld [vmem:[%s3112 + $0x10] sm:$0xff]
    %v3116 = vld [vmem:[%s3112 + $0x18] sm:$0xff]
    %3117 = vmatprep.subr.mxu0 0.0
    %3118 = vmatpush1.msra.mxu0 0.0
    %3119 = vmatprep.subr.mxu0 0.0
    %3120 = vmatpush1.msra.mxu0 0.0
    %3121 = vmatprep.subr.mxu0 0.0
    %3122 = vmatpush1.msra.mxu0 0.0
    %3123 = vmatprep.subr.mxu0 0.0
    %3124 = vmatpush1.msra.mxu0 0.0
    %3125 = vmatprep.subr.mxu0 0.0
    %3126 = vmatpush1.msra.mxu0 0.0
    %3127 = vmatprep.subr.mxu0 0.0
    %3128 = vmatpush1.msra.mxu0 0.0
    %3129 = vmatprep.subr.mxu0 0.0
    %3130 = vmatpush1.msra.mxu0 0.0
    %3131 = vmatprep.subr.mxu0 0.0
    %3132 = vmatpush1.msra.mxu0 0.0
    %3133 = vmatprep.subr.mxu0 0.0
    %3134 = vmatpush1.msra.mxu0 0.0
    %3135 = vmatprep.subr.mxu0 0.0
    %3136 = vmatpush1.msra.mxu0 0.0
    %3137 = vmatprep.subr.mxu0 0.0
    %3138 = vmatpush1.msra.mxu0 0.0
    %3139 = vmatprep.subr.mxu0 0.0
    %3140 = vmatpush1.msra.mxu0 0.0
    %3141 = vmatprep.subr.mxu0 0.0
    %3142 = vmatpush1.msra.mxu0 %v3116
    %3143 = vmatprep.subr.mxu0 0.0
    %3144 = vmatpush1.msra.mxu0 %v3115
    %3145 = vmatprep.subr.mxu0 0.0
    %3146 = vmatpush1.msra.mxu0 %v3114
    %3147 = vmatprep.subr.mxu0 0.0
    %3148 = vmatpush1.msra.mxu0 %v3113
    %3149 = vmatprep.subr.mxu0 0.0
    %3150 = vmatpush2.msra.mxu0 0.0
    %3151 = vmatprep.subr.mxu0 0.0
    %3152 = vmatpush2.msra.mxu0 0.0
    %3153 = vmatprep.subr.mxu0 0.0
    %3154 = vmatpush2.msra.mxu0 0.0
    %3155 = vmatprep.subr.mxu0 0.0
    %3156 = vmatpush2.msra.mxu0 0.0
    %3157 = vmatprep.subr.mxu0 0.0
    %3158 = vmatpush2.msra.mxu0 0.0
    %3159 = vmatprep.subr.mxu0 0.0
    %3160 = vmatpush2.msra.mxu0 0.0
    %3161 = vmatprep.subr.mxu0 0.0
    %3162 = vmatpush2.msra.mxu0 0.0
    %3163 = vmatprep.subr.mxu0 0.0
    %3164 = vmatpush2.msra.mxu0 0.0
    %3165 = vmatprep.subr.mxu0 0.0
    %3166 = vmatpush2.msra.mxu0 0.0
    %3167 = vmatprep.subr.mxu0 0.0
    %3168 = vmatpush2.msra.mxu0 0.0
    %3169 = vmatprep.subr.mxu0 0.0
    %3170 = vmatpush2.msra.mxu0 0.0
    %3171 = vmatprep.subr.mxu0 0.0
    %3172 = vmatpush2.msra.mxu0 0.0
    %3173 = vmatprep.subr.mxu0 0.0
    %3174 = vmatpush2.msra.mxu0 0.0
    %3175 = vmatprep.subr.mxu0 0.0
    %3176 = vmatpush2.msra.mxu0 0.0
    %3177 = vmatprep.subr.mxu0 0.0
    %3178 = vmatpush2.msra.mxu0 0.0
    %3179 = vmatprep.subr.mxu0 0.0
    %3180 = vmatpush2.msra.mxu0 0.0
    %3181 = vmatprep.mubr.f32.mxu0 0.0
    %3182 = vmatmul.mubr.f32.gmra.mxu0 %v2919
    %v3183 = vpop.f32.mrf.mxu0
    %v3184 = vadd.f32 0.0, %v3183
    %v3185 = vpop.f32.mrf.mxu0
    %3186 = vmatprep.mubr.f32.mxu0 0.0
    %3187 = vmatmul.mubr.f32.gmra.mxu0 %v2922
    %v3188 = vpop.f32.mrf.mxu0
    %v3189 = vadd.f32 0.0, %v3188
    %v3190 = vpop.f32.mrf.mxu0
    %3191 = vdwg.mxu0
    %s3192 = scalar_lea.vmem %s6, 32
    %v3193 = vld [vmem:[%s3192] sm:$0xff]
    %v3194 = vld [vmem:[%s3192 + $0x8] sm:$0xff]
    %3196 = vset.pattern.permute.xlu0 0
    %3197 = vperm.xlu0 %3196, %v3193
    %v3198 = vpop.permute.xlu0 %3197
    %3201 = vset.pattern.permute.xlu0 0
    %3202 = vperm.xlu0 %3201, %v3194
    %v3203 = vpop.permute.xlu0 %3202
    %v3205 = vmul.f32 %v3198, %v3184
    %v3206 = vmul.f32 %v3203, %v3189
    %v3207 = vadd.f32 %v3110, %v3205
    %v3208 = vadd.f32 %v3111, %v3206
    %s3209 = scalar_lea.vmem %s7, 96
    %v3210 = vld [vmem:[%s3209] sm:$0xff]
    %v3211 = vld [vmem:[%s3209 + $0x8] sm:$0xff]
    %v3212 = vld [vmem:[%s3209 + $0x10] sm:$0xff]
    %v3213 = vld [vmem:[%s3209 + $0x18] sm:$0xff]
    %3214 = vmatprep.subr.mxu0 0.0
    %3215 = vmatpush1.msra.mxu0 0.0
    %3216 = vmatprep.subr.mxu0 0.0
    %3217 = vmatpush1.msra.mxu0 0.0
    %3218 = vmatprep.subr.mxu0 0.0
    %3219 = vmatpush1.msra.mxu0 0.0
    %3220 = vmatprep.subr.mxu0 0.0
    %3221 = vmatpush1.msra.mxu0 0.0
    %3222 = vmatprep.subr.mxu0 0.0
    %3223 = vmatpush1.msra.mxu0 0.0
    %3224 = vmatprep.subr.mxu0 0.0
    %3225 = vmatpush1.msra.mxu0 0.0
    %3226 = vmatprep.subr.mxu0 0.0
    %3227 = vmatpush1.msra.mxu0 0.0
    %3228 = vmatprep.subr.mxu0 0.0
    %3229 = vmatpush1.msra.mxu0 0.0
    %3230 = vmatprep.subr.mxu0 0.0
    %3231 = vmatpush1.msra.mxu0 0.0
    %3232 = vmatprep.subr.mxu0 0.0
    %3233 = vmatpush1.msra.mxu0 0.0
    %3234 = vmatprep.subr.mxu0 0.0
    %3235 = vmatpush1.msra.mxu0 0.0
    %3236 = vmatprep.subr.mxu0 0.0
    %3237 = vmatpush1.msra.mxu0 0.0
    %3238 = vmatprep.subr.mxu0 0.0
    %3239 = vmatpush1.msra.mxu0 %v3213
    %3240 = vmatprep.subr.mxu0 0.0
    %3241 = vmatpush1.msra.mxu0 %v3212
    %3242 = vmatprep.subr.mxu0 0.0
    %3243 = vmatpush1.msra.mxu0 %v3211
    %3244 = vmatprep.subr.mxu0 0.0
    %3245 = vmatpush1.msra.mxu0 %v3210
    %3246 = vmatprep.subr.mxu0 0.0
    %3247 = vmatpush2.msra.mxu0 0.0
    %3248 = vmatprep.subr.mxu0 0.0
    %3249 = vmatpush2.msra.mxu0 0.0
    %3250 = vmatprep.subr.mxu0 0.0
    %3251 = vmatpush2.msra.mxu0 0.0
    %3252 = vmatprep.subr.mxu0 0.0
    %3253 = vmatpush2.msra.mxu0 0.0
    %3254 = vmatprep.subr.mxu0 0.0
    %3255 = vmatpush2.msra.mxu0 0.0
    %3256 = vmatprep.subr.mxu0 0.0
    %3257 = vmatpush2.msra.mxu0 0.0
    %3258 = vmatprep.subr.mxu0 0.0
    %3259 = vmatpush2.msra.mxu0 0.0
    %3260 = vmatprep.subr.mxu0 0.0
    %3261 = vmatpush2.msra.mxu0 0.0
    %3262 = vmatprep.subr.mxu0 0.0
    %3263 = vmatpush2.msra.mxu0 0.0
    %3264 = vmatprep.subr.mxu0 0.0
    %3265 = vmatpush2.msra.mxu0 0.0
    %3266 = vmatprep.subr.mxu0 0.0
    %3267 = vmatpush2.msra.mxu0 0.0
    %3268 = vmatprep.subr.mxu0 0.0
    %3269 = vmatpush2.msra.mxu0 0.0
    %3270 = vmatprep.subr.mxu0 0.0
    %3271 = vmatpush2.msra.mxu0 0.0
    %3272 = vmatprep.subr.mxu0 0.0
    %3273 = vmatpush2.msra.mxu0 0.0
    %3274 = vmatprep.subr.mxu0 0.0
    %3275 = vmatpush2.msra.mxu0 0.0
    %3276 = vmatprep.subr.mxu0 0.0
    %3277 = vmatpush2.msra.mxu0 0.0
    %3278 = vmatprep.mubr.f32.mxu0 0.0
    %3279 = vmatmul.mubr.f32.gmra.mxu0 %v2919
    %v3280 = vpop.f32.mrf.mxu0
    %v3281 = vadd.f32 0.0, %v3280
    %v3282 = vpop.f32.mrf.mxu0
    %3283 = vmatprep.mubr.f32.mxu0 0.0
    %3284 = vmatmul.mubr.f32.gmra.mxu0 %v2922
    %v3285 = vpop.f32.mrf.mxu0
    %v3286 = vadd.f32 0.0, %v3285
    %v3287 = vpop.f32.mrf.mxu0
    %3288 = vdwg.mxu0
    %s3289 = scalar_lea.vmem %s6, 48
    %v3290 = vld [vmem:[%s3289] sm:$0xff]
    %v3291 = vld [vmem:[%s3289 + $0x8] sm:$0xff]
    %3293 = vset.pattern.permute.xlu0 0
    %3294 = vperm.xlu0 %3293, %v3290
    %v3295 = vpop.permute.xlu0 %3294
    %3298 = vset.pattern.permute.xlu0 0
    %3299 = vperm.xlu0 %3298, %v3291
    %v3300 = vpop.permute.xlu0 %3299
    %v3302 = vmul.f32 %v3295, %v3281
    %v3303 = vmul.f32 %v3300, %v3286
    %v3304 = vadd.f32 %v3207, %v3302
    %v3305 = vadd.f32 %v3208, %v3303
    %s3306 = scalar_lea.vmem %s7, 128
    %v3307 = vld [vmem:[%s3306] sm:$0xff]
    %v3308 = vld [vmem:[%s3306 + $0x8] sm:$0xff]
    %v3309 = vld [vmem:[%s3306 + $0x10] sm:$0xff]
    %v3310 = vld [vmem:[%s3306 + $0x18] sm:$0xff]
    %3311 = vmatprep.subr.mxu0 0.0
    %3312 = vmatpush1.msra.mxu0 0.0
    %3313 = vmatprep.subr.mxu0 0.0
    %3314 = vmatpush1.msra.mxu0 0.0
    %3315 = vmatprep.subr.mxu0 0.0
    %3316 = vmatpush1.msra.mxu0 0.0
    %3317 = vmatprep.subr.mxu0 0.0
    %3318 = vmatpush1.msra.mxu0 0.0
    %3319 = vmatprep.subr.mxu0 0.0
    %3320 = vmatpush1.msra.mxu0 0.0
    %3321 = vmatprep.subr.mxu0 0.0
    %3322 = vmatpush1.msra.mxu0 0.0
    %3323 = vmatprep.subr.mxu0 0.0
    %3324 = vmatpush1.msra.mxu0 0.0
    %3325 = vmatprep.subr.mxu0 0.0
    %3326 = vmatpush1.msra.mxu0 0.0
    %3327 = vmatprep.subr.mxu0 0.0
    %3328 = vmatpush1.msra.mxu0 0.0
    %3329 = vmatprep.subr.mxu0 0.0
    %3330 = vmatpush1.msra.mxu0 0.0
    %3331 = vmatprep.subr.mxu0 0.0
    %3332 = vmatpush1.msra.mxu0 0.0
    %3333 = vmatprep.subr.mxu0 0.0
    %3334 = vmatpush1.msra.mxu0 0.0
    %3335 = vmatprep.subr.mxu0 0.0
    %3336 = vmatpush1.msra.mxu0 %v3310
    %3337 = vmatprep.subr.mxu0 0.0
    %3338 = vmatpush1.msra.mxu0 %v3309
    %3339 = vmatprep.subr.mxu0 0.0
    %3340 = vmatpush1.msra.mxu0 %v3308
    %3341 = vmatprep.subr.mxu0 0.0
    %3342 = vmatpush1.msra.mxu0 %v3307
    %3343 = vmatprep.subr.mxu0 0.0
    %3344 = vmatpush2.msra.mxu0 0.0
    %3345 = vmatprep.subr.mxu0 0.0
    %3346 = vmatpush2.msra.mxu0 0.0
    %3347 = vmatprep.subr.mxu0 0.0
    %3348 = vmatpush2.msra.mxu0 0.0
    %3349 = vmatprep.subr.mxu0 0.0
    %3350 = vmatpush2.msra.mxu0 0.0
    %3351 = vmatprep.subr.mxu0 0.0
    %3352 = vmatpush2.msra.mxu0 0.0
    %3353 = vmatprep.subr.mxu0 0.0
    %3354 = vmatpush2.msra.mxu0 0.0
    %3355 = vmatprep.subr.mxu0 0.0
    %3356 = vmatpush2.msra.mxu0 0.0
    %3357 = vmatprep.subr.mxu0 0.0
    %3358 = vmatpush2.msra.mxu0 0.0
    %3359 = vmatprep.subr.mxu0 0.0
    %3360 = vmatpush2.msra.mxu0 0.0
    %3361 = vmatprep.subr.mxu0 0.0
    %3362 = vmatpush2.msra.mxu0 0.0
    %3363 = vmatprep.subr.mxu0 0.0
    %3364 = vmatpush2.msra.mxu0 0.0
    %3365 = vmatprep.subr.mxu0 0.0
    %3366 = vmatpush2.msra.mxu0 0.0
    %3367 = vmatprep.subr.mxu0 0.0
    %3368 = vmatpush2.msra.mxu0 0.0
    %3369 = vmatprep.subr.mxu0 0.0
    %3370 = vmatpush2.msra.mxu0 0.0
    %3371 = vmatprep.subr.mxu0 0.0
    %3372 = vmatpush2.msra.mxu0 0.0
    %3373 = vmatprep.subr.mxu0 0.0
    %3374 = vmatpush2.msra.mxu0 0.0
    %3375 = vmatprep.mubr.f32.mxu0 0.0
    %3376 = vmatmul.mubr.f32.gmra.mxu0 %v2919
    %v3377 = vpop.f32.mrf.mxu0
    %v3378 = vadd.f32 0.0, %v3377
    %v3379 = vpop.f32.mrf.mxu0
    %3380 = vmatprep.mubr.f32.mxu0 0.0
    %3381 = vmatmul.mubr.f32.gmra.mxu0 %v2922
    %v3382 = vpop.f32.mrf.mxu0
    %v3383 = vadd.f32 0.0, %v3382
    %v3384 = vpop.f32.mrf.mxu0
    %3385 = vdwg.mxu0
    %s3386 = scalar_lea.vmem %s6, 64
    %v3387 = vld [vmem:[%s3386] sm:$0xff]
    %v3388 = vld [vmem:[%s3386 + $0x8] sm:$0xff]
    %3390 = vset.pattern.permute.xlu0 0
    %3391 = vperm.xlu0 %3390, %v3387
    %v3392 = vpop.permute.xlu0 %3391
    %3395 = vset.pattern.permute.xlu0 0
    %3396 = vperm.xlu0 %3395, %v3388
    %v3397 = vpop.permute.xlu0 %3396
    %v3399 = vmul.f32 %v3392, %v3378
    %v3400 = vmul.f32 %v3397, %v3383
    %v3401 = vadd.f32 %v3304, %v3399
    %v3402 = vadd.f32 %v3305, %v3400
    %s3403 = scalar_lea.vmem %s7, 160
    %v3404 = vld [vmem:[%s3403] sm:$0xff]
    %v3405 = vld [vmem:[%s3403 + $0x8] sm:$0xff]
    %v3406 = vld [vmem:[%s3403 + $0x10] sm:$0xff]
    %v3407 = vld [vmem:[%s3403 + $0x18] sm:$0xff]
    %3408 = vmatprep.subr.mxu0 0.0
    %3409 = vmatpush1.msra.mxu0 0.0
    %3410 = vmatprep.subr.mxu0 0.0
    %3411 = vmatpush1.msra.mxu0 0.0
    %3412 = vmatprep.subr.mxu0 0.0
    %3413 = vmatpush1.msra.mxu0 0.0
    %3414 = vmatprep.subr.mxu0 0.0
    %3415 = vmatpush1.msra.mxu0 0.0
    %3416 = vmatprep.subr.mxu0 0.0
    %3417 = vmatpush1.msra.mxu0 0.0
    %3418 = vmatprep.subr.mxu0 0.0
    %3419 = vmatpush1.msra.mxu0 0.0
    %3420 = vmatprep.subr.mxu0 0.0
    %3421 = vmatpush1.msra.mxu0 0.0
    %3422 = vmatprep.subr.mxu0 0.0
    %3423 = vmatpush1.msra.mxu0 0.0
    %3424 = vmatprep.subr.mxu0 0.0
    %3425 = vmatpush1.msra.mxu0 0.0
    %3426 = vmatprep.subr.mxu0 0.0
    %3427 = vmatpush1.msra.mxu0 0.0
    %3428 = vmatprep.subr.mxu0 0.0
    %3429 = vmatpush1.msra.mxu0 0.0
    %3430 = vmatprep.subr.mxu0 0.0
    %3431 = vmatpush1.msra.mxu0 0.0
    %3432 = vmatprep.subr.mxu0 0.0
    %3433 = vmatpush1.msra.mxu0 %v3407
    %3434 = vmatprep.subr.mxu0 0.0
    %3435 = vmatpush1.msra.mxu0 %v3406
    %3436 = vmatprep.subr.mxu0 0.0
    %3437 = vmatpush1.msra.mxu0 %v3405
    %3438 = vmatprep.subr.mxu0 0.0
    %3439 = vmatpush1.msra.mxu0 %v3404
    %3440 = vmatprep.subr.mxu0 0.0
    %3441 = vmatpush2.msra.mxu0 0.0
    %3442 = vmatprep.subr.mxu0 0.0
    %3443 = vmatpush2.msra.mxu0 0.0
    %3444 = vmatprep.subr.mxu0 0.0
    %3445 = vmatpush2.msra.mxu0 0.0
    %3446 = vmatprep.subr.mxu0 0.0
    %3447 = vmatpush2.msra.mxu0 0.0
    %3448 = vmatprep.subr.mxu0 0.0
    %3449 = vmatpush2.msra.mxu0 0.0
    %3450 = vmatprep.subr.mxu0 0.0
    %3451 = vmatpush2.msra.mxu0 0.0
    %3452 = vmatprep.subr.mxu0 0.0
    %3453 = vmatpush2.msra.mxu0 0.0
    %3454 = vmatprep.subr.mxu0 0.0
    %3455 = vmatpush2.msra.mxu0 0.0
    %3456 = vmatprep.subr.mxu0 0.0
    %3457 = vmatpush2.msra.mxu0 0.0
    %3458 = vmatprep.subr.mxu0 0.0
    %3459 = vmatpush2.msra.mxu0 0.0
    %3460 = vmatprep.subr.mxu0 0.0
    %3461 = vmatpush2.msra.mxu0 0.0
    %3462 = vmatprep.subr.mxu0 0.0
    %3463 = vmatpush2.msra.mxu0 0.0
    %3464 = vmatprep.subr.mxu0 0.0
    %3465 = vmatpush2.msra.mxu0 0.0
    %3466 = vmatprep.subr.mxu0 0.0
    %3467 = vmatpush2.msra.mxu0 0.0
    %3468 = vmatprep.subr.mxu0 0.0
    %3469 = vmatpush2.msra.mxu0 0.0
    %3470 = vmatprep.subr.mxu0 0.0
    %3471 = vmatpush2.msra.mxu0 0.0
    %3472 = vmatprep.mubr.f32.mxu0 0.0
    %3473 = vmatmul.mubr.f32.gmra.mxu0 %v2919
    %v3474 = vpop.f32.mrf.mxu0
    %v3475 = vadd.f32 0.0, %v3474
    %v3476 = vpop.f32.mrf.mxu0
    %3477 = vmatprep.mubr.f32.mxu0 0.0
    %3478 = vmatmul.mubr.f32.gmra.mxu0 %v2922
    %v3479 = vpop.f32.mrf.mxu0
    %v3480 = vadd.f32 0.0, %v3479
    %v3481 = vpop.f32.mrf.mxu0
    %3482 = vdwg.mxu0
    %s3483 = scalar_lea.vmem %s6, 80
    %v3484 = vld [vmem:[%s3483] sm:$0xff]
    %v3485 = vld [vmem:[%s3483 + $0x8] sm:$0xff]
    %3487 = vset.pattern.permute.xlu0 0
    %3488 = vperm.xlu0 %3487, %v3484
    %v3489 = vpop.permute.xlu0 %3488
    %3492 = vset.pattern.permute.xlu0 0
    %3493 = vperm.xlu0 %3492, %v3485
    %v3494 = vpop.permute.xlu0 %3493
    %v3496 = vmul.f32 %v3489, %v3475
    %v3497 = vmul.f32 %v3494, %v3480
    %v3498 = vadd.f32 %v3401, %v3496
    %v3499 = vadd.f32 %v3402, %v3497
    %s3500 = scalar_lea.vmem %s7, 192
    %v3501 = vld [vmem:[%s3500] sm:$0xff]
    %v3502 = vld [vmem:[%s3500 + $0x8] sm:$0xff]
    %v3503 = vld [vmem:[%s3500 + $0x10] sm:$0xff]
    %v3504 = vld [vmem:[%s3500 + $0x18] sm:$0xff]
    %3505 = vmatprep.subr.mxu0 0.0
    %3506 = vmatpush1.msra.mxu0 0.0
    %3507 = vmatprep.subr.mxu0 0.0
    %3508 = vmatpush1.msra.mxu0 0.0
    %3509 = vmatprep.subr.mxu0 0.0
    %3510 = vmatpush1.msra.mxu0 0.0
    %3511 = vmatprep.subr.mxu0 0.0
    %3512 = vmatpush1.msra.mxu0 0.0
    %3513 = vmatprep.subr.mxu0 0.0
    %3514 = vmatpush1.msra.mxu0 0.0
    %3515 = vmatprep.subr.mxu0 0.0
    %3516 = vmatpush1.msra.mxu0 0.0
    %3517 = vmatprep.subr.mxu0 0.0
    %3518 = vmatpush1.msra.mxu0 0.0
    %3519 = vmatprep.subr.mxu0 0.0
    %3520 = vmatpush1.msra.mxu0 0.0
    %3521 = vmatprep.subr.mxu0 0.0
    %3522 = vmatpush1.msra.mxu0 0.0
    %3523 = vmatprep.subr.mxu0 0.0
    %3524 = vmatpush1.msra.mxu0 0.0
    %3525 = vmatprep.subr.mxu0 0.0
    %3526 = vmatpush1.msra.mxu0 0.0
    %3527 = vmatprep.subr.mxu0 0.0
    %3528 = vmatpush1.msra.mxu0 0.0
    %3529 = vmatprep.subr.mxu0 0.0
    %3530 = vmatpush1.msra.mxu0 %v3504
    %3531 = vmatprep.subr.mxu0 0.0
    %3532 = vmatpush1.msra.mxu0 %v3503
    %3533 = vmatprep.subr.mxu0 0.0
    %3534 = vmatpush1.msra.mxu0 %v3502
    %3535 = vmatprep.subr.mxu0 0.0
    %3536 = vmatpush1.msra.mxu0 %v3501
    %3537 = vmatprep.subr.mxu0 0.0
    %3538 = vmatpush2.msra.mxu0 0.0
    %3539 = vmatprep.subr.mxu0 0.0
    %3540 = vmatpush2.msra.mxu0 0.0
    %3541 = vmatprep.subr.mxu0 0.0
    %3542 = vmatpush2.msra.mxu0 0.0
    %3543 = vmatprep.subr.mxu0 0.0
    %3544 = vmatpush2.msra.mxu0 0.0
    %3545 = vmatprep.subr.mxu0 0.0
    %3546 = vmatpush2.msra.mxu0 0.0
    %3547 = vmatprep.subr.mxu0 0.0
    %3548 = vmatpush2.msra.mxu0 0.0
    %3549 = vmatprep.subr.mxu0 0.0
    %3550 = vmatpush2.msra.mxu0 0.0
    %3551 = vmatprep.subr.mxu0 0.0
    %3552 = vmatpush2.msra.mxu0 0.0
    %3553 = vmatprep.subr.mxu0 0.0
    %3554 = vmatpush2.msra.mxu0 0.0
    %3555 = vmatprep.subr.mxu0 0.0
    %3556 = vmatpush2.msra.mxu0 0.0
    %3557 = vmatprep.subr.mxu0 0.0
    %3558 = vmatpush2.msra.mxu0 0.0
    %3559 = vmatprep.subr.mxu0 0.0
    %3560 = vmatpush2.msra.mxu0 0.0
    %3561 = vmatprep.subr.mxu0 0.0
    %3562 = vmatpush2.msra.mxu0 0.0
    %3563 = vmatprep.subr.mxu0 0.0
    %3564 = vmatpush2.msra.mxu0 0.0
    %3565 = vmatprep.subr.mxu0 0.0
    %3566 = vmatpush2.msra.mxu0 0.0
    %3567 = vmatprep.subr.mxu0 0.0
    %3568 = vmatpush2.msra.mxu0 0.0
    %3569 = vmatprep.mubr.f32.mxu0 0.0
    %3570 = vmatmul.mubr.f32.gmra.mxu0 %v2919
    %v3571 = vpop.f32.mrf.mxu0
    %v3572 = vadd.f32 0.0, %v3571
    %v3573 = vpop.f32.mrf.mxu0
    %3574 = vmatprep.mubr.f32.mxu0 0.0
    %3575 = vmatmul.mubr.f32.gmra.mxu0 %v2922
    %v3576 = vpop.f32.mrf.mxu0
    %v3577 = vadd.f32 0.0, %v3576
    %v3578 = vpop.f32.mrf.mxu0
    %3579 = vdwg.mxu0
    %s3580 = scalar_lea.vmem %s6, 96
    %v3581 = vld [vmem:[%s3580] sm:$0xff]
    %v3582 = vld [vmem:[%s3580 + $0x8] sm:$0xff]
    %3584 = vset.pattern.permute.xlu0 0
    %3585 = vperm.xlu0 %3584, %v3581
    %v3586 = vpop.permute.xlu0 %3585
    %3589 = vset.pattern.permute.xlu0 0
    %3590 = vperm.xlu0 %3589, %v3582
    %v3591 = vpop.permute.xlu0 %3590
    %v3593 = vmul.f32 %v3586, %v3572
    %v3594 = vmul.f32 %v3591, %v3577
    %v3595 = vadd.f32 %v3498, %v3593
    %v3596 = vadd.f32 %v3499, %v3594
    %s3597 = scalar_lea.vmem %s7, 224
    %v3598 = vld [vmem:[%s3597] sm:$0xff]
    %v3599 = vld [vmem:[%s3597 + $0x8] sm:$0xff]
    %v3600 = vld [vmem:[%s3597 + $0x10] sm:$0xff]
    %v3601 = vld [vmem:[%s3597 + $0x18] sm:$0xff]
    %3602 = vmatprep.subr.mxu0 0.0
    %3603 = vmatpush1.msra.mxu0 0.0
    %3604 = vmatprep.subr.mxu0 0.0
    %3605 = vmatpush1.msra.mxu0 0.0
    %3606 = vmatprep.subr.mxu0 0.0
    %3607 = vmatpush1.msra.mxu0 0.0
    %3608 = vmatprep.subr.mxu0 0.0
    %3609 = vmatpush1.msra.mxu0 0.0
    %3610 = vmatprep.subr.mxu0 0.0
    %3611 = vmatpush1.msra.mxu0 0.0
    %3612 = vmatprep.subr.mxu0 0.0
    %3613 = vmatpush1.msra.mxu0 0.0
    %3614 = vmatprep.subr.mxu0 0.0
    %3615 = vmatpush1.msra.mxu0 0.0
    %3616 = vmatprep.subr.mxu0 0.0
    %3617 = vmatpush1.msra.mxu0 0.0
    %3618 = vmatprep.subr.mxu0 0.0
    %3619 = vmatpush1.msra.mxu0 0.0
    %3620 = vmatprep.subr.mxu0 0.0
    %3621 = vmatpush1.msra.mxu0 0.0
    %3622 = vmatprep.subr.mxu0 0.0
    %3623 = vmatpush1.msra.mxu0 0.0
    %3624 = vmatprep.subr.mxu0 0.0
    %3625 = vmatpush1.msra.mxu0 0.0
    %3626 = vmatprep.subr.mxu0 0.0
    %3627 = vmatpush1.msra.mxu0 %v3601
    %3628 = vmatprep.subr.mxu0 0.0
    %3629 = vmatpush1.msra.mxu0 %v3600
    %3630 = vmatprep.subr.mxu0 0.0
    %3631 = vmatpush1.msra.mxu0 %v3599
    %3632 = vmatprep.subr.mxu0 0.0
    %3633 = vmatpush1.msra.mxu0 %v3598
    %3634 = vmatprep.subr.mxu0 0.0
    %3635 = vmatpush2.msra.mxu0 0.0
    %3636 = vmatprep.subr.mxu0 0.0
    %3637 = vmatpush2.msra.mxu0 0.0
    %3638 = vmatprep.subr.mxu0 0.0
    %3639 = vmatpush2.msra.mxu0 0.0
    %3640 = vmatprep.subr.mxu0 0.0
    %3641 = vmatpush2.msra.mxu0 0.0
    %3642 = vmatprep.subr.mxu0 0.0
    %3643 = vmatpush2.msra.mxu0 0.0
    %3644 = vmatprep.subr.mxu0 0.0
    %3645 = vmatpush2.msra.mxu0 0.0
    %3646 = vmatprep.subr.mxu0 0.0
    %3647 = vmatpush2.msra.mxu0 0.0
    %3648 = vmatprep.subr.mxu0 0.0
    %3649 = vmatpush2.msra.mxu0 0.0
    %3650 = vmatprep.subr.mxu0 0.0
    %3651 = vmatpush2.msra.mxu0 0.0
    %3652 = vmatprep.subr.mxu0 0.0
    %3653 = vmatpush2.msra.mxu0 0.0
    %3654 = vmatprep.subr.mxu0 0.0
    %3655 = vmatpush2.msra.mxu0 0.0
    %3656 = vmatprep.subr.mxu0 0.0
    %3657 = vmatpush2.msra.mxu0 0.0
    %3658 = vmatprep.subr.mxu0 0.0
    %3659 = vmatpush2.msra.mxu0 0.0
    %3660 = vmatprep.subr.mxu0 0.0
    %3661 = vmatpush2.msra.mxu0 0.0
    %3662 = vmatprep.subr.mxu0 0.0
    %3663 = vmatpush2.msra.mxu0 0.0
    %3664 = vmatprep.subr.mxu0 0.0
    %3665 = vmatpush2.msra.mxu0 0.0
    %3666 = vmatprep.mubr.f32.mxu0 0.0
    %3667 = vmatmul.mubr.f32.gmra.mxu0 %v2919
    %v3668 = vpop.f32.mrf.mxu0
    %v3669 = vadd.f32 0.0, %v3668
    %v3670 = vpop.f32.mrf.mxu0
    %3671 = vmatprep.mubr.f32.mxu0 0.0
    %3672 = vmatmul.mubr.f32.gmra.mxu0 %v2922
    %v3673 = vpop.f32.mrf.mxu0
    %v3674 = vadd.f32 0.0, %v3673
    %v3675 = vpop.f32.mrf.mxu0
    %3676 = vdwg.mxu0
    %s3677 = scalar_lea.vmem %s6, 112
    %v3678 = vld [vmem:[%s3677] sm:$0xff]
    %v3679 = vld [vmem:[%s3677 + $0x8] sm:$0xff]
    %3681 = vset.pattern.permute.xlu0 0
    %3682 = vperm.xlu0 %3681, %v3678
    %v3683 = vpop.permute.xlu0 %3682
    %3686 = vset.pattern.permute.xlu0 0
    %3687 = vperm.xlu0 %3686, %v3679
    %v3688 = vpop.permute.xlu0 %3687
    %v3690 = vmul.f32 %v3683, %v3669
    %v3691 = vmul.f32 %v3688, %v3674
    %v3692 = vadd.f32 %v3595, %v3690
    %v3693 = vadd.f32 %v3596, %v3691
    %s3694 = scalar_lea.vmem %s7, 256
    %v3695 = vld [vmem:[%s3694] sm:$0xff]
    %v3696 = vld [vmem:[%s3694 + $0x8] sm:$0xff]
    %v3697 = vld [vmem:[%s3694 + $0x10] sm:$0xff]
    %v3698 = vld [vmem:[%s3694 + $0x18] sm:$0xff]
    %3699 = vmatprep.subr.mxu0 0.0
    %3700 = vmatpush1.msra.mxu0 0.0
    %3701 = vmatprep.subr.mxu0 0.0
    %3702 = vmatpush1.msra.mxu0 0.0
    %3703 = vmatprep.subr.mxu0 0.0
    %3704 = vmatpush1.msra.mxu0 0.0
    %3705 = vmatprep.subr.mxu0 0.0
    %3706 = vmatpush1.msra.mxu0 0.0
    %3707 = vmatprep.subr.mxu0 0.0
    %3708 = vmatpush1.msra.mxu0 0.0
    %3709 = vmatprep.subr.mxu0 0.0
    %3710 = vmatpush1.msra.mxu0 0.0
    %3711 = vmatprep.subr.mxu0 0.0
    %3712 = vmatpush1.msra.mxu0 0.0
    %3713 = vmatprep.subr.mxu0 0.0
    %3714 = vmatpush1.msra.mxu0 0.0
    %3715 = vmatprep.subr.mxu0 0.0
    %3716 = vmatpush1.msra.mxu0 0.0
    %3717 = vmatprep.subr.mxu0 0.0
    %3718 = vmatpush1.msra.mxu0 0.0
    %3719 = vmatprep.subr.mxu0 0.0
    %3720 = vmatpush1.msra.mxu0 0.0
    %3721 = vmatprep.subr.mxu0 0.0
    %3722 = vmatpush1.msra.mxu0 0.0
    %3723 = vmatprep.subr.mxu0 0.0
    %3724 = vmatpush1.msra.mxu0 %v3698
    %3725 = vmatprep.subr.mxu0 0.0
    %3726 = vmatpush1.msra.mxu0 %v3697
    %3727 = vmatprep.subr.mxu0 0.0
    %3728 = vmatpush1.msra.mxu0 %v3696
    %3729 = vmatprep.subr.mxu0 0.0
    %3730 = vmatpush1.msra.mxu0 %v3695
    %3731 = vmatprep.subr.mxu0 0.0
    %3732 = vmatpush2.msra.mxu0 0.0
    %3733 = vmatprep.subr.mxu0 0.0
    %3734 = vmatpush2.msra.mxu0 0.0
    %3735 = vmatprep.subr.mxu0 0.0
    %3736 = vmatpush2.msra.mxu0 0.0
    %3737 = vmatprep.subr.mxu0 0.0
    %3738 = vmatpush2.msra.mxu0 0.0
    %3739 = vmatprep.subr.mxu0 0.0
    %3740 = vmatpush2.msra.mxu0 0.0
    %3741 = vmatprep.subr.mxu0 0.0
    %3742 = vmatpush2.msra.mxu0 0.0
    %3743 = vmatprep.subr.mxu0 0.0
    %3744 = vmatpush2.msra.mxu0 0.0
    %3745 = vmatprep.subr.mxu0 0.0
    %3746 = vmatpush2.msra.mxu0 0.0
    %3747 = vmatprep.subr.mxu0 0.0
    %3748 = vmatpush2.msra.mxu0 0.0
    %3749 = vmatprep.subr.mxu0 0.0
    %3750 = vmatpush2.msra.mxu0 0.0
    %3751 = vmatprep.subr.mxu0 0.0
    %3752 = vmatpush2.msra.mxu0 0.0
    %3753 = vmatprep.subr.mxu0 0.0
    %3754 = vmatpush2.msra.mxu0 0.0
    %3755 = vmatprep.subr.mxu0 0.0
    %3756 = vmatpush2.msra.mxu0 0.0
    %3757 = vmatprep.subr.mxu0 0.0
    %3758 = vmatpush2.msra.mxu0 0.0
    %3759 = vmatprep.subr.mxu0 0.0
    %3760 = vmatpush2.msra.mxu0 0.0
    %3761 = vmatprep.subr.mxu0 0.0
    %3762 = vmatpush2.msra.mxu0 0.0
    %3763 = vmatprep.mubr.f32.mxu0 0.0
    %3764 = vmatmul.mubr.f32.gmra.mxu0 %v2919
    %v3765 = vpop.f32.mrf.mxu0
    %v3766 = vadd.f32 0.0, %v3765
    %v3767 = vpop.f32.mrf.mxu0
    %3768 = vmatprep.mubr.f32.mxu0 0.0
    %3769 = vmatmul.mubr.f32.gmra.mxu0 %v2922
    %v3770 = vpop.f32.mrf.mxu0
    %v3771 = vadd.f32 0.0, %v3770
    %v3772 = vpop.f32.mrf.mxu0
    %3773 = vdwg.mxu0
    %s3774 = scalar_lea.vmem %s6, 128
    %v3775 = vld [vmem:[%s3774] sm:$0xff]
    %v3776 = vld [vmem:[%s3774 + $0x8] sm:$0xff]
    %3778 = vset.pattern.permute.xlu0 0
    %3779 = vperm.xlu0 %3778, %v3775
    %v3780 = vpop.permute.xlu0 %3779
    %3783 = vset.pattern.permute.xlu0 0
    %3784 = vperm.xlu0 %3783, %v3776
    %v3785 = vpop.permute.xlu0 %3784
    %v3787 = vmul.f32 %v3780, %v3766
    %v3788 = vmul.f32 %v3785, %v3771
    %v3789 = vadd.f32 %v3692, %v3787
    %v3790 = vadd.f32 %v3693, %v3788
    %s3791 = scalar_lea.vmem %s7, 288
    %v3792 = vld [vmem:[%s3791] sm:$0xff]
    %v3793 = vld [vmem:[%s3791 + $0x8] sm:$0xff]
    %v3794 = vld [vmem:[%s3791 + $0x10] sm:$0xff]
    %v3795 = vld [vmem:[%s3791 + $0x18] sm:$0xff]
    %3796 = vmatprep.subr.mxu0 0.0
    %3797 = vmatpush1.msra.mxu0 0.0
    %3798 = vmatprep.subr.mxu0 0.0
    %3799 = vmatpush1.msra.mxu0 0.0
    %3800 = vmatprep.subr.mxu0 0.0
    %3801 = vmatpush1.msra.mxu0 0.0
    %3802 = vmatprep.subr.mxu0 0.0
    %3803 = vmatpush1.msra.mxu0 0.0
    %3804 = vmatprep.subr.mxu0 0.0
    %3805 = vmatpush1.msra.mxu0 0.0
    %3806 = vmatprep.subr.mxu0 0.0
    %3807 = vmatpush1.msra.mxu0 0.0
    %3808 = vmatprep.subr.mxu0 0.0
    %3809 = vmatpush1.msra.mxu0 0.0
    %3810 = vmatprep.subr.mxu0 0.0
    %3811 = vmatpush1.msra.mxu0 0.0
    %3812 = vmatprep.subr.mxu0 0.0
    %3813 = vmatpush1.msra.mxu0 0.0
    %3814 = vmatprep.subr.mxu0 0.0
    %3815 = vmatpush1.msra.mxu0 0.0
    %3816 = vmatprep.subr.mxu0 0.0
    %3817 = vmatpush1.msra.mxu0 0.0
    %3818 = vmatprep.subr.mxu0 0.0
    %3819 = vmatpush1.msra.mxu0 0.0
    %3820 = vmatprep.subr.mxu0 0.0
    %3821 = vmatpush1.msra.mxu0 %v3795
    %3822 = vmatprep.subr.mxu0 0.0
    %3823 = vmatpush1.msra.mxu0 %v3794
    %3824 = vmatprep.subr.mxu0 0.0
    %3825 = vmatpush1.msra.mxu0 %v3793
    %3826 = vmatprep.subr.mxu0 0.0
    %3827 = vmatpush1.msra.mxu0 %v3792
    %3828 = vmatprep.subr.mxu0 0.0
    %3829 = vmatpush2.msra.mxu0 0.0
    %3830 = vmatprep.subr.mxu0 0.0
    %3831 = vmatpush2.msra.mxu0 0.0
    %3832 = vmatprep.subr.mxu0 0.0
    %3833 = vmatpush2.msra.mxu0 0.0
    %3834 = vmatprep.subr.mxu0 0.0
    %3835 = vmatpush2.msra.mxu0 0.0
    %3836 = vmatprep.subr.mxu0 0.0
    %3837 = vmatpush2.msra.mxu0 0.0
    %3838 = vmatprep.subr.mxu0 0.0
    %3839 = vmatpush2.msra.mxu0 0.0
    %3840 = vmatprep.subr.mxu0 0.0
    %3841 = vmatpush2.msra.mxu0 0.0
    %3842 = vmatprep.subr.mxu0 0.0
    %3843 = vmatpush2.msra.mxu0 0.0
    %3844 = vmatprep.subr.mxu0 0.0
    %3845 = vmatpush2.msra.mxu0 0.0
    %3846 = vmatprep.subr.mxu0 0.0
    %3847 = vmatpush2.msra.mxu0 0.0
    %3848 = vmatprep.subr.mxu0 0.0
    %3849 = vmatpush2.msra.mxu0 0.0
    %3850 = vmatprep.subr.mxu0 0.0
    %3851 = vmatpush2.msra.mxu0 0.0
    %3852 = vmatprep.subr.mxu0 0.0
    %3853 = vmatpush2.msra.mxu0 0.0
    %3854 = vmatprep.subr.mxu0 0.0
    %3855 = vmatpush2.msra.mxu0 0.0
    %3856 = vmatprep.subr.mxu0 0.0
    %3857 = vmatpush2.msra.mxu0 0.0
    %3858 = vmatprep.subr.mxu0 0.0
    %3859 = vmatpush2.msra.mxu0 0.0
    %3860 = vmatprep.mubr.f32.mxu0 0.0
    %3861 = vmatmul.mubr.f32.gmra.mxu0 %v2919
    %v3862 = vpop.f32.mrf.mxu0
    %v3863 = vadd.f32 0.0, %v3862
    %v3864 = vpop.f32.mrf.mxu0
    %3865 = vmatprep.mubr.f32.mxu0 0.0
    %3866 = vmatmul.mubr.f32.gmra.mxu0 %v2922
    %v3867 = vpop.f32.mrf.mxu0
    %v3868 = vadd.f32 0.0, %v3867
    %v3869 = vpop.f32.mrf.mxu0
    %3870 = vdwg.mxu0
    %s3871 = scalar_lea.vmem %s6, 144
    %v3872 = vld [vmem:[%s3871] sm:$0xff]
    %v3873 = vld [vmem:[%s3871 + $0x8] sm:$0xff]
    %3875 = vset.pattern.permute.xlu0 0
    %3876 = vperm.xlu0 %3875, %v3872
    %v3877 = vpop.permute.xlu0 %3876
    %3880 = vset.pattern.permute.xlu0 0
    %3881 = vperm.xlu0 %3880, %v3873
    %v3882 = vpop.permute.xlu0 %3881
    %v3884 = vmul.f32 %v3877, %v3863
    %v3885 = vmul.f32 %v3882, %v3868
    %v3886 = vadd.f32 %v3789, %v3884
    %v3887 = vadd.f32 %v3790, %v3885
    %s3888 = scalar_lea.vmem %s7, 320
    %v3889 = vld [vmem:[%s3888] sm:$0xff]
    %v3890 = vld [vmem:[%s3888 + $0x8] sm:$0xff]
    %v3891 = vld [vmem:[%s3888 + $0x10] sm:$0xff]
    %v3892 = vld [vmem:[%s3888 + $0x18] sm:$0xff]
    %3893 = vmatprep.subr.mxu0 0.0
    %3894 = vmatpush1.msra.mxu0 0.0
    %3895 = vmatprep.subr.mxu0 0.0
    %3896 = vmatpush1.msra.mxu0 0.0
    %3897 = vmatprep.subr.mxu0 0.0
    %3898 = vmatpush1.msra.mxu0 0.0
    %3899 = vmatprep.subr.mxu0 0.0
    %3900 = vmatpush1.msra.mxu0 0.0
    %3901 = vmatprep.subr.mxu0 0.0
    %3902 = vmatpush1.msra.mxu0 0.0
    %3903 = vmatprep.subr.mxu0 0.0
    %3904 = vmatpush1.msra.mxu0 0.0
    %3905 = vmatprep.subr.mxu0 0.0
    %3906 = vmatpush1.msra.mxu0 0.0
    %3907 = vmatprep.subr.mxu0 0.0
    %3908 = vmatpush1.msra.mxu0 0.0
    %3909 = vmatprep.subr.mxu0 0.0
    %3910 = vmatpush1.msra.mxu0 0.0
    %3911 = vmatprep.subr.mxu0 0.0
    %3912 = vmatpush1.msra.mxu0 0.0
    %3913 = vmatprep.subr.mxu0 0.0
    %3914 = vmatpush1.msra.mxu0 0.0
    %3915 = vmatprep.subr.mxu0 0.0
    %3916 = vmatpush1.msra.mxu0 0.0
    %3917 = vmatprep.subr.mxu0 0.0
    %3918 = vmatpush1.msra.mxu0 %v3892
    %3919 = vmatprep.subr.mxu0 0.0
    %3920 = vmatpush1.msra.mxu0 %v3891
    %3921 = vmatprep.subr.mxu0 0.0
    %3922 = vmatpush1.msra.mxu0 %v3890
    %3923 = vmatprep.subr.mxu0 0.0
    %3924 = vmatpush1.msra.mxu0 %v3889
    %3925 = vmatprep.subr.mxu0 0.0
    %3926 = vmatpush2.msra.mxu0 0.0
    %3927 = vmatprep.subr.mxu0 0.0
    %3928 = vmatpush2.msra.mxu0 0.0
    %3929 = vmatprep.subr.mxu0 0.0
    %3930 = vmatpush2.msra.mxu0 0.0
    %3931 = vmatprep.subr.mxu0 0.0
    %3932 = vmatpush2.msra.mxu0 0.0
    %3933 = vmatprep.subr.mxu0 0.0
    %3934 = vmatpush2.msra.mxu0 0.0
    %3935 = vmatprep.subr.mxu0 0.0
    %3936 = vmatpush2.msra.mxu0 0.0
    %3937 = vmatprep.subr.mxu0 0.0
    %3938 = vmatpush2.msra.mxu0 0.0
    %3939 = vmatprep.subr.mxu0 0.0
    %3940 = vmatpush2.msra.mxu0 0.0
    %3941 = vmatprep.subr.mxu0 0.0
    %3942 = vmatpush2.msra.mxu0 0.0
    %3943 = vmatprep.subr.mxu0 0.0
    %3944 = vmatpush2.msra.mxu0 0.0
    %3945 = vmatprep.subr.mxu0 0.0
    %3946 = vmatpush2.msra.mxu0 0.0
    %3947 = vmatprep.subr.mxu0 0.0
    %3948 = vmatpush2.msra.mxu0 0.0
    %3949 = vmatprep.subr.mxu0 0.0
    %3950 = vmatpush2.msra.mxu0 0.0
    %3951 = vmatprep.subr.mxu0 0.0
    %3952 = vmatpush2.msra.mxu0 0.0
    %3953 = vmatprep.subr.mxu0 0.0
    %3954 = vmatpush2.msra.mxu0 0.0
    %3955 = vmatprep.subr.mxu0 0.0
    %3956 = vmatpush2.msra.mxu0 0.0
    %3957 = vmatprep.mubr.f32.mxu0 0.0
    %3958 = vmatmul.mubr.f32.gmra.mxu0 %v2919
    %v3959 = vpop.f32.mrf.mxu0
    %v3960 = vadd.f32 0.0, %v3959
    %v3961 = vpop.f32.mrf.mxu0
    %3962 = vmatprep.mubr.f32.mxu0 0.0
    %3963 = vmatmul.mubr.f32.gmra.mxu0 %v2922
    %v3964 = vpop.f32.mrf.mxu0
    %v3965 = vadd.f32 0.0, %v3964
    %v3966 = vpop.f32.mrf.mxu0
    %3967 = vdwg.mxu0
    %s3968 = scalar_lea.vmem %s6, 160
    %v3969 = vld [vmem:[%s3968] sm:$0xff]
    %v3970 = vld [vmem:[%s3968 + $0x8] sm:$0xff]
    %3972 = vset.pattern.permute.xlu0 0
    %3973 = vperm.xlu0 %3972, %v3969
    %v3974 = vpop.permute.xlu0 %3973
    %3977 = vset.pattern.permute.xlu0 0
    %3978 = vperm.xlu0 %3977, %v3970
    %v3979 = vpop.permute.xlu0 %3978
    %v3981 = vmul.f32 %v3974, %v3960
    %v3982 = vmul.f32 %v3979, %v3965
    %v3983 = vadd.f32 %v3886, %v3981
    %v3984 = vadd.f32 %v3887, %v3982
    %s3985 = scalar_lea.vmem %s7, 352
    %v3986 = vld [vmem:[%s3985] sm:$0xff]
    %v3987 = vld [vmem:[%s3985 + $0x8] sm:$0xff]
    %v3988 = vld [vmem:[%s3985 + $0x10] sm:$0xff]
    %v3989 = vld [vmem:[%s3985 + $0x18] sm:$0xff]
    %3990 = vmatprep.subr.mxu0 0.0
    %3991 = vmatpush1.msra.mxu0 0.0
    %3992 = vmatprep.subr.mxu0 0.0
    %3993 = vmatpush1.msra.mxu0 0.0
    %3994 = vmatprep.subr.mxu0 0.0
    %3995 = vmatpush1.msra.mxu0 0.0
    %3996 = vmatprep.subr.mxu0 0.0
    %3997 = vmatpush1.msra.mxu0 0.0
    %3998 = vmatprep.subr.mxu0 0.0
    %3999 = vmatpush1.msra.mxu0 0.0
    %4000 = vmatprep.subr.mxu0 0.0
    %4001 = vmatpush1.msra.mxu0 0.0
    %4002 = vmatprep.subr.mxu0 0.0
    %4003 = vmatpush1.msra.mxu0 0.0
    %4004 = vmatprep.subr.mxu0 0.0
    %4005 = vmatpush1.msra.mxu0 0.0
    %4006 = vmatprep.subr.mxu0 0.0
    %4007 = vmatpush1.msra.mxu0 0.0
    %4008 = vmatprep.subr.mxu0 0.0
    %4009 = vmatpush1.msra.mxu0 0.0
    %4010 = vmatprep.subr.mxu0 0.0
    %4011 = vmatpush1.msra.mxu0 0.0
    %4012 = vmatprep.subr.mxu0 0.0
    %4013 = vmatpush1.msra.mxu0 0.0
    %4014 = vmatprep.subr.mxu0 0.0
    %4015 = vmatpush1.msra.mxu0 %v3989
    %4016 = vmatprep.subr.mxu0 0.0
    %4017 = vmatpush1.msra.mxu0 %v3988
    %4018 = vmatprep.subr.mxu0 0.0
    %4019 = vmatpush1.msra.mxu0 %v3987
    %4020 = vmatprep.subr.mxu0 0.0
    %4021 = vmatpush1.msra.mxu0 %v3986
    %4022 = vmatprep.subr.mxu0 0.0
    %4023 = vmatpush2.msra.mxu0 0.0
    %4024 = vmatprep.subr.mxu0 0.0
    %4025 = vmatpush2.msra.mxu0 0.0
    %4026 = vmatprep.subr.mxu0 0.0
    %4027 = vmatpush2.msra.mxu0 0.0
    %4028 = vmatprep.subr.mxu0 0.0
    %4029 = vmatpush2.msra.mxu0 0.0
    %4030 = vmatprep.subr.mxu0 0.0
    %4031 = vmatpush2.msra.mxu0 0.0
    %4032 = vmatprep.subr.mxu0 0.0
    %4033 = vmatpush2.msra.mxu0 0.0
    %4034 = vmatprep.subr.mxu0 0.0
    %4035 = vmatpush2.msra.mxu0 0.0
    %4036 = vmatprep.subr.mxu0 0.0
    %4037 = vmatpush2.msra.mxu0 0.0
    %4038 = vmatprep.subr.mxu0 0.0
    %4039 = vmatpush2.msra.mxu0 0.0
    %4040 = vmatprep.subr.mxu0 0.0
    %4041 = vmatpush2.msra.mxu0 0.0
    %4042 = vmatprep.subr.mxu0 0.0
    %4043 = vmatpush2.msra.mxu0 0.0
    %4044 = vmatprep.subr.mxu0 0.0
    %4045 = vmatpush2.msra.mxu0 0.0
    %4046 = vmatprep.subr.mxu0 0.0
    %4047 = vmatpush2.msra.mxu0 0.0
    %4048 = vmatprep.subr.mxu0 0.0
    %4049 = vmatpush2.msra.mxu0 0.0
    %4050 = vmatprep.subr.mxu0 0.0
    %4051 = vmatpush2.msra.mxu0 0.0
    %4052 = vmatprep.subr.mxu0 0.0
    %4053 = vmatpush2.msra.mxu0 0.0
    %4054 = vmatprep.mubr.f32.mxu0 0.0
    %4055 = vmatmul.mubr.f32.gmra.mxu0 %v2919
    %v4056 = vpop.f32.mrf.mxu0
    %v4057 = vadd.f32 0.0, %v4056
    %v4058 = vpop.f32.mrf.mxu0
    %4059 = vmatprep.mubr.f32.mxu0 0.0
    %4060 = vmatmul.mubr.f32.gmra.mxu0 %v2922
    %v4061 = vpop.f32.mrf.mxu0
    %v4062 = vadd.f32 0.0, %v4061
    %v4063 = vpop.f32.mrf.mxu0
    %4064 = vdwg.mxu0
    %s4065 = scalar_lea.vmem %s6, 176
    %v4066 = vld [vmem:[%s4065] sm:$0xff]
    %v4067 = vld [vmem:[%s4065 + $0x8] sm:$0xff]
    %4069 = vset.pattern.permute.xlu0 0
    %4070 = vperm.xlu0 %4069, %v4066
    %v4071 = vpop.permute.xlu0 %4070
    %4074 = vset.pattern.permute.xlu0 0
    %4075 = vperm.xlu0 %4074, %v4067
    %v4076 = vpop.permute.xlu0 %4075
    %v4078 = vmul.f32 %v4071, %v4057
    %v4079 = vmul.f32 %v4076, %v4062
    %v4080 = vadd.f32 %v3983, %v4078
    %v4081 = vadd.f32 %v3984, %v4079
    %s4082 = scalar_lea.vmem %s7, 384
    %v4083 = vld [vmem:[%s4082] sm:$0xff]
    %v4084 = vld [vmem:[%s4082 + $0x8] sm:$0xff]
    %v4085 = vld [vmem:[%s4082 + $0x10] sm:$0xff]
    %v4086 = vld [vmem:[%s4082 + $0x18] sm:$0xff]
    %4087 = vmatprep.subr.mxu0 0.0
    %4088 = vmatpush1.msra.mxu0 0.0
    %4089 = vmatprep.subr.mxu0 0.0
    %4090 = vmatpush1.msra.mxu0 0.0
    %4091 = vmatprep.subr.mxu0 0.0
    %4092 = vmatpush1.msra.mxu0 0.0
    %4093 = vmatprep.subr.mxu0 0.0
    %4094 = vmatpush1.msra.mxu0 0.0
    %4095 = vmatprep.subr.mxu0 0.0
    %4096 = vmatpush1.msra.mxu0 0.0
    %4097 = vmatprep.subr.mxu0 0.0
    %4098 = vmatpush1.msra.mxu0 0.0
    %4099 = vmatprep.subr.mxu0 0.0
    %4100 = vmatpush1.msra.mxu0 0.0
    %4101 = vmatprep.subr.mxu0 0.0
    %4102 = vmatpush1.msra.mxu0 0.0
    %4103 = vmatprep.subr.mxu0 0.0
    %4104 = vmatpush1.msra.mxu0 0.0
    %4105 = vmatprep.subr.mxu0 0.0
    %4106 = vmatpush1.msra.mxu0 0.0
    %4107 = vmatprep.subr.mxu0 0.0
    %4108 = vmatpush1.msra.mxu0 0.0
    %4109 = vmatprep.subr.mxu0 0.0
    %4110 = vmatpush1.msra.mxu0 0.0
    %4111 = vmatprep.subr.mxu0 0.0
    %4112 = vmatpush1.msra.mxu0 %v4086
    %4113 = vmatprep.subr.mxu0 0.0
    %4114 = vmatpush1.msra.mxu0 %v4085
    %4115 = vmatprep.subr.mxu0 0.0
    %4116 = vmatpush1.msra.mxu0 %v4084
    %4117 = vmatprep.subr.mxu0 0.0
    %4118 = vmatpush1.msra.mxu0 %v4083
    %4119 = vmatprep.subr.mxu0 0.0
    %4120 = vmatpush2.msra.mxu0 0.0
    %4121 = vmatprep.subr.mxu0 0.0
    %4122 = vmatpush2.msra.mxu0 0.0
    %4123 = vmatprep.subr.mxu0 0.0
    %4124 = vmatpush2.msra.mxu0 0.0
    %4125 = vmatprep.subr.mxu0 0.0
    %4126 = vmatpush2.msra.mxu0 0.0
    %4127 = vmatprep.subr.mxu0 0.0
    %4128 = vmatpush2.msra.mxu0 0.0
    %4129 = vmatprep.subr.mxu0 0.0
    %4130 = vmatpush2.msra.mxu0 0.0
    %4131 = vmatprep.subr.mxu0 0.0
    %4132 = vmatpush2.msra.mxu0 0.0
    %4133 = vmatprep.subr.mxu0 0.0
    %4134 = vmatpush2.msra.mxu0 0.0
    %4135 = vmatprep.subr.mxu0 0.0
    %4136 = vmatpush2.msra.mxu0 0.0
    %4137 = vmatprep.subr.mxu0 0.0
    %4138 = vmatpush2.msra.mxu0 0.0
    %4139 = vmatprep.subr.mxu0 0.0
    %4140 = vmatpush2.msra.mxu0 0.0
    %4141 = vmatprep.subr.mxu0 0.0
    %4142 = vmatpush2.msra.mxu0 0.0
    %4143 = vmatprep.subr.mxu0 0.0
    %4144 = vmatpush2.msra.mxu0 0.0
    %4145 = vmatprep.subr.mxu0 0.0
    %4146 = vmatpush2.msra.mxu0 0.0
    %4147 = vmatprep.subr.mxu0 0.0
    %4148 = vmatpush2.msra.mxu0 0.0
    %4149 = vmatprep.subr.mxu0 0.0
    %4150 = vmatpush2.msra.mxu0 0.0
    %4151 = vmatprep.mubr.f32.mxu0 0.0
    %4152 = vmatmul.mubr.f32.gmra.mxu0 %v2919
    %v4153 = vpop.f32.mrf.mxu0
    %v4154 = vadd.f32 0.0, %v4153
    %v4155 = vpop.f32.mrf.mxu0
    %4156 = vmatprep.mubr.f32.mxu0 0.0
    %4157 = vmatmul.mubr.f32.gmra.mxu0 %v2922
    %v4158 = vpop.f32.mrf.mxu0
    %v4159 = vadd.f32 0.0, %v4158
    %v4160 = vpop.f32.mrf.mxu0
    %4161 = vdwg.mxu0
    %s4162 = scalar_lea.vmem %s6, 192
    %v4163 = vld [vmem:[%s4162] sm:$0xff]
    %v4164 = vld [vmem:[%s4162 + $0x8] sm:$0xff]
    %4166 = vset.pattern.permute.xlu0 0
    %4167 = vperm.xlu0 %4166, %v4163
    %v4168 = vpop.permute.xlu0 %4167
    %4171 = vset.pattern.permute.xlu0 0
    %4172 = vperm.xlu0 %4171, %v4164
    %v4173 = vpop.permute.xlu0 %4172
    %v4175 = vmul.f32 %v4168, %v4154
    %v4176 = vmul.f32 %v4173, %v4159
    %v4177 = vadd.f32 %v4080, %v4175
    %v4178 = vadd.f32 %v4081, %v4176
    %s4179 = scalar_lea.vmem %s7, 416
    %v4180 = vld [vmem:[%s4179] sm:$0xff]
    %v4181 = vld [vmem:[%s4179 + $0x8] sm:$0xff]
    %v4182 = vld [vmem:[%s4179 + $0x10] sm:$0xff]
    %v4183 = vld [vmem:[%s4179 + $0x18] sm:$0xff]
    %4184 = vmatprep.subr.mxu0 0.0
    %4185 = vmatpush1.msra.mxu0 0.0
    %4186 = vmatprep.subr.mxu0 0.0
    %4187 = vmatpush1.msra.mxu0 0.0
    %4188 = vmatprep.subr.mxu0 0.0
    %4189 = vmatpush1.msra.mxu0 0.0
    %4190 = vmatprep.subr.mxu0 0.0
    %4191 = vmatpush1.msra.mxu0 0.0
    %4192 = vmatprep.subr.mxu0 0.0
    %4193 = vmatpush1.msra.mxu0 0.0
    %4194 = vmatprep.subr.mxu0 0.0
    %4195 = vmatpush1.msra.mxu0 0.0
    %4196 = vmatprep.subr.mxu0 0.0
    %4197 = vmatpush1.msra.mxu0 0.0
    %4198 = vmatprep.subr.mxu0 0.0
    %4199 = vmatpush1.msra.mxu0 0.0
    %4200 = vmatprep.subr.mxu0 0.0
    %4201 = vmatpush1.msra.mxu0 0.0
    %4202 = vmatprep.subr.mxu0 0.0
    %4203 = vmatpush1.msra.mxu0 0.0
    %4204 = vmatprep.subr.mxu0 0.0
    %4205 = vmatpush1.msra.mxu0 0.0
    %4206 = vmatprep.subr.mxu0 0.0
    %4207 = vmatpush1.msra.mxu0 0.0
    %4208 = vmatprep.subr.mxu0 0.0
    %4209 = vmatpush1.msra.mxu0 %v4183
    %4210 = vmatprep.subr.mxu0 0.0
    %4211 = vmatpush1.msra.mxu0 %v4182
    %4212 = vmatprep.subr.mxu0 0.0
    %4213 = vmatpush1.msra.mxu0 %v4181
    %4214 = vmatprep.subr.mxu0 0.0
    %4215 = vmatpush1.msra.mxu0 %v4180
    %4216 = vmatprep.subr.mxu0 0.0
    %4217 = vmatpush2.msra.mxu0 0.0
    %4218 = vmatprep.subr.mxu0 0.0
    %4219 = vmatpush2.msra.mxu0 0.0
    %4220 = vmatprep.subr.mxu0 0.0
    %4221 = vmatpush2.msra.mxu0 0.0
    %4222 = vmatprep.subr.mxu0 0.0
    %4223 = vmatpush2.msra.mxu0 0.0
    %4224 = vmatprep.subr.mxu0 0.0
    %4225 = vmatpush2.msra.mxu0 0.0
    %4226 = vmatprep.subr.mxu0 0.0
    %4227 = vmatpush2.msra.mxu0 0.0
    %4228 = vmatprep.subr.mxu0 0.0
    %4229 = vmatpush2.msra.mxu0 0.0
    %4230 = vmatprep.subr.mxu0 0.0
    %4231 = vmatpush2.msra.mxu0 0.0
    %4232 = vmatprep.subr.mxu0 0.0
    %4233 = vmatpush2.msra.mxu0 0.0
    %4234 = vmatprep.subr.mxu0 0.0
    %4235 = vmatpush2.msra.mxu0 0.0
    %4236 = vmatprep.subr.mxu0 0.0
    %4237 = vmatpush2.msra.mxu0 0.0
    %4238 = vmatprep.subr.mxu0 0.0
    %4239 = vmatpush2.msra.mxu0 0.0
    %4240 = vmatprep.subr.mxu0 0.0
    %4241 = vmatpush2.msra.mxu0 0.0
    %4242 = vmatprep.subr.mxu0 0.0
    %4243 = vmatpush2.msra.mxu0 0.0
    %4244 = vmatprep.subr.mxu0 0.0
    %4245 = vmatpush2.msra.mxu0 0.0
    %4246 = vmatprep.subr.mxu0 0.0
    %4247 = vmatpush2.msra.mxu0 0.0
    %4248 = vmatprep.mubr.f32.mxu0 0.0
    %4249 = vmatmul.mubr.f32.gmra.mxu0 %v2919
    %v4250 = vpop.f32.mrf.mxu0
    %v4251 = vadd.f32 0.0, %v4250
    %v4252 = vpop.f32.mrf.mxu0
    %4253 = vmatprep.mubr.f32.mxu0 0.0
    %4254 = vmatmul.mubr.f32.gmra.mxu0 %v2922
    %v4255 = vpop.f32.mrf.mxu0
    %v4256 = vadd.f32 0.0, %v4255
    %v4257 = vpop.f32.mrf.mxu0
    %4258 = vdwg.mxu0
    %s4259 = scalar_lea.vmem %s6, 208
    %v4260 = vld [vmem:[%s4259] sm:$0xff]
    %v4261 = vld [vmem:[%s4259 + $0x8] sm:$0xff]
    %4263 = vset.pattern.permute.xlu0 0
    %4264 = vperm.xlu0 %4263, %v4260
    %v4265 = vpop.permute.xlu0 %4264
    %4268 = vset.pattern.permute.xlu0 0
    %4269 = vperm.xlu0 %4268, %v4261
    %v4270 = vpop.permute.xlu0 %4269
    %v4272 = vmul.f32 %v4265, %v4251
    %v4273 = vmul.f32 %v4270, %v4256
    %v4274 = vadd.f32 %v4177, %v4272
    %v4275 = vadd.f32 %v4178, %v4273
    %s4276 = scalar_lea.vmem %s7, 448
    %v4277 = vld [vmem:[%s4276] sm:$0xff]
    %v4278 = vld [vmem:[%s4276 + $0x8] sm:$0xff]
    %v4279 = vld [vmem:[%s4276 + $0x10] sm:$0xff]
    %v4280 = vld [vmem:[%s4276 + $0x18] sm:$0xff]
    %4281 = vmatprep.subr.mxu0 0.0
    %4282 = vmatpush1.msra.mxu0 0.0
    %4283 = vmatprep.subr.mxu0 0.0
    %4284 = vmatpush1.msra.mxu0 0.0
    %4285 = vmatprep.subr.mxu0 0.0
    %4286 = vmatpush1.msra.mxu0 0.0
    %4287 = vmatprep.subr.mxu0 0.0
    %4288 = vmatpush1.msra.mxu0 0.0
    %4289 = vmatprep.subr.mxu0 0.0
    %4290 = vmatpush1.msra.mxu0 0.0
    %4291 = vmatprep.subr.mxu0 0.0
    %4292 = vmatpush1.msra.mxu0 0.0
    %4293 = vmatprep.subr.mxu0 0.0
    %4294 = vmatpush1.msra.mxu0 0.0
    %4295 = vmatprep.subr.mxu0 0.0
    %4296 = vmatpush1.msra.mxu0 0.0
    %4297 = vmatprep.subr.mxu0 0.0
    %4298 = vmatpush1.msra.mxu0 0.0
    %4299 = vmatprep.subr.mxu0 0.0
    %4300 = vmatpush1.msra.mxu0 0.0
    %4301 = vmatprep.subr.mxu0 0.0
    %4302 = vmatpush1.msra.mxu0 0.0
    %4303 = vmatprep.subr.mxu0 0.0
    %4304 = vmatpush1.msra.mxu0 0.0
    %4305 = vmatprep.subr.mxu0 0.0
    %4306 = vmatpush1.msra.mxu0 %v4280
    %4307 = vmatprep.subr.mxu0 0.0
    %4308 = vmatpush1.msra.mxu0 %v4279
    %4309 = vmatprep.subr.mxu0 0.0
    %4310 = vmatpush1.msra.mxu0 %v4278
    %4311 = vmatprep.subr.mxu0 0.0
    %4312 = vmatpush1.msra.mxu0 %v4277
    %4313 = vmatprep.subr.mxu0 0.0
    %4314 = vmatpush2.msra.mxu0 0.0
    %4315 = vmatprep.subr.mxu0 0.0
    %4316 = vmatpush2.msra.mxu0 0.0
    %4317 = vmatprep.subr.mxu0 0.0
    %4318 = vmatpush2.msra.mxu0 0.0
    %4319 = vmatprep.subr.mxu0 0.0
    %4320 = vmatpush2.msra.mxu0 0.0
    %4321 = vmatprep.subr.mxu0 0.0
    %4322 = vmatpush2.msra.mxu0 0.0
    %4323 = vmatprep.subr.mxu0 0.0
    %4324 = vmatpush2.msra.mxu0 0.0
    %4325 = vmatprep.subr.mxu0 0.0
    %4326 = vmatpush2.msra.mxu0 0.0
    %4327 = vmatprep.subr.mxu0 0.0
    %4328 = vmatpush2.msra.mxu0 0.0
    %4329 = vmatprep.subr.mxu0 0.0
    %4330 = vmatpush2.msra.mxu0 0.0
    %4331 = vmatprep.subr.mxu0 0.0
    %4332 = vmatpush2.msra.mxu0 0.0
    %4333 = vmatprep.subr.mxu0 0.0
    %4334 = vmatpush2.msra.mxu0 0.0
    %4335 = vmatprep.subr.mxu0 0.0
    %4336 = vmatpush2.msra.mxu0 0.0
    %4337 = vmatprep.subr.mxu0 0.0
    %4338 = vmatpush2.msra.mxu0 0.0
    %4339 = vmatprep.subr.mxu0 0.0
    %4340 = vmatpush2.msra.mxu0 0.0
    %4341 = vmatprep.subr.mxu0 0.0
    %4342 = vmatpush2.msra.mxu0 0.0
    %4343 = vmatprep.subr.mxu0 0.0
    %4344 = vmatpush2.msra.mxu0 0.0
    %4345 = vmatprep.mubr.f32.mxu0 0.0
    %4346 = vmatmul.mubr.f32.gmra.mxu0 %v2919
    %v4347 = vpop.f32.mrf.mxu0
    %v4348 = vadd.f32 0.0, %v4347
    %v4349 = vpop.f32.mrf.mxu0
    %4350 = vmatprep.mubr.f32.mxu0 0.0
    %4351 = vmatmul.mubr.f32.gmra.mxu0 %v2922
    %v4352 = vpop.f32.mrf.mxu0
    %v4353 = vadd.f32 0.0, %v4352
    %v4354 = vpop.f32.mrf.mxu0
    %4355 = vdwg.mxu0
    %s4356 = scalar_lea.vmem %s6, 224
    %v4357 = vld [vmem:[%s4356] sm:$0xff]
    %v4358 = vld [vmem:[%s4356 + $0x8] sm:$0xff]
    %4360 = vset.pattern.permute.xlu0 0
    %4361 = vperm.xlu0 %4360, %v4357
    %v4362 = vpop.permute.xlu0 %4361
    %4365 = vset.pattern.permute.xlu0 0
    %4366 = vperm.xlu0 %4365, %v4358
    %v4367 = vpop.permute.xlu0 %4366
    %v4369 = vmul.f32 %v4362, %v4348
    %v4370 = vmul.f32 %v4367, %v4353
    %v4371 = vadd.f32 %v4274, %v4369
    %v4372 = vadd.f32 %v4275, %v4370
    %s4373 = scalar_lea.vmem %s7, 480
    %v4374 = vld [vmem:[%s4373] sm:$0xff]
    %v4375 = vld [vmem:[%s4373 + $0x8] sm:$0xff]
    %v4376 = vld [vmem:[%s4373 + $0x10] sm:$0xff]
    %v4377 = vld [vmem:[%s4373 + $0x18] sm:$0xff]
    %4378 = vmatprep.subr.mxu0 0.0
    %4379 = vmatpush1.msra.mxu0 0.0
    %4380 = vmatprep.subr.mxu0 0.0
    %4381 = vmatpush1.msra.mxu0 0.0
    %4382 = vmatprep.subr.mxu0 0.0
    %4383 = vmatpush1.msra.mxu0 0.0
    %4384 = vmatprep.subr.mxu0 0.0
    %4385 = vmatpush1.msra.mxu0 0.0
    %4386 = vmatprep.subr.mxu0 0.0
    %4387 = vmatpush1.msra.mxu0 0.0
    %4388 = vmatprep.subr.mxu0 0.0
    %4389 = vmatpush1.msra.mxu0 0.0
    %4390 = vmatprep.subr.mxu0 0.0
    %4391 = vmatpush1.msra.mxu0 0.0
    %4392 = vmatprep.subr.mxu0 0.0
    %4393 = vmatpush1.msra.mxu0 0.0
    %4394 = vmatprep.subr.mxu0 0.0
    %4395 = vmatpush1.msra.mxu0 0.0
    %4396 = vmatprep.subr.mxu0 0.0
    %4397 = vmatpush1.msra.mxu0 0.0
    %4398 = vmatprep.subr.mxu0 0.0
    %4399 = vmatpush1.msra.mxu0 0.0
    %4400 = vmatprep.subr.mxu0 0.0
    %4401 = vmatpush1.msra.mxu0 0.0
    %4402 = vmatprep.subr.mxu0 0.0
    %4403 = vmatpush1.msra.mxu0 %v4377
    %4404 = vmatprep.subr.mxu0 0.0
    %4405 = vmatpush1.msra.mxu0 %v4376
    %4406 = vmatprep.subr.mxu0 0.0
    %4407 = vmatpush1.msra.mxu0 %v4375
    %4408 = vmatprep.subr.mxu0 0.0
    %4409 = vmatpush1.msra.mxu0 %v4374
    %4410 = vmatprep.subr.mxu0 0.0
    %4411 = vmatpush2.msra.mxu0 0.0
    %4412 = vmatprep.subr.mxu0 0.0
    %4413 = vmatpush2.msra.mxu0 0.0
    %4414 = vmatprep.subr.mxu0 0.0
    %4415 = vmatpush2.msra.mxu0 0.0
    %4416 = vmatprep.subr.mxu0 0.0
    %4417 = vmatpush2.msra.mxu0 0.0
    %4418 = vmatprep.subr.mxu0 0.0
    %4419 = vmatpush2.msra.mxu0 0.0
    %4420 = vmatprep.subr.mxu0 0.0
    %4421 = vmatpush2.msra.mxu0 0.0
    %4422 = vmatprep.subr.mxu0 0.0
    %4423 = vmatpush2.msra.mxu0 0.0
    %4424 = vmatprep.subr.mxu0 0.0
    %4425 = vmatpush2.msra.mxu0 0.0
    %4426 = vmatprep.subr.mxu0 0.0
    %4427 = vmatpush2.msra.mxu0 0.0
    %4428 = vmatprep.subr.mxu0 0.0
    %4429 = vmatpush2.msra.mxu0 0.0
    %4430 = vmatprep.subr.mxu0 0.0
    %4431 = vmatpush2.msra.mxu0 0.0
    %4432 = vmatprep.subr.mxu0 0.0
    %4433 = vmatpush2.msra.mxu0 0.0
    %4434 = vmatprep.subr.mxu0 0.0
    %4435 = vmatpush2.msra.mxu0 0.0
    %4436 = vmatprep.subr.mxu0 0.0
    %4437 = vmatpush2.msra.mxu0 0.0
    %4438 = vmatprep.subr.mxu0 0.0
    %4439 = vmatpush2.msra.mxu0 0.0
    %4440 = vmatprep.subr.mxu0 0.0
    %4441 = vmatpush2.msra.mxu0 0.0
    %4442 = vmatprep.mubr.f32.mxu0 0.0
    %4443 = vmatmul.mubr.f32.gmra.mxu0 %v2919
    %v4444 = vpop.f32.mrf.mxu0
    %v4445 = vadd.f32 0.0, %v4444
    %v4446 = vpop.f32.mrf.mxu0
    %4447 = vmatprep.mubr.f32.mxu0 0.0
    %4448 = vmatmul.mubr.f32.gmra.mxu0 %v2922
    %v4449 = vpop.f32.mrf.mxu0
    %v4450 = vadd.f32 0.0, %v4449
    %v4451 = vpop.f32.mrf.mxu0
    %4452 = vdwg.mxu0
    %s4453 = scalar_lea.vmem %s6, 240
    %v4454 = vld [vmem:[%s4453] sm:$0xff]
    %v4455 = vld [vmem:[%s4453 + $0x8] sm:$0xff]
    %4457 = vset.pattern.permute.xlu0 0
    %4458 = vperm.xlu0 %4457, %v4454
    %v4459 = vpop.permute.xlu0 %4458
    %4462 = vset.pattern.permute.xlu0 0
    %4463 = vperm.xlu0 %4462, %v4455
    %v4464 = vpop.permute.xlu0 %4463
    %v4466 = vmul.f32 %v4459, %v4445
    %v4467 = vmul.f32 %v4464, %v4450
    %v4468 = vadd.f32 %v4371, %v4466
    %v4469 = vadd.f32 %v4372, %v4467
    %vm4470 = vcmask 15360
    %v4471 = vsel %vm4470, %v4468, 0.0
    %v4472 = vsel %vm4470, %v4469, 0.0
    %v4473 = vadd.f32 %v4471, %v4472
    %v4474 = vrot.slane %v4473, 4
    %v4475 = vadd.f32 %v4473, %v4474
    %v4476 = vrot.slane %v4475, 2
    %v4477 = vadd.f32 %v4475, %v4476
    %v4478 = vrot.slane %v4477, 1
    %v4479 = vadd.f32 %v4477, %v4478
    %v4480 = vld [vmem:[#allocation2] sm:$0x1]
    %4482 = vset.pattern.permute.xlu0 0
    %4483 = vperm.xlu0 %4482, %v4480
    %v4484 = vpop.permute.xlu0 %4483
    %v4486 = vlaneseq
    %v4487 = vshrl.u32 %v4486, 7
    %v4488 = vsub.s32 0, %v4487
    %v4489 = vrot.slane %v4484, %v4488
    %v4490 = vadd.f32 %v4479, %v4489
    %v4491 = vxor.u32 %v4490, 2147483648
    %v4492 = vmul.f32 %v4491, 1.442695
    %v4493 = vpow.pop %v4492
    %v4494 = vadd.f32 %v4493, 1.0
    %v4495 = vrcp.pop %v4494
    %v4496 = vmul.f32 1.0, %v4495
    %vm4497 = vcmask 8192
    %4498 = vst.msk [vmem:[#allocation5] sm:$0x1] %vm4497, %v4496
    // Predicated region
    $region38: #{tpu_custom_call.1} parent=1 // pred_check
      _
    $region39: #{tpu_custom_call.1} parent=1 // pred_check_branch
      %4500 = sbr.rel (0) target = $region41
    $region40: #{tpu_custom_call.1} parent=1 // pred_region
      %s4502 = ssub.s32 256, 256
      %4503 = vsyncadd [#allocation4], %s4502
      %s4504 = sshll.u32 [#allocation3], 4
      %s4505 = int_to_ptr.vmem [resolvable:$true] %s4504
      %4510 = dma.vmem_to_hbm [thread:$0]  %s4505, 256, %s9, [#allocation4], 128, 128, 8
    $region41: #{tpu_custom_call.1} parent=1 // pred_fallthru
      _
    // Predicated region
    $region42: #{tpu_custom_call.1} parent=1 // pred_check
      _
    $region43: #{tpu_custom_call.1} parent=1 // pred_check_branch
      %4512 = sbr.rel (0) target = $region45
    $region44: #{tpu_custom_call.1} parent=1 // pred_region
      %s4514 = ssub.s32 16, 16
      %4515 = vsyncadd [#allocation6], %s4514
      %s4517 = sshll.u32 [#allocation5], 4
      %s4518 = int_to_ptr.vmem [resolvable:$true] %s4517
      %4520 = dma.vmem_to_hbm [thread:$0]  %s4518, 16, %s10, [#allocation6]
    $region45: #{tpu_custom_call.1} parent=1 // pred_fallthru
      _
    // Predicated region
    $region46: #{tpu_custom_call.1} parent=1 // pred_check
      _
    $region47: #{tpu_custom_call.1} parent=1 // pred_check_branch
      %4522 = sbr.rel (0) target = $region49
    $region48: #{tpu_custom_call.1} parent=1 // pred_region
      %4523 = dma.done [#allocation4], 256
    $region49: #{tpu_custom_call.1} parent=1 // pred_fallthru
      _
    // Predicated region
    $region50: #{tpu_custom_call.1} parent=1 // pred_check
      _
    $region51: #{tpu_custom_call.1} parent=1 // pred_check_branch
      %4525 = sbr.rel (0) target = $region53
    $region52: #{tpu_custom_call.1} parent=1 // pred_region
      %4526 = dma.done [#allocation6], 16
    $region53: #{tpu_custom_call.1} parent=1 // pred_fallthru
      _
    %4527 = vsyncpa [#allocation4], 1
    %4528 = vsyncpa [#allocation6], 1

</llo_original>
